<compile_context>
chip_gen: v6e
topology: v6e:2x2x1
jax: 0.10.0
libtpu: 0.0.40
codegen_flags: <defaults>
</compile_context>

<pallas_src>
import functools

import numpy as np
import jax
import jax.numpy as jnp
from jax.experimental import pallas as pl
from jax.experimental.pallas import tpu as pltpu


LANE = 128                       # lane width: Cout / K padded to this
HEAD_PAD = 128                   # each FC head (mu / logvar) padded to one lane tile
_MM_DTYPE = jnp.bfloat16         # matmul operand dtype (f32 accumulation)
_VMEM_LIMIT = 32 * 1024 * 1024   # safe on v5e/v6e (128 MiB) and v7x (64 MiB)
_TILE_BUDGET = 20 * 1024 * 1024  # working-set budget used when picking tiles


def _round_up(x, m):
    return ((x + m - 1) // m) * m


def _pick_tile_m(mp, kp, out_bytes):
    """Largest M tile (multiple of 128) that divides mp and fits the budget."""
    for cand in (1024, 512, 256, 128):
        if mp % cand:
            continue
        work = 2 * cand * kp * 2 + 2 * cand * LANE * out_bytes + kp * LANE * 2
        if work <= _TILE_BUDGET:
            return cand
    return 128


def _pick_tile_k(kf):
    """Largest K tile for the heads matmul dividing kf within the budget."""
    for cand in (2048, 1024, 512, 256, 128):
        if kf % cand == 0 and 2 * cand * 2 * HEAD_PAD * 2 <= _TILE_BUDGET:
            return cand
    return 128


# ---------------------------------------------------------------------------
# Pallas kernels
# ---------------------------------------------------------------------------
def _conv_mm_kernel(p_ref, w_ref, b_ref, o_ref, *, activation):
    """One branch / one M-tile of a conv expressed as patches @ weight."""
    acc = jnp.dot(p_ref[0], w_ref[0], preferred_element_type=jnp.float32)
    acc = acc + b_ref[0]                          # (TM,128) + (1,128), f32 epilogue
    if activation == "leaky_relu":
        acc = jnp.where(acc > 0, acc, 0.01 * acc)   # nn.LeakyReLU default slope
    o_ref[0] = acc.astype(o_ref.dtype)            # narrow to bf16 on store


def _heads_mm_kernel(f_ref, w_ref, b_ref, h_ref, acc_ref):
    """K-tiled FC heads: per-branch (B, 2*HEAD_PAD) linear output."""
    k = pl.program_id(1)

    @pl.when(k == 0)
    def _():
        acc_ref[...] = jnp.zeros_like(acc_ref)

    acc_ref[...] += jnp.dot(f_ref[0], w_ref[0],
                            preferred_element_type=jnp.float32)

    @pl.when(k == pl.num_programs(1) - 1)
    def _():
        h_ref[0] = acc_ref[...] + b_ref[0]


def _latent_loss_kernel(h_ref, e_ref, out_ref, *, latent_size):
    """tanh + reparametrize + bidirectional KL + sum-BCE -> scalar."""
    hr = h_ref[0]                                  # (B, 256) f32
    hd = h_ref[1]
    mu_r = jnp.tanh(hr[:, :HEAD_PAD])
    lv_r = jnp.tanh(hr[:, HEAD_PAD:])
    mu_d = jnp.tanh(hd[:, :HEAD_PAD])
    lv_d = jnp.tanh(hd[:, HEAD_PAD:])
    # Padded lanes (>= latent_size) have zero weights/bias/eps -> mu=lv=z=0.

    # reparametrize: std = exp(0.5*logvar), z = eps*std + mu
    z_r = e_ref[0] * jnp.exp(0.5 * lv_r) + mu_r
    z_d = e_ref[1] * jnp.exp(0.5 * lv_d) + mu_d

    # Normal(loc=mu, scale=exp(logvar)); Independent(...,1) sums over latent.
    # NOTE: this deliberately reproduces the original module's mismatched
    # convention (scale=exp(logvar) for KL, std=exp(0.5*logvar) for reparam).
    def kld(mu_p, lv_p, mu_q, lv_q):
        return ((lv_q - lv_p)
                + (jnp.exp(2.0 * lv_p) + (mu_p - mu_q) ** 2)
                * (0.5 * jnp.exp(-2.0 * lv_q)) - 0.5)

    batch = hr.shape[0]
    bi_di_kld = (jnp.sum(kld(mu_r, lv_r, mu_d, lv_d))
                 + jnp.sum(kld(mu_d, lv_d, mu_r, lv_r))) / batch

    # Mask padded lanes for the BCE sums (sigmoid(0)=0.5 would otherwise leak).
    mask = (jax.lax.broadcasted_iota(jnp.int32, mu_r.shape, 1)
            < latent_size).astype(jnp.float32)

    z_r_norm = jax.nn.sigmoid(z_r)
    z_d_norm = jax.nn.sigmoid(z_d)

    # torch.nn.BCELoss(reduction='sum'), log terms clamped at -100 like PyTorch
    def bce_sum(inp, tgt):
        log_i = jnp.maximum(jnp.log(inp), -100.0)
        log_1mi = jnp.maximum(jnp.log1p(-inp), -100.0)
        return -jnp.sum(mask * (tgt * log_i + (1.0 - tgt) * log_1mi))

    ce_rgb_depth = bce_sum(z_r_norm, z_d_norm)
    ce_depth_rgb = bce_sum(z_d_norm, z_r_norm)

    out_ref[0, 0] = ce_rgb_depth + ce_depth_rgb - bi_di_kld


# ---------------------------------------------------------------------------
# Wrappers / glue
# ---------------------------------------------------------------------------
def _im2col_nhwc(x, k=4, s=2, p=1):
    """x: (N,H,W,C) -> (N*OH*OW, k*k*C), columns ordered (kh, kw, c)."""
    N, H, W, C = x.shape
    xp = jnp.pad(x, ((0, 0), (p, p), (p, p), (0, 0)))
    OH = (H + 2 * p - k) // s + 1
    OW = (W + 2 * p - k) // s + 1
    cols = [xp[:, i:i + s * OH:s, j:j + s * OW:s, :]
            for i in range(k) for j in range(k)]          # each (N,OH,OW,C)
    patches = jnp.stack(cols, axis=3)                     # (N,OH,OW,k*k,C)
    return patches.reshape(N * OH * OW, k * k * C), OH, OW


def _conv_pair_k4s2p1(x_pair, w_pair, b_pair, activation):
    """Both branches of a Conv2d(k=4,s=2,p=1) level in one pallas_call.

    x_pair: (2,B,H,W,Cin) NHWC; w_pair: (2,Cout,Cin,4,4) torch layout;
    b_pair: (2,Cout).  Returns (2,B,OH,OW,LANE) bf16 (channels zero-padded).
    """
    G, B, H, W, Cin = x_pair.shape
    Cout = w_pair.shape[1]
    assert Cout <= LANE

    x_pair = x_pair.astype(_MM_DTYPE)
    patches, OH, OW = _im2col_nhwc(x_pair.reshape(G * B, H, W, Cin))
    K = 16 * Cin
    KP = _round_up(K, LANE)
    M = B * OH * OW
    MP = _round_up(M, LANE)
    patches = jnp.pad(patches, ((0, 0), (0, KP - K))).reshape(G, M, KP)
    patches = jnp.pad(patches, ((0, 0), (0, MP - M), (0, 0)))   # pad rows = 0

    # (G,Cout,Cin,kh,kw) -> (G,kh,kw,Cin,Cout) -> (G, 16*Cin, Cout), pad K & N
    wflat = w_pair.transpose(0, 3, 4, 2, 1).reshape(G, K, Cout)
    wflat = jnp.pad(wflat, ((0, 0), (0, KP - K),
                            (0, LANE - Cout))).astype(_MM_DTYPE)
    bias = jnp.pad(b_pair, ((0, 0), (0, LANE - Cout)))
    bias = bias.astype(jnp.float32).reshape(G, 1, LANE)

    TM = _pick_tile_m(MP, KP, out_bytes=2)
    out = pl.pallas_call(
        functools.partial(_conv_mm_kernel, activation=activation),
        grid=(G, MP // TM),
        in_specs=[
            pl.BlockSpec((1, TM, KP), lambda g, m: (g, m, 0)),
            pl.BlockSpec((1, KP, LANE), lambda g, m: (g, 0, 0)),
            pl.BlockSpec((1, 1, LANE), lambda g, m: (g, 0, 0)),
        ],
        out_specs=pl.BlockSpec((1, TM, LANE), lambda g, m: (g, m, 0)),
        out_shape=jax.ShapeDtypeStruct((G, MP, LANE), _MM_DTYPE),
        compiler_params=pltpu.CompilerParams(
            dimension_semantics=("parallel", "parallel"),
            vmem_limit_bytes=_VMEM_LIMIT),
    )(patches, wflat, bias)
    return out[:, :M].reshape(G, B, OH, OW, LANE)


def _adaptive_pool_matrix(in_size, out_size):
    """Rows average exactly the windows used by nn.AdaptiveAvgPool2d."""
    M = np.zeros((out_size, in_size), dtype=np.float32)
    for i in range(out_size):
        start = (i * in_size) // out_size
        end = -(-((i + 1) * in_size) // out_size)     # ceil
        M[i, start:end] = 1.0 / (end - start)
    return jnp.asarray(M)


def pallas_heads(feat, w, bias):
    """feat (2,B,KF) bf16, w (2,KF,256) bf16, bias (2,1,256) f32 -> (2,B,256) f32."""
    G, B, KF = feat.shape
    N2 = 2 * HEAD_PAD
    TK = _pick_tile_k(KF)
    return pl.pallas_call(
        _heads_mm_kernel,
        grid=(G, KF // TK),
        in_specs=[
            pl.BlockSpec((1, B, TK), lambda g, k: (g, 0, k)),
            pl.BlockSpec((1, TK, N2), lambda g, k: (g, k, 0)),
            pl.BlockSpec((1, 1, N2), lambda g, k: (g, 0, 0)),
        ],
        out_specs=pl.BlockSpec((1, B, N2), lambda g, k: (g, 0, 0)),
        out_shape=jax.ShapeDtypeStruct((G, B, N2), jnp.float32),
        scratch_shapes=[pltpu.VMEM((B, N2), jnp.float32)],
        compiler_params=pltpu.CompilerParams(
            dimension_semantics=("parallel", "arbitrary"),
            vmem_limit_bytes=_VMEM_LIMIT),
    )(feat, w, bias)


def pallas_latent_loss(h, eps, latent_size):
    """h (2,B,256) f32, eps (2,B,128) f32 -> scalar latent loss."""
    G, B, N2 = h.shape
    out = pl.pallas_call(
        functools.partial(_latent_loss_kernel, latent_size=latent_size),
        grid=(1,),
        in_specs=[
            pl.BlockSpec((G, B, N2), lambda i: (0, 0, 0)),
            pl.BlockSpec((G, B, HEAD_PAD), lambda i: (0, 0, 0)),
        ],
        out_specs=pl.BlockSpec(memory_space=pltpu.MemorySpace.SMEM),
        out_shape=jax.ShapeDtypeStruct((1, 1), jnp.float32),
        compiler_params=pltpu.CompilerParams(vmem_limit_bytes=_VMEM_LIMIT),
    )(h, eps)
    return out[0, 0]


def init_params(key, input_channels, channels, latent_size):
    ks = jax.random.split(key, 12)
    fdim = channels * 32 * 32
    p = {
        "w1": 0.1 * jax.random.normal(ks[0], (channels, input_channels, 4, 4), jnp.float32),
        "b1": 0.1 * jax.random.normal(ks[1], (channels,), jnp.float32),
        "w2": 0.1 * jax.random.normal(ks[2], (channels, input_channels, 4, 4), jnp.float32),
        "b2": 0.1 * jax.random.normal(ks[3], (channels,), jnp.float32),
        "w3": 0.1 * jax.random.normal(ks[4], (channels, channels, 4, 4), jnp.float32),
        "b3": 0.1 * jax.random.normal(ks[5], (channels,), jnp.float32),
        "w4": 0.1 * jax.random.normal(ks[6], (channels, channels, 4, 4), jnp.float32),
        "b4": 0.1 * jax.random.normal(ks[7], (channels,), jnp.float32),
        "fc1_rgb_w": 0.01 * jax.random.normal(ks[8], (latent_size, fdim), jnp.float32),
        "fc1_rgb_b": jnp.zeros((latent_size,), jnp.float32),
        "fc2_rgb_w": 0.01 * jax.random.normal(ks[9], (latent_size, fdim), jnp.float32),
        "fc2_rgb_b": jnp.zeros((latent_size,), jnp.float32),
        "fc1_dep_w": 0.01 * jax.random.normal(ks[10], (latent_size, fdim), jnp.float32),
        "fc1_dep_b": jnp.zeros((latent_size,), jnp.float32),
        "fc2_dep_w": 0.01 * jax.random.normal(ks[11], (latent_size, fdim), jnp.float32),
        "fc2_dep_b": jnp.zeros((latent_size,), jnp.float32),
    }
    return p


def mutual_info_reg_forward(params, rgb_feat, depth_feat, eps_rgb, eps_depth):
    C = params["w1"].shape[0]
    L = params["fc1_rgb_w"].shape[0]
    assert L <= HEAD_PAD
    B = rgb_feat.shape[0]

    # NCHW -> NHWC once; stack branches on a leading "parallel" axis.
    x = jnp.stack([rgb_feat, depth_feat], axis=0)        # (2,B,Cin,H,W)
    x = jnp.transpose(x, (0, 1, 3, 4, 2))                # (2,B,H,W,Cin)

    # layer1/layer2 (+ fused LeakyReLU), then layer3/layer4 (bf16 outputs)
    y1 = _conv_pair_k4s2p1(x,
                           jnp.stack([params["w1"], params["w2"]]),
                           jnp.stack([params["b1"], params["b2"]]),
                           "leaky_relu")                 # (2,B,H/2,W/2,LANE)
    y2 = _conv_pair_k4s2p1(y1[..., :C],
                           jnp.stack([params["w3"], params["w4"]]),
                           jnp.stack([params["b3"], params["b4"]]),
                           "none")                       # (2,B,IH,IW,LANE)

    IH, IW = y2.shape[2], y2.shape[3]
    # AdaptiveAvgPool2d((32,32)) applied to the activations (exact, tiny).
    Lmat = _adaptive_pool_matrix(IH, 32)                 # (32, IH)
    Rmat = _adaptive_pool_matrix(IW, 32)                 # (32, IW)
    pooled = jnp.einsum("ph,qw,gbhwc->gbpqc", Lmat, Rmat,
                        y2[..., :C].astype(jnp.float32))  # (2,B,32,32,C)
    KF = 32 * 32 * C
    feat = pooled.reshape(2, B, KF).astype(_MM_DTYPE)     # flatten (h,w,c)

    # Torch flattens (B,C,32,32) in (c,h,w) order; our activations flatten in
    # (h,w,c) order, so permute the FC weight columns (small, exact) instead.
    def head_w(w_fc):
        wf = w_fc.reshape(L, C, 32, 32).transpose(0, 2, 3, 1).reshape(L, KF).T
        return jnp.pad(wf, ((0, 0), (0, HEAD_PAD - L)))   # (KF, 128)

    w_r = jnp.concatenate([head_w(params["fc1_rgb_w"]),
                           head_w(params["fc2_rgb_w"])], axis=1)   # (KF, 256)
    w_d = jnp.concatenate([head_w(params["fc1_dep_w"]),
                           head_w(params["fc2_dep_w"])], axis=1)
    w = jnp.stack([w_r, w_d]).astype(_MM_DTYPE)            # (2, KF, 256)

    pb = lambda v: jnp.pad(v, (0, HEAD_PAD - L))
    b_r = jnp.concatenate([pb(params["fc1_rgb_b"]), pb(params["fc2_rgb_b"])])
    b_d = jnp.concatenate([pb(params["fc1_dep_b"]), pb(params["fc2_dep_b"])])
    bias = jnp.stack([b_r, b_d]).reshape(2, 1, 2 * HEAD_PAD).astype(jnp.float32)

    eps = jnp.stack([jnp.pad(eps_rgb, ((0, 0), (0, HEAD_PAD - L))),
                     jnp.pad(eps_depth, ((0, 0), (0, HEAD_PAD - L)))])

    h = pallas_heads(feat, w, bias)                        # (2, B, 256) f32
    return pallas_latent_loss(h, eps, L)


if __name__ == "__main__":
    B, input_channels, channels, latent_size = 2, 4, 4, 4
    H = W = 16

    key = jax.random.PRNGKey(0)
    k_rgb, k_dep, k_er, k_ed, k_par = jax.random.split(key, 5)

    rgb_feat = jax.random.normal(k_rgb, (B, input_channels, H, W), jnp.float32)
    depth_feat = jax.random.normal(k_dep, (B, input_channels, H, W), jnp.float32)
    # eps for reparametrize (torch.randn_like equivalent), fixed for determinism
    eps_rgb = jax.random.normal(k_er, (B, latent_size), jnp.float32)
    eps_depth = jax.random.normal(k_ed, (B, latent_size), jnp.float32)

    params = init_params(k_par, input_channels, channels, latent_size)

    fwd = jax.jit(mutual_info_reg_forward)
    loss = fwd(params, rgb_feat, depth_feat, eps_rgb, eps_depth)
    loss = jax.block_until_ready(loss)
    assert jnp.isfinite(loss), f"non-finite loss: {loss}"
    print("KERNEL_OK")
</pallas_src>

<mosaic_0001>
module attributes {stable_mosaic.version = 11 : i64} {
  func.func @_conv_mm_kernel(%arg0: i32, %arg1: i32, %arg2: memref<1x128x128xbf16, #tpu.memory_space<vmem>>, %arg3: memref<1x128x128xbf16, #tpu.memory_space<vmem>>, %arg4: memref<1x1x128xf32, #tpu.memory_space<vmem>>, %arg5: memref<1x128x128xbf16, #tpu.memory_space<vmem>>) attributes {dimension_semantics = [#tpu.dimension_semantics<parallel>, #tpu.dimension_semantics<parallel>], iteration_bounds = array<i64: 2, 1>, scalar_prefetch = 0 : i64, scratch_operands = 0 : i64, tpu.core_type = #tpu.core_type<tc>, window_params = [{transform_indices = @transform_0, window_bounds = array<i64: 1, 128, 128>}, {transform_indices = @transform_1, window_bounds = array<i64: 1, 128, 128>}, {transform_indices = @transform_2, window_bounds = array<i64: 1, 1, 128>}, {transform_indices = @transform_3, window_bounds = array<i64: 1, 128, 128>}]} {
    %c0 = arith.constant 0 : index
    %c0_0 = arith.constant 0 : index
    %c0_1 = arith.constant 0 : index
    %0 = vector.load %arg2[%c0, %c0_0, %c0_1] : memref<1x128x128xbf16, #tpu.memory_space<vmem>>, vector<1x128x128xbf16>
    %1 = vector.shape_cast %0 : vector<1x128x128xbf16> to vector<128x128xbf16>
    %c0_2 = arith.constant 0 : index
    %c0_3 = arith.constant 0 : index
    %c0_4 = arith.constant 0 : index
    %2 = vector.load %arg3[%c0_2, %c0_3, %c0_4] : memref<1x128x128xbf16, #tpu.memory_space<vmem>>, vector<1x128x128xbf16>
    %3 = vector.shape_cast %2 : vector<1x128x128xbf16> to vector<128x128xbf16>
    %cst = arith.constant dense<0.000000e+00> : vector<128x128xf32>
    %4 = tpu.matmul %1, %3, %cst {dimension_numbers = #tpu.dot_dimension_numbers<[1], [0], [0], [1], [0, 0, 1, 1], [], []>} : vector<128x128xbf16>, vector<128x128xbf16>, vector<128x128xf32> -> vector<128x128xf32>
    %c0_5 = arith.constant 0 : index
    %c0_6 = arith.constant 0 : index
    %c0_7 = arith.constant 0 : index
    %5 = vector.load %arg4[%c0_5, %c0_6, %c0_7] : memref<1x1x128xf32, #tpu.memory_space<vmem>>, vector<1x1x128xf32>
    %6 = vector.shape_cast %5 : vector<1x1x128xf32> to vector<1x128xf32>
    %7 = vector.broadcast %6 : vector<1x128xf32> to vector<128x128xf32>
    %8 = arith.addf %4, %7 : vector<128x128xf32>
    %cst_8 = arith.constant 0.000000e+00 : f32
    %9 = vector.broadcast %cst_8 : f32 to vector<128x128xf32>
    %10 = arith.cmpf ogt, %8, %9 : vector<128x128xf32>
    %cst_9 = arith.constant 0.00999999977 : f32
    %11 = vector.broadcast %cst_9 : f32 to vector<128x128xf32>
    %12 = arith.mulf %11, %8 : vector<128x128xf32>
    %13 = arith.select %10, %8, %12 : vector<128x128xi1>, vector<128x128xf32>
    %14 = arith.truncf %13 : vector<128x128xf32> to vector<128x128xbf16>
    %c0_10 = arith.constant 0 : index
    %c0_11 = arith.constant 0 : index
    %c0_12 = arith.constant 0 : index
    %15 = vector.load %arg5[%c0_10, %c0_11, %c0_12] : memref<1x128x128xbf16, #tpu.memory_space<vmem>>, vector<1x128x128xbf16>
    %16 = vector.shape_cast %15 : vector<1x128x128xbf16> to vector<128x128xbf16>
    %17 = vector.shape_cast %14 : vector<128x128xbf16> to vector<1x128x128xbf16>
    tpu.vector_store %arg5[%c0_10, %c0_11, %c0_12], %17 {strides = array<i32>} : memref<1x128x128xbf16, #tpu.memory_space<vmem>>, vector<1x128x128xbf16>,
    return
  }
  func.func @transform_0(%arg0: i32, %arg1: i32) -> (i32, i32, i32) {
    %c0_i32 = arith.constant 0 : i32
    %c0_i32_0 = arith.constant 0 : i32
    return %arg0, %arg1, %c0_i32 : i32, i32, i32
  }
  func.func @transform_1(%arg0: i32, %arg1: i32) -> (i32, i32, i32) {
    %c0_i32 = arith.constant 0 : i32
    %c0_i32_0 = arith.constant 0 : i32
    %c0_i32_1 = arith.constant 0 : i32
    return %arg0, %c0_i32, %c0_i32_0 : i32, i32, i32
  }
  func.func @transform_2(%arg0: i32, %arg1: i32) -> (i32, i32, i32) {
    %c0_i32 = arith.constant 0 : i32
    %c0_i32_0 = arith.constant 0 : i32
    %c0_i32_1 = arith.constant 0 : i32
    return %arg0, %c0_i32, %c0_i32_0 : i32, i32, i32
  }
  func.func @transform_3(%arg0: i32, %arg1: i32) -> (i32, i32, i32) {
    %c0_i32 = arith.constant 0 : i32
    %c0_i32_0 = arith.constant 0 : i32
    return %arg0, %arg1, %c0_i32 : i32, i32, i32
  }
}

module attributes {stable_mosaic.version = 11 : i64} {
  func.func @_conv_mm_kernel(%arg0: i32, %arg1: i32, %arg2: memref<1x128x128xbf16, #tpu.memory_space<vmem>>, %arg3: memref<1x128x128xbf16, #tpu.memory_space<vmem>>, %arg4: memref<1x1x128xf32, #tpu.memory_space<vmem>>, %arg5: memref<1x128x128xbf16, #tpu.memory_space<vmem>>) attributes {dimension_semantics = [#tpu.dimension_semantics<parallel>, #tpu.dimension_semantics<parallel>], iteration_bounds = array<i64: 2, 1>, scalar_prefetch = 0 : i64, scratch_operands = 0 : i64, tpu.core_type = #tpu.core_type<tc>, window_params = [{transform_indices = @transform_0, window_bounds = array<i64: 1, 128, 128>}, {transform_indices = @transform_1, window_bounds = array<i64: 1, 128, 128>}, {transform_indices = @transform_2, window_bounds = array<i64: 1, 1, 128>}, {transform_indices = @transform_3, window_bounds = array<i64: 1, 128, 128>}]} {
    %c0 = arith.constant 0 : index
    %c0_0 = arith.constant 0 : index
    %c0_1 = arith.constant 0 : index
    %0 = vector.load %arg2[%c0, %c0_0, %c0_1] : memref<1x128x128xbf16, #tpu.memory_space<vmem>>, vector<1x128x128xbf16>
    %1 = vector.shape_cast %0 : vector<1x128x128xbf16> to vector<128x128xbf16>
    %c0_2 = arith.constant 0 : index
    %c0_3 = arith.constant 0 : index
    %c0_4 = arith.constant 0 : index
    %2 = vector.load %arg3[%c0_2, %c0_3, %c0_4] : memref<1x128x128xbf16, #tpu.memory_space<vmem>>, vector<1x128x128xbf16>
    %3 = vector.shape_cast %2 : vector<1x128x128xbf16> to vector<128x128xbf16>
    %cst = arith.constant dense<0.000000e+00> : vector<128x128xf32>
    %4 = tpu.matmul %1, %3, %cst {dimension_numbers = #tpu.dot_dimension_numbers<[1], [0], [0], [1], [0, 0, 1, 1], [], []>} : vector<128x128xbf16>, vector<128x128xbf16>, vector<128x128xf32> -> vector<128x128xf32>
    %c0_5 = arith.constant 0 : index
    %c0_6 = arith.constant 0 : index
    %c0_7 = arith.constant 0 : index
    %5 = vector.load %arg4[%c0_5, %c0_6, %c0_7] : memref<1x1x128xf32, #tpu.memory_space<vmem>>, vector<1x1x128xf32>
    %6 = vector.shape_cast %5 : vector<1x1x128xf32> to vector<1x128xf32>
    %7 = vector.broadcast %6 : vector<1x128xf32> to vector<128x128xf32>
    %8 = arith.addf %4, %7 : vector<128x128xf32>
    %9 = arith.truncf %8 : vector<128x128xf32> to vector<128x128xbf16>
    %c0_8 = arith.constant 0 : index
    %c0_9 = arith.constant 0 : index
    %c0_10 = arith.constant 0 : index
    %10 = vector.load %arg5[%c0_8, %c0_9, %c0_10] : memref<1x128x128xbf16, #tpu.memory_space<vmem>>, vector<1x128x128xbf16>
    %11 = vector.shape_cast %10 : vector<1x128x128xbf16> to vector<128x128xbf16>
    %12 = vector.shape_cast %9 : vector<128x128xbf16> to vector<1x128x128xbf16>
    tpu.vector_store %arg5[%c0_8, %c0_9, %c0_10], %12 {strides = array<i32>} : memref<1x128x128xbf16, #tpu.memory_space<vmem>>, vector<1x128x128xbf16>,
    return
  }
  func.func @transform_0(%arg0: i32, %arg1: i32) -> (i32, i32, i32) {
    %c0_i32 = arith.constant 0 : i32
    %c0_i32_0 = arith.constant 0 : i32
    return %arg0, %arg1, %c0_i32 : i32, i32, i32
  }
  func.func @transform_1(%arg0: i32, %arg1: i32) -> (i32, i32, i32) {
    %c0_i32 = arith.constant 0 : i32
    %c0_i32_0 = arith.constant 0 : i32
    %c0_i32_1 = arith.constant 0 : i32
    return %arg0, %c0_i32, %c0_i32_0 : i32, i32, i32
  }
  func.func @transform_2(%arg0: i32, %arg1: i32) -> (i32, i32, i32) {
    %c0_i32 = arith.constant 0 : i32
    %c0_i32_0 = arith.constant 0 : i32
    %c0_i32_1 = arith.constant 0 : i32
    return %arg0, %c0_i32, %c0_i32_0 : i32, i32, i32
  }
  func.func @transform_3(%arg0: i32, %arg1: i32) -> (i32, i32, i32) {
    %c0_i32 = arith.constant 0 : i32
    %c0_i32_0 = arith.constant 0 : i32
    return %arg0, %arg1, %c0_i32 : i32, i32, i32
  }
}

module attributes {stable_mosaic.version = 11 : i64} {
  func.func @_heads_mm_kernel(%arg0: i32, %arg1: i32, %arg2: memref<1x2x2048xbf16, #tpu.memory_space<vmem>>, %arg3: memref<1x2048x256xbf16, #tpu.memory_space<vmem>>, %arg4: memref<1x1x256xf32, #tpu.memory_space<vmem>>, %arg5: memref<1x2x256xf32, #tpu.memory_space<vmem>>, %arg6: memref<2x256xf32, #tpu.memory_space<vmem>>) attributes {dimension_semantics = [#tpu.dimension_semantics<parallel>, #tpu.dimension_semantics<arbitrary>], iteration_bounds = array<i64: 2, 2>, scalar_prefetch = 0 : i64, scratch_operands = 1 : i64, tpu.core_type = #tpu.core_type<tc>, window_params = [{transform_indices = @transform_0, window_bounds = array<i64: 1, 2, 2048>}, {transform_indices = @transform_1, window_bounds = array<i64: 1, 2048, 256>}, {transform_indices = @transform_2, window_bounds = array<i64: 1, 1, 256>}, {transform_indices = @transform_3, window_bounds = array<i64: 1, 2, 256>}]} {
    %c0_i32 = arith.constant 0 : i32
    %0 = arith.cmpi eq, %arg1, %c0_i32 : i32
    %1 = arith.extui %0 : i1 to i32
    %c0_i32_0 = arith.constant 0 : i32
    %2 = arith.cmpi ne, %1, %c0_i32_0 : i32
    scf.if %2 {
      %cst_11 = arith.constant 0.000000e+00 : f32
      %14 = vector.broadcast %cst_11 : f32 to vector<2x256xf32>
      %c0_12 = arith.constant 0 : index
      %c0_13 = arith.constant 0 : index
      %15 = vector.load %arg6[%c0_12, %c0_13] : memref<2x256xf32, #tpu.memory_space<vmem>>, vector<2x256xf32>
      tpu.vector_store %arg6[%c0_12, %c0_13], %14 {strides = array<i32>} : memref<2x256xf32, #tpu.memory_space<vmem>>, vector<2x256xf32>,
    } else {
    }
    %c0 = arith.constant 0 : index
    %c0_1 = arith.constant 0 : index
    %3 = vector.load %arg6[%c0, %c0_1] : memref<2x256xf32, #tpu.memory_space<vmem>>, vector<2x256xf32>
    %c0_2 = arith.constant 0 : index
    %c0_3 = arith.constant 0 : index
    %c0_4 = arith.constant 0 : index
    %4 = vector.load %arg2[%c0_2, %c0_3, %c0_4] : memref<1x2x2048xbf16, #tpu.memory_space<vmem>>, vector<1x2x2048xbf16>
    %5 = vector.shape_cast %4 : vector<1x2x2048xbf16> to vector<2x2048xbf16>
    %c0_5 = arith.constant 0 : index
    %c0_6 = arith.constant 0 : index
    %c0_7 = arith.constant 0 : index
    %6 = vector.load %arg3[%c0_5, %c0_6, %c0_7] : memref<1x2048x256xbf16, #tpu.memory_space<vmem>>, vector<1x2048x256xbf16>
    %7 = vector.shape_cast %6 : vector<1x2048x256xbf16> to vector<2048x256xbf16>
    %cst = arith.constant dense<0.000000e+00> : vector<2x256xf32>
    %8 = tpu.matmul %5, %7, %cst {dimension_numbers = #tpu.dot_dimension_numbers<[1], [0], [0], [1], [0, 0, 1, 1], [], []>} : vector<2x2048xbf16>, vector<2048x256xbf16>, vector<2x256xf32> -> vector<2x256xf32>
    %9 = arith.addf %3, %8 : vector<2x256xf32>
    %c0_8 = arith.constant 0 : index
    %c0_9 = arith.constant 0 : index
    %10 = vector.load %arg6[%c0_8, %c0_9] : memref<2x256xf32, #tpu.memory_space<vmem>>, vector<2x256xf32>
    tpu.vector_store %arg6[%c0_8, %c0_9], %9 {strides = array<i32>} : memref<2x256xf32, #tpu.memory_space<vmem>>, vector<2x256xf32>,
    %c1_i32 = arith.constant 1 : i32
    %11 = arith.cmpi eq, %arg1, %c1_i32 : i32
    %12 = arith.extui %11 : i1 to i32
    %c0_i32_10 = arith.constant 0 : i32
    %13 = arith.cmpi ne, %12, %c0_i32_10 : i32
    scf.if %13 {
      %c0_11 = arith.constant 0 : index
      %c0_12 = arith.constant 0 : index
      %14 = vector.load %arg6[%c0_11, %c0_12] : memref<2x256xf32, #tpu.memory_space<vmem>>, vector<2x256xf32>
      %c0_13 = arith.constant 0 : index
      %c0_14 = arith.constant 0 : index
      %c0_15 = arith.constant 0 : index
      %15 = vector.load %arg4[%c0_13, %c0_14, %c0_15] : memref<1x1x256xf32, #tpu.memory_space<vmem>>, vector<1x1x256xf32>
      %16 = vector.shape_cast %15 : vector<1x1x256xf32> to vector<1x256xf32>
      %17 = vector.broadcast %16 : vector<1x256xf32> to vector<2x256xf32>
      %18 = arith.addf %14, %17 : vector<2x256xf32>
      %c0_16 = arith.constant 0 : index
      %c0_17 = arith.constant 0 : index
      %c0_18 = arith.constant 0 : index
      %19 = vector.load %arg5[%c0_16, %c0_17, %c0_18] : memref<1x2x256xf32, #tpu.memory_space<vmem>>, vector<1x2x256xf32>
      %20 = vector.shape_cast %19 : vector<1x2x256xf32> to vector<2x256xf32>
      %21 = vector.shape_cast %18 : vector<2x256xf32> to vector<1x2x256xf32>
      tpu.vector_store %arg5[%c0_16, %c0_17, %c0_18], %21 {strides = array<i32>} : memref<1x2x256xf32, #tpu.memory_space<vmem>>, vector<1x2x256xf32>,
    } else {
    }
    return
  }
  func.func @transform_0(%arg0: i32, %arg1: i32) -> (i32, i32, i32) {
    %c0_i32 = arith.constant 0 : i32
    %c0_i32_0 = arith.constant 0 : i32
    return %arg0, %c0_i32, %arg1 : i32, i32, i32
  }
  func.func @transform_1(%arg0: i32, %arg1: i32) -> (i32, i32, i32) {
    %c0_i32 = arith.constant 0 : i32
    %c0_i32_0 = arith.constant 0 : i32
    return %arg0, %arg1, %c0_i32 : i32, i32, i32
  }
  func.func @transform_2(%arg0: i32, %arg1: i32) -> (i32, i32, i32) {
    %c0_i32 = arith.constant 0 : i32
    %c0_i32_0 = arith.constant 0 : i32
    %c0_i32_1 = arith.constant 0 : i32
    return %arg0, %c0_i32, %c0_i32_0 : i32, i32, i32
  }
  func.func @transform_3(%arg0: i32, %arg1: i32) -> (i32, i32, i32) {
    %c0_i32 = arith.constant 0 : i32
    %c0_i32_0 = arith.constant 0 : i32
    %c0_i32_1 = arith.constant 0 : i32
    return %arg0, %c0_i32, %c0_i32_0 : i32, i32, i32
  }
}

module attributes {stable_mosaic.version = 11 : i64} {
  func.func @_latent_loss_kernel(%arg0: i32, %arg1: memref<2x2x256xf32, #tpu.memory_space<vmem>>, %arg2: memref<2x2x128xf32, #tpu.memory_space<vmem>>, %arg3: memref<1x1xf32, #tpu.memory_space<smem>>) attributes {dimension_semantics = [#tpu.dimension_semantics<arbitrary>], iteration_bounds = array<i64: 1>, scalar_prefetch = 0 : i64, scratch_operands = 0 : i64, tpu.core_type = #tpu.core_type<tc>, window_params = [{pipeline_mode = #tpu.pipeline_mode<synchronous>, transform_indices = @transform_0, window_bounds = array<i64: 2, 2, 256>}, {pipeline_mode = #tpu.pipeline_mode<synchronous>, transform_indices = @transform_1, window_bounds = array<i64: 2, 2, 128>}, {transform_indices = @transform_2, window_bounds = array<i64: 1, 1>}]} {
    %c0 = arith.constant 0 : index
    %c0_0 = arith.constant 0 : index
    %c0_1 = arith.constant 0 : index
    %0 = vector.load %arg1[%c0, %c0_0, %c0_1] : memref<2x2x256xf32, #tpu.memory_space<vmem>>, vector<1x2x256xf32>
    %1 = vector.shape_cast %0 : vector<1x2x256xf32> to vector<2x256xf32>
    %c1 = arith.constant 1 : index
    %c0_2 = arith.constant 0 : index
    %c0_3 = arith.constant 0 : index
    %2 = vector.load %arg1[%c1, %c0_2, %c0_3] : memref<2x2x256xf32, #tpu.memory_space<vmem>>, vector<1x2x256xf32>
    %3 = vector.shape_cast %2 : vector<1x2x256xf32> to vector<2x256xf32>
    %4 = vector.extract_strided_slice %1 {offsets = [0, 0], sizes = [2, 128], strides = [1, 1]} : vector<2x256xf32> to vector<2x128xf32>
    %5 = math.tanh %4 : vector<2x128xf32>
    %6 = vector.extract_strided_slice %1 {offsets = [0, 128], sizes = [2, 128], strides = [1, 1]} : vector<2x256xf32> to vector<2x128xf32>
    %7 = math.tanh %6 : vector<2x128xf32>
    %8 = vector.extract_strided_slice %3 {offsets = [0, 0], sizes = [2, 128], strides = [1, 1]} : vector<2x256xf32> to vector<2x128xf32>
    %9 = math.tanh %8 : vector<2x128xf32>
    %10 = vector.extract_strided_slice %3 {offsets = [0, 128], sizes = [2, 128], strides = [1, 1]} : vector<2x256xf32> to vector<2x128xf32>
    %11 = math.tanh %10 : vector<2x128xf32>
    %c0_4 = arith.constant 0 : index
    %c0_5 = arith.constant 0 : index
    %c0_6 = arith.constant 0 : index
    %12 = vector.load %arg2[%c0_4, %c0_5, %c0_6] : memref<2x2x128xf32, #tpu.memory_space<vmem>>, vector<1x2x128xf32>
    %13 = vector.shape_cast %12 : vector<1x2x128xf32> to vector<2x128xf32>
    %cst = arith.constant 5.000000e-01 : f32
    %14 = vector.broadcast %cst : f32 to vector<2x128xf32>
    %15 = arith.mulf %14, %7 : vector<2x128xf32>
    %16 = math.exp %15 : vector<2x128xf32>
    %17 = arith.mulf %13, %16 : vector<2x128xf32>
    %18 = arith.addf %17, %5 : vector<2x128xf32>
    %c1_7 = arith.constant 1 : index
    %c0_8 = arith.constant 0 : index
    %c0_9 = arith.constant 0 : index
    %19 = vector.load %arg2[%c1_7, %c0_8, %c0_9] : memref<2x2x128xf32, #tpu.memory_space<vmem>>, vector<1x2x128xf32>
    %20 = vector.shape_cast %19 : vector<1x2x128xf32> to vector<2x128xf32>
    %cst_10 = arith.constant 5.000000e-01 : f32
    %21 = vector.broadcast %cst_10 : f32 to vector<2x128xf32>
    %22 = arith.mulf %21, %11 : vector<2x128xf32>
    %23 = math.exp %22 : vector<2x128xf32>
    %24 = arith.mulf %20, %23 : vector<2x128xf32>
    %25 = arith.addf %24, %9 : vector<2x128xf32>
    %26 = arith.subf %11, %7 : vector<2x128xf32>
    %cst_11 = arith.constant 2.000000e+00 : f32
    %27 = vector.broadcast %cst_11 : f32 to vector<2x128xf32>
    %28 = arith.mulf %27, %7 : vector<2x128xf32>
    %29 = math.exp %28 : vector<2x128xf32>
    %30 = arith.subf %5, %9 : vector<2x128xf32>
    %31 = arith.mulf %30, %30 : vector<2x128xf32>
    %32 = arith.addf %29, %31 : vector<2x128xf32>
    %cst_12 = arith.constant -2.000000e+00 : f32
    %33 = vector.broadcast %cst_12 : f32 to vector<2x128xf32>
    %34 = arith.mulf %33, %11 : vector<2x128xf32>
    %35 = math.exp %34 : vector<2x128xf32>
    %cst_13 = arith.constant 5.000000e-01 : f32
    %36 = vector.broadcast %cst_13 : f32 to vector<2x128xf32>
    %37 = arith.mulf %36, %35 : vector<2x128xf32>
    %38 = arith.mulf %32, %37 : vector<2x128xf32>
    %39 = arith.addf %26, %38 : vector<2x128xf32>
    %cst_14 = arith.constant 5.000000e-01 : f32
    %40 = vector.broadcast %cst_14 : f32 to vector<2x128xf32>
    %41 = arith.subf %39, %40 : vector<2x128xf32>
    %42 = vector.shape_cast %41 : vector<2x128xf32> to vector<1x2x128xf32>
    %cst_15 = arith.constant dense<0.000000e+00> : vector<1xf32>
    %43 = vector.multi_reduction <add>, %42, %cst_15 [1, 2] : vector<1x2x128xf32> to vector<1xf32>
    %44 = vector.shape_cast %43 : vector<1xf32> to vector<1x1x1xf32>
    %45 = vector.extract %44[0, 0, 0] : f32 from vector<1x1x1xf32>
    %46 = arith.subf %7, %11 : vector<2x128xf32>
    %cst_16 = arith.constant 2.000000e+00 : f32
    %47 = vector.broadcast %cst_16 : f32 to vector<2x128xf32>
    %48 = arith.mulf %47, %11 : vector<2x128xf32>
    %49 = math.exp %48 : vector<2x128xf32>
    %50 = arith.subf %9, %5 : vector<2x128xf32>
    %51 = arith.mulf %50, %50 : vector<2x128xf32>
    %52 = arith.addf %49, %51 : vector<2x128xf32>
    %cst_17 = arith.constant -2.000000e+00 : f32
    %53 = vector.broadcast %cst_17 : f32 to vector<2x128xf32>
    %54 = arith.mulf %53, %7 : vector<2x128xf32>
    %55 = math.exp %54 : vector<2x128xf32>
    %cst_18 = arith.constant 5.000000e-01 : f32
    %56 = vector.broadcast %cst_18 : f32 to vector<2x128xf32>
    %57 = arith.mulf %56, %55 : vector<2x128xf32>
    %58 = arith.mulf %52, %57 : vector<2x128xf32>
    %59 = arith.addf %46, %58 : vector<2x128xf32>
    %cst_19 = arith.constant 5.000000e-01 : f32
    %60 = vector.broadcast %cst_19 : f32 to vector<2x128xf32>
    %61 = arith.subf %59, %60 : vector<2x128xf32>
    %62 = vector.shape_cast %61 : vector<2x128xf32> to vector<1x2x128xf32>
    %cst_20 = arith.constant dense<0.000000e+00> : vector<1xf32>
    %63 = vector.multi_reduction <add>, %62, %cst_20 [1, 2] : vector<1x2x128xf32> to vector<1xf32>
    %64 = vector.shape_cast %63 : vector<1xf32> to vector<1x1x1xf32>
    %65 = vector.extract %64[0, 0, 0] : f32 from vector<1x1x1xf32>
    %66 = arith.addf %45, %65 : f32
    %cst_21 = arith.constant 2.000000e+00 : f32
    %67 = arith.divf %66, %cst_21 : f32
    %68 = tpu.iota {dimensions = array<i32: 1>} : vector<2x128xi32>
    %c4_i32 = arith.constant 4 : i32
    %69 = vector.broadcast %c4_i32 : i32 to vector<2x128xi32>
    %70 = arith.cmpi slt, %68, %69 : vector<2x128xi32>
    %71 = arith.extui %70 : vector<2x128xi1> to vector<2x128xi32>
    %72 = arith.sitofp %71 : vector<2x128xi32> to vector<2x128xf32>
    %73 = arith.negf %18 : vector<2x128xf32>
    %74 = math.exp %73 : vector<2x128xf32>
    %cst_22 = arith.constant 1.000000e+00 : f32
    %75 = vector.broadcast %cst_22 : f32 to vector<2x128xf32>
    %76 = arith.addf %75, %74 : vector<2x128xf32>
    %77 = arith.divf %75, %76 : vector<2x128xf32>
    %78 = arith.negf %25 : vector<2x128xf32>
    %79 = math.exp %78 : vector<2x128xf32>
    %cst_23 = arith.constant 1.000000e+00 : f32
    %80 = vector.broadcast %cst_23 : f32 to vector<2x128xf32>
    %81 = arith.addf %80, %79 : vector<2x128xf32>
    %82 = arith.divf %80, %81 : vector<2x128xf32>
    %83 = math.log %77 : vector<2x128xf32>
    %cst_24 = arith.constant -1.000000e+02 : f32
    %84 = vector.broadcast %cst_24 : f32 to vector<2x128xf32>
    %85 = arith.maximumf %83, %84 : vector<2x128xf32>
    %cst_25 = arith.constant 0.000000e+00 : f32
    %86 = vector.broadcast %cst_25 : f32 to vector<2x128xf32>
    %87 = arith.subf %86, %77 : vector<2x128xf32>
    %88 = math.log1p %87 : vector<2x128xf32>
    %cst_26 = arith.constant -1.000000e+02 : f32
    %89 = vector.broadcast %cst_26 : f32 to vector<2x128xf32>
    %90 = arith.maximumf %88, %89 : vector<2x128xf32>
    %91 = arith.mulf %82, %85 : vector<2x128xf32>
    %cst_27 = arith.constant 1.000000e+00 : f32
    %92 = vector.broadcast %cst_27 : f32 to vector<2x128xf32>
    %93 = arith.subf %92, %82 : vector<2x128xf32>
    %94 = arith.mulf %93, %90 : vector<2x128xf32>
    %95 = arith.addf %91, %94 : vector<2x128xf32>
    %96 = arith.mulf %72, %95 : vector<2x128xf32>
    %97 = vector.shape_cast %96 : vector<2x128xf32> to vector<1x2x128xf32>
    %cst_28 = arith.constant dense<0.000000e+00> : vector<1xf32>
    %98 = vector.multi_reduction <add>, %97, %cst_28 [1, 2] : vector<1x2x128xf32> to vector<1xf32>
    %99 = vector.shape_cast %98 : vector<1xf32> to vector<1x1x1xf32>
    %100 = vector.extract %99[0, 0, 0] : f32 from vector<1x1x1xf32>
    %cst_29 = arith.constant 0.000000e+00 : f32
    %101 = arith.subf %cst_29, %100 : f32
    %102 = math.log %82 : vector<2x128xf32>
    %cst_30 = arith.constant -1.000000e+02 : f32
    %103 = vector.broadcast %cst_30 : f32 to vector<2x128xf32>
    %104 = arith.maximumf %102, %103 : vector<2x128xf32>
    %cst_31 = arith.constant 0.000000e+00 : f32
    %105 = vector.broadcast %cst_31 : f32 to vector<2x128xf32>
    %106 = arith.subf %105, %82 : vector<2x128xf32>
    %107 = math.log1p %106 : vector<2x128xf32>
    %cst_32 = arith.constant -1.000000e+02 : f32
    %108 = vector.broadcast %cst_32 : f32 to vector<2x128xf32>
    %109 = arith.maximumf %107, %108 : vector<2x128xf32>
    %110 = arith.mulf %77, %104 : vector<2x128xf32>
    %cst_33 = arith.constant 1.000000e+00 : f32
    %111 = vector.broadcast %cst_33 : f32 to vector<2x128xf32>
    %112 = arith.subf %111, %77 : vector<2x128xf32>
    %113 = arith.mulf %112, %109 : vector<2x128xf32>
    %114 = arith.addf %110, %113 : vector<2x128xf32>
    %115 = arith.mulf %72, %114 : vector<2x128xf32>
    %116 = vector.shape_cast %115 : vector<2x128xf32> to vector<1x2x128xf32>
    %cst_34 = arith.constant dense<0.000000e+00> : vector<1xf32>
    %117 = vector.multi_reduction <add>, %116, %cst_34 [1, 2] : vector<1x2x128xf32> to vector<1xf32>
    %118 = vector.shape_cast %117 : vector<1xf32> to vector<1x1x1xf32>
    %119 = vector.extract %118[0, 0, 0] : f32 from vector<1x1x1xf32>
    %cst_35 = arith.constant 0.000000e+00 : f32
    %120 = arith.subf %cst_35, %119 : f32
    %121 = arith.addf %101, %120 : f32
    %122 = arith.subf %121, %67 : f32
    %c0_36 = arith.constant 0 : index
    %c0_37 = arith.constant 0 : index
    %123 = memref.load %arg3[%c0_36, %c0_37] : memref<1x1xf32, #tpu.memory_space<smem>>
    memref.store %122, %arg3[%c0_36, %c0_37] : memref<1x1xf32, #tpu.memory_space<smem>>
    return
  }
  func.func @transform_0(%arg0: i32) -> (i32, i32, i32) {
    %c0_i32 = arith.constant 0 : i32
    %c0_i32_0 = arith.constant 0 : i32
    %c0_i32_1 = arith.constant 0 : i32
    %c0_i32_2 = arith.constant 0 : i32
    return %c0_i32, %c0_i32_0, %c0_i32_1 : i32, i32, i32
  }
  func.func @transform_1(%arg0: i32) -> (i32, i32, i32) {
    %c0_i32 = arith.constant 0 : i32
    %c0_i32_0 = arith.constant 0 : i32
    %c0_i32_1 = arith.constant 0 : i32
    %c0_i32_2 = arith.constant 0 : i32
    return %c0_i32, %c0_i32_0, %c0_i32_1 : i32, i32, i32
  }
  func.func @transform_2(%arg0: i32) -> (i32, i32) {
    %c0_i32 = arith.constant 0 : i32
    %c0_i32_0 = arith.constant 0 : i32
    %c0_i32_1 = arith.constant 0 : i32
    return %c0_i32, %c0_i32_0 : i32, i32
  }
}

</mosaic_0001>

<llo_original>
// kernel: mutual_info_reg_forward.4
$region0: #{mutual_info_reg_forward.4}
  #allocation0 [shape = 'u32[]', space=smem, size = 0x4, offset = 0x4, fixed_abs, tag = 'smem constant byte address 0x4 - core index']
  #allocation1 [shape = 'u32[144,128]{1,0:T(1,128)}', space=vmem, size = 0x12000, scoped, tag = 'internal scratch']
  %s0 = inlined_call_operand.vmem [shape: bf16[2,128,128], index: 0, kind: input, shape index: {}]
  %s1 = inlined_call_operand.vmem [shape: bf16[2,128,128], index: 1, kind: input, shape index: {}]
  %s2 = inlined_call_operand.vmem [shape: f32[2,1,128], index: 2, kind: input, shape index: {}]
  %s3 = inlined_call_operand.vmem [shape: bf16[2,128,128], index: 3, kind: output, shape index: {}]
  %s4 = sld [smem:[#allocation0]]
  $region45: #{mutual_info_reg_forward.4} parent=0
    _
  %s6 = ssub.s32 1, %s4
  %s7 = scalar_select 0, %s6, %s4
  loop: start=0, step=1, limit=4
  $region2: #{mutual_info_reg_forward.4} parent=0 // loop_pre_header
    _
  $region3: #{mutual_info_reg_forward.4} parent=0 // loop_header
    %s9 = sphi 0, %s13
    %p10 = scmp.ge.s32.totalorder %s9, 4
    %s16 = sphi 0, %s28
    %s17 = sphi 0, %s24
    %s18 = sphi 0, %s16
    %s19 = sphi 0, %s17
    %s20 = sphi 0, %s18
    %s21 = sphi 0, %s19
    %s33 = sphi 0, %s35
    %s36 = sphi 0, %s33
    %s37 = sphi 0, %s36
    %s53 = sphi 0, %s37
    %s59 = sphi 0, %s61
    %s62 = sphi 0, %s59
    %s63 = sphi 0, %s62
    %s79 = sphi 0, %s63
    %s85 = sphi 0, %s87
    %s88 = sphi 0, %s85
    %s89 = sphi 0, %s88
    %s105 = sphi 0, %s89
    %s113 = sphi 0, %s115
    %s116 = sphi 0, %s113
    %s117 = sphi 0, %s116
    %s133 = sphi 0, %s117
  $region4: #{mutual_info_reg_forward.4} parent=0 // loop_header_branch
    %12 = sbr.rel (%p10) target = $region8
  $region5: #{mutual_info_reg_forward.4} parent=0 // loop_body
    %s14 = ssub.s32 %s9, 1
    %s15 = ssub.s32 %s9, 2
    %s22 = sadd.s32 1, %s17
    %p23 = scmp.ge.s32.totalorder %s22, 1
    %s24 = scalar_select %p23, 0, %s22
    %s25 = sadd.s32 1, %s16
    %s26 = scalar_select %p23, %s25, %s16
    %p27 = scmp.ge.s32.totalorder %s26, 2
    %s28 = scalar_select %p27, 0, %s26
    %s29 = ssub.s32 %s16, %s28
    %s30 = ssub.s32 %s17, %s24
    %s31 = sor.u32 %s29, %s30
    %p32 = scmp.eq.s32.totalorder %s31, 0
    %s34 = sadd.s32 %s33, 1
    %s35 = scalar_select %p32, %s33, %s34
    %p38 = pneg %p32
    %p39 = scmp.eq.s32.totalorder %s9, 1
    %p40 = por %p38, %p39
    %p41 = scmp.ne.s32.totalorder %s33, %s36
    %p42 = scmp.eq.s32.totalorder %s9, 0
    %p43 = por %p41, %p42
    %p44 = scmp.ne.s32.totalorder %s33, %s36
    %p45 = scmp.eq.s32.totalorder %s14, 1
    %p46 = por %p44, %p45
    %p47 = scmp.ne.s32.totalorder %s36, %s37
    %p48 = scmp.eq.s32.totalorder %s14, 0
    %p49 = por %p47, %p48
    %p50 = scmp.ne.s32.totalorder %s36, %s37
    %p51 = scmp.eq.s32.totalorder %s15, 1
    %p52 = por %p50, %p51
    %p54 = scmp.ne.s32.totalorder %s37, %s53
    %p55 = scmp.eq.s32.totalorder %s15, 0
    %p56 = por %p54, %p55
    %s57 = ssub.s32 %s16, %s28
    %p58 = scmp.eq.s32.totalorder %s57, 0
    %s60 = sadd.s32 %s59, 1
    %s61 = scalar_select %p58, %s59, %s60
    %p64 = pneg %p58
    %p65 = scmp.eq.s32.totalorder %s9, 1
    %p66 = por %p64, %p65
    %p67 = scmp.ne.s32.totalorder %s59, %s62
    %p68 = scmp.eq.s32.totalorder %s9, 0
    %p69 = por %p67, %p68
    %p70 = scmp.ne.s32.totalorder %s59, %s62
    %p71 = scmp.eq.s32.totalorder %s14, 1
    %p72 = por %p70, %p71
    %p73 = scmp.ne.s32.totalorder %s62, %s63
    %p74 = scmp.eq.s32.totalorder %s14, 0
    %p75 = por %p73, %p74
    %p76 = scmp.ne.s32.totalorder %s62, %s63
    %p77 = scmp.eq.s32.totalorder %s15, 1
    %p78 = por %p76, %p77
    %p80 = scmp.ne.s32.totalorder %s63, %s79
    %p81 = scmp.eq.s32.totalorder %s15, 0
    %p82 = por %p80, %p81
    %s83 = ssub.s32 %s16, %s28
    %p84 = scmp.eq.s32.totalorder %s83, 0
    %s86 = sadd.s32 %s85, 1
    %s87 = scalar_select %p84, %s85, %s86
    %p90 = pneg %p84
    %p91 = scmp.eq.s32.totalorder %s9, 1
    %p92 = por %p90, %p91
    %p93 = scmp.ne.s32.totalorder %s85, %s88
    %p94 = scmp.eq.s32.totalorder %s9, 0
    %p95 = por %p93, %p94
    %p96 = scmp.ne.s32.totalorder %s85, %s88
    %p97 = scmp.eq.s32.totalorder %s14, 1
    %p98 = por %p96, %p97
    %p99 = scmp.ne.s32.totalorder %s88, %s89
    %p100 = scmp.eq.s32.totalorder %s14, 0
    %p101 = por %p99, %p100
    %p102 = scmp.ne.s32.totalorder %s88, %s89
    %p103 = scmp.eq.s32.totalorder %s15, 1
    %p104 = por %p102, %p103
    %p106 = scmp.ne.s32.totalorder %s89, %s105
    %p107 = scmp.eq.s32.totalorder %s15, 0
    %p108 = por %p106, %p107
    %s109 = ssub.s32 %s16, %s28
    %s110 = ssub.s32 %s17, %s24
    %s111 = sor.u32 %s109, %s110
    %p112 = scmp.eq.s32.totalorder %s111, 0
    %s114 = sadd.s32 %s113, 1
    %s115 = scalar_select %p112, %s113, %s114
    %p118 = pneg %p112
    %p119 = scmp.eq.s32.totalorder %s9, 1
    %p120 = por %p118, %p119
    %p121 = scmp.ne.s32.totalorder %s113, %s116
    %p122 = scmp.eq.s32.totalorder %s9, 0
    %p123 = por %p121, %p122
    %p124 = scmp.ne.s32.totalorder %s113, %s116
    %p125 = scmp.eq.s32.totalorder %s14, 1
    %p126 = por %p124, %p125
    %p127 = scmp.ne.s32.totalorder %s116, %s117
    %p128 = scmp.eq.s32.totalorder %s14, 0
    %p129 = por %p127, %p128
    %p130 = scmp.ne.s32.totalorder %s116, %s117
    %p131 = scmp.eq.s32.totalorder %s15, 1
    %p132 = por %p130, %p131
    %p134 = scmp.ne.s32.totalorder %s117, %s133
    %p135 = scmp.eq.s32.totalorder %s15, 0
    %p136 = por %p134, %p135
    %p137 = scmp.le.s32.totalorder 1, %s9
    %p138 = scmp.lt.s32.totalorder %s9, 3
    %p139 = pnand %p137, %p138
    %p140 = pneg %p139
    // Predicated region
    $region9: #{mutual_info_reg_forward.4} parent=5 // pred_check
      _
    $region10: #{mutual_info_reg_forward.4} parent=5 // pred_check_branch
      %142 = sbr.rel (%p139) target = $region12
    $region11: #{mutual_info_reg_forward.4} parent=5 // pred_region
      %s143 = ssub.s32 %s9, 1
    $region12: #{mutual_info_reg_forward.4} parent=5 // pred_fallthru
      _
    %p144 = scmp.lt.s32.totalorder %s9, 2
    // Predicated region
    $region13: #{mutual_info_reg_forward.4} parent=5 // pred_check
      %p145 = pneg %p144
    $region14: #{mutual_info_reg_forward.4} parent=5 // pred_check_branch
      %147 = sbr.rel (%p145) target = $region16
    $region15: #{mutual_info_reg_forward.4} parent=5 // pred_region
      // Predicated region
      $region17: #{mutual_info_reg_forward.4} parent=15 // pred_check
        %p148 = pneg %p43
      $region18: #{mutual_info_reg_forward.4} parent=15 // pred_check_branch
        %150 = sbr.rel (%p148) target = $region20
      $region19: #{mutual_info_reg_forward.4} parent=15 // pred_region
        %s151 = smul.u32 16, %s17
        %p152 = scmp.lt.s32.totalorder %s16, 1
        %s153 = scalar_select %p152, %s16, 1
        %p154 = scmp.lt.s32.totalorder %s151, 15
        %s155 = scalar_select %p154, %s151, 15
        %s156 = smul.addr %s153, 16
        %s157 = sadd.s32 %s155, %s156
        %s158 = smul.addr %s157, 4
        %s159 = scalar_lea.vmem %s0, %s158
        %s160 = smul.u32 16, %s17
      $region20: #{mutual_info_reg_forward.4} parent=15 // pred_fallthru
        _
      // Predicated region
      $region21: #{mutual_info_reg_forward.4} parent=15 // pred_check
        %p161 = pneg %p69
      $region22: #{mutual_info_reg_forward.4} parent=15 // pred_check_branch
        %163 = sbr.rel (%p161) target = $region24
      $region23: #{mutual_info_reg_forward.4} parent=15 // pred_region
        %p164 = scmp.lt.s32.totalorder %s16, 1
        %s165 = scalar_select %p164, %s16, 1
        %s166 = smul.addr %s165, 16
        %s167 = smul.addr %s166, 4
        %s168 = scalar_lea.vmem %s1, %s167
      $region24: #{mutual_info_reg_forward.4} parent=15 // pred_fallthru
        _
      // Predicated region
      $region25: #{mutual_info_reg_forward.4} parent=15 // pred_check
        %p169 = pneg %p95
      $region26: #{mutual_info_reg_forward.4} parent=15 // pred_check_branch
        %171 = sbr.rel (%p169) target = $region28
      $region27: #{mutual_info_reg_forward.4} parent=15 // pred_region
        %p172 = scmp.lt.s32.totalorder %s16, 1
        %s173 = scalar_select %p172, %s16, 1
        %s174 = scalar_lea.vmem %s2, %s173
      $region28: #{mutual_info_reg_forward.4} parent=15 // pred_fallthru
        _
    $region16: #{mutual_info_reg_forward.4} parent=5 // pred_fallthru
      _
    %p175 = scmp.le.s32.totalorder 1, %s9
    %p176 = scmp.lt.s32.totalorder %s9, 3
    %p177 = pnand %p175, %p176
    %p178 = pneg %p177
    // Predicated region
    $region29: #{mutual_info_reg_forward.4} parent=5 // pred_check
      _
    $region30: #{mutual_info_reg_forward.4} parent=5 // pred_check_branch
      %180 = sbr.rel (%p177) target = $region32
    $region31: #{mutual_info_reg_forward.4} parent=5 // pred_region
      %s181 = ssub.s32 %s9, 1
      %s182 = smul.u32 16, %s19
      %p183 = scmp.lt.s32.totalorder %s18, 1
      %s184 = scalar_select %p183, %s18, 1
      %p185 = scmp.lt.s32.totalorder %s182, 15
      %s186 = scalar_select %p185, %s182, 15
      %s187 = smul.addr %s184, 16
      %s188 = sadd.s32 %s186, %s187
      %s189 = smul.addr %s188, 4
      %s190 = scalar_lea.vmem %s0, %s189
      %p191 = pneg %p49
      %p192 = pneg %p46
      %p193 = scmp.lt.s32.totalorder %s18, 1
      %s194 = scalar_select %p193, %s18, 1
      %s195 = smul.addr %s194, 16
      %s196 = smul.addr %s195, 4
      %s197 = scalar_lea.vmem %s1, %s196
      %p198 = pneg %p75
      %p199 = pneg %p72
      %p200 = scmp.lt.s32.totalorder %s18, 1
      %s201 = scalar_select %p200, %s18, 1
      %s202 = scalar_lea.vmem %s2, %s201
      %p203 = pneg %p101
      %p204 = pneg %p98
      %p205 = pneg %p129
      %p206 = pneg %p126
      %s207 = smul.u32 16, %s19
      %p208 = scmp.lt.s32.totalorder %s18, 1
      %s209 = scalar_select %p208, %s18, 1
      %p210 = scmp.lt.s32.totalorder %s207, 15
      %s211 = scalar_select %p210, %s207, 15
      %s212 = smul.addr %s209, 16
      %s213 = sadd.s32 %s211, %s212
      %s214 = smul.addr %s213, 4
      %s215 = scalar_lea.vmem %s3, %s214
      %s216 = smul.u32 16, %s19
      %p217 = scmp.lt.s32.totalorder %s18, 1
      %s218 = scalar_select %p217, %s18, 1
      %p219 = scmp.lt.s32.totalorder %s216, 15
      %s220 = scalar_select %p219, %s216, 15
      %s221 = smul.addr %s218, 16
      %s222 = sadd.s32 %s220, %s221
      %s223 = smul.addr %s222, 4
      %s224 = scalar_lea.vmem %s0, %s223
      %s225 = smul.u32 16, %s19
      %p226 = scmp.lt.s32.totalorder %s18, 1
      %s227 = scalar_select %p226, %s18, 1
      %s228 = smul.addr %s227, 16
      %s229 = smul.addr %s228, 4
      %s230 = scalar_lea.vmem %s1, %s229
      %p231 = scmp.lt.s32.totalorder %s18, 1
      %s232 = scalar_select %p231, %s18, 1
      %s233 = scalar_lea.vmem %s2, %s232
      %s234 = smul.u32 16, %s19
      %p235 = scmp.lt.s32.totalorder %s18, 1
      %s236 = scalar_select %p235, %s18, 1
      %p237 = scmp.lt.s32.totalorder %s234, 15
      %s238 = scalar_select %p237, %s234, 15
      %s239 = smul.addr %s236, 16
      %s240 = sadd.s32 %s238, %s239
      %s241 = smul.addr %s240, 4
      %s242 = scalar_lea.vmem %s3, %s241
      %s243 = smul.u32 16, %s19
      %v245 = vld [vmem:[%s224] sm:$0xf]
      %v246 = vld [vmem:[%s224 + $0x4] sm:$0xf]
      %v247 = vld [vmem:[%s224 + $0x8] sm:$0xf]
      %v248 = vld [vmem:[%s224 + $0xc] sm:$0xf]
      %v249 = vld [vmem:[%s224 + $0x10] sm:$0xf]
      %v250 = vld [vmem:[%s224 + $0x14] sm:$0xf]
      %v251 = vld [vmem:[%s224 + $0x18] sm:$0xf]
      %v252 = vld [vmem:[%s224 + $0x1c] sm:$0xf]
      %v253 = vld [vmem:[%s224 + $0x20] sm:$0xf]
      %v254 = vld [vmem:[%s224 + $0x24] sm:$0xf]
      %v255 = vld [vmem:[%s224 + $0x28] sm:$0xf]
      %v256 = vld [vmem:[%s224 + $0x2c] sm:$0xf]
      %v257 = vld [vmem:[%s224 + $0x30] sm:$0xf]
      %v258 = vld [vmem:[%s224 + $0x34] sm:$0xf]
      %v259 = vld [vmem:[%s224 + $0x38] sm:$0xf]
      %v260 = vld [vmem:[%s224 + $0x3c] sm:$0xf]
      %v261 = vld [vmem:[%s230] sm:$0xf]
      %v262 = vld [vmem:[%s230 + $0x4] sm:$0xf]
      %v263 = vld [vmem:[%s230 + $0x8] sm:$0xf]
      %v264 = vld [vmem:[%s230 + $0xc] sm:$0xf]
      %v265 = vld [vmem:[%s230 + $0x10] sm:$0xf]
      %v266 = vld [vmem:[%s230 + $0x14] sm:$0xf]
      %v267 = vld [vmem:[%s230 + $0x18] sm:$0xf]
      %v268 = vld [vmem:[%s230 + $0x1c] sm:$0xf]
      %v269 = vld [vmem:[%s230 + $0x20] sm:$0xf]
      %v270 = vld [vmem:[%s230 + $0x24] sm:$0xf]
      %v271 = vld [vmem:[%s230 + $0x28] sm:$0xf]
      %v272 = vld [vmem:[%s230 + $0x2c] sm:$0xf]
      %v273 = vld [vmem:[%s230 + $0x30] sm:$0xf]
      %v274 = vld [vmem:[%s230 + $0x34] sm:$0xf]
      %v275 = vld [vmem:[%s230 + $0x38] sm:$0xf]
      %v276 = vld [vmem:[%s230 + $0x3c] sm:$0xf]
      %v277 = vld [vmem:[%s233] sm:$0x1]
      %v279 = vlaneseq
      %v280 = vshrl.u32 %v279, 7
      %v281 = vsub.s32 0, %v280
      %v282 = vrot.slane %v277, %v281
      %v300 = vunpack.c.l.b16 %v245
      %v301 = vunpack.c.l.b16 %v246
      %v302 = vunpack.c.l.b16 %v247
      %v303 = vunpack.c.l.b16 %v248
      %v304 = vunpack.c.l.b16 %v249
      %v305 = vunpack.c.l.b16 %v250
      %v306 = vunpack.c.l.b16 %v251
      %v307 = vunpack.c.l.b16 %v252
      %v308 = vunpack.c.l.b16 %v253
      %v309 = vunpack.c.l.b16 %v254
      %v310 = vunpack.c.l.b16 %v255
      %v311 = vunpack.c.l.b16 %v256
      %v312 = vunpack.c.l.b16 %v257
      %v313 = vunpack.c.l.b16 %v258
      %v314 = vunpack.c.l.b16 %v259
      %v315 = vunpack.c.l.b16 %v260
      %v316 = vpack.c.b16 %v301, %v300
      %v317 = vpack.c.b16 %v303, %v302
      %v318 = vpack.c.b16 %v305, %v304
      %v319 = vpack.c.b16 %v307, %v306
      %v320 = vpack.c.b16 %v309, %v308
      %v321 = vpack.c.b16 %v311, %v310
      %v322 = vpack.c.b16 %v313, %v312
      %v323 = vpack.c.b16 %v315, %v314
      %v348 = vunpack.c.l.b16 %v261
      %v349 = vunpack.c.l.b16 %v262
      %v350 = vunpack.c.l.b16 %v263
      %v351 = vunpack.c.l.b16 %v264
      %v352 = vunpack.c.l.b16 %v265
      %v353 = vunpack.c.l.b16 %v266
      %v354 = vunpack.c.l.b16 %v267
      %v355 = vunpack.c.l.b16 %v268
      %v356 = vunpack.c.l.b16 %v269
      %v357 = vunpack.c.l.b16 %v270
      %v358 = vunpack.c.l.b16 %v271
      %v359 = vunpack.c.l.b16 %v272
      %v360 = vunpack.c.l.b16 %v273
      %v361 = vunpack.c.l.b16 %v274
      %v362 = vunpack.c.l.b16 %v275
      %v363 = vunpack.c.l.b16 %v276
      %v364 = vpack.c.b16 %v349, %v348
      %v365 = vpack.c.b16 %v351, %v350
      %v366 = vpack.c.b16 %v353, %v352
      %v367 = vpack.c.b16 %v355, %v354
      %v368 = vpack.c.b16 %v357, %v356
      %v369 = vpack.c.b16 %v359, %v358
      %v370 = vpack.c.b16 %v361, %v360
      %v371 = vpack.c.b16 %v363, %v362
      %380 = vmatprep.subr.bf16.mxu0 0
      %381 = vmatpush1.bf16.msra.mxu0 %v371
      %382 = vmatprep.subr.bf16.mxu0 0
      %383 = vmatpush1.bf16.msra.mxu0 %v370
      %384 = vmatprep.subr.bf16.mxu0 0
      %385 = vmatpush1.bf16.msra.mxu0 %v369
      %386 = vmatprep.subr.bf16.mxu0 0
      %387 = vmatpush1.bf16.msra.mxu0 %v368
      %388 = vmatprep.subr.bf16.mxu0 0
      %389 = vmatpush1.bf16.msra.mxu0 %v367
      %390 = vmatprep.subr.bf16.mxu0 0
      %391 = vmatpush1.bf16.msra.mxu0 %v366
      %392 = vmatprep.subr.bf16.mxu0 0
      %393 = vmatpush1.bf16.msra.mxu0 %v365
      %394 = vmatprep.subr.bf16.mxu0 0
      %395 = vmatpush1.bf16.msra.mxu0 %v364
      %396 = vmatprep.subr.bf16.mxu0 0
      %397 = vmatpush2.bf16.msra.mxu0 0
      %398 = vmatprep.subr.bf16.mxu0 0
      %399 = vmatpush2.bf16.msra.mxu0 0
      %400 = vmatprep.subr.bf16.mxu0 0
      %401 = vmatpush2.bf16.msra.mxu0 0
      %402 = vmatprep.subr.bf16.mxu0 0
      %403 = vmatpush2.bf16.msra.mxu0 0
      %404 = vmatprep.subr.bf16.mxu0 0
      %405 = vmatpush2.bf16.msra.mxu0 0
      %406 = vmatprep.subr.bf16.mxu0 0
      %407 = vmatpush2.bf16.msra.mxu0 0
      %408 = vmatprep.subr.bf16.mxu0 0
      %409 = vmatpush2.bf16.msra.mxu0 0
      %410 = vmatprep.subr.bf16.mxu0 0
      %411 = vmatpush2.bf16.msra.mxu0 0
      %412 = vmatprep.mubr.bf16.mxu0 0
      %413 = vmatmul.mubr.bf16.gmra.mxu0 %v316
      %v414 = vpop.f32.mrf.mxu0
      %v415 = vadd.f32 %v282, %v414
      %v416 = vpop.f32.mrf.mxu0
      %v417 = vpop.f32.mrf.mxu0
      %v418 = vadd.f32 %v282, %v417
      %v419 = vpop.f32.mrf.mxu0
      %420 = vmatprep.mubr.bf16.mxu0 0
      %421 = vmatmul.mubr.bf16.gmra.mxu0 %v317
      %v422 = vpop.f32.mrf.mxu0
      %v423 = vadd.f32 %v282, %v422
      %v424 = vpop.f32.mrf.mxu0
      %v425 = vpop.f32.mrf.mxu0
      %v426 = vadd.f32 %v282, %v425
      %v427 = vpop.f32.mrf.mxu0
      %428 = vmatprep.mubr.bf16.mxu0 0
      %429 = vmatmul.mubr.bf16.gmra.mxu0 %v318
      %v430 = vpop.f32.mrf.mxu0
      %v431 = vadd.f32 %v282, %v430
      %v432 = vpop.f32.mrf.mxu0
      %v433 = vpop.f32.mrf.mxu0
      %v434 = vadd.f32 %v282, %v433
      %v435 = vpop.f32.mrf.mxu0
      %436 = vmatprep.mubr.bf16.mxu0 0
      %437 = vmatmul.mubr.bf16.gmra.mxu0 %v319
      %v438 = vpop.f32.mrf.mxu0
      %v439 = vadd.f32 %v282, %v438
      %v440 = vpop.f32.mrf.mxu0
      %v441 = vpop.f32.mrf.mxu0
      %v442 = vadd.f32 %v282, %v441
      %v443 = vpop.f32.mrf.mxu0
      %444 = vmatprep.mubr.bf16.mxu0 0
      %445 = vmatmul.mubr.bf16.gmra.mxu0 %v320
      %v446 = vpop.f32.mrf.mxu0
      %v447 = vadd.f32 %v282, %v446
      %v448 = vpop.f32.mrf.mxu0
      %v449 = vpop.f32.mrf.mxu0
      %v450 = vadd.f32 %v282, %v449
      %v451 = vpop.f32.mrf.mxu0
      %452 = vmatprep.mubr.bf16.mxu0 0
      %453 = vmatmul.mubr.bf16.gmra.mxu0 %v321
      %v454 = vpop.f32.mrf.mxu0
      %v455 = vadd.f32 %v282, %v454
      %v456 = vpop.f32.mrf.mxu0
      %v457 = vpop.f32.mrf.mxu0
      %v458 = vadd.f32 %v282, %v457
      %v459 = vpop.f32.mrf.mxu0
      %460 = vmatprep.mubr.bf16.mxu0 0
      %461 = vmatmul.mubr.bf16.gmra.mxu0 %v322
      %v462 = vpop.f32.mrf.mxu0
      %v463 = vadd.f32 %v282, %v462
      %v464 = vpop.f32.mrf.mxu0
      %v465 = vpop.f32.mrf.mxu0
      %v466 = vadd.f32 %v282, %v465
      %v467 = vpop.f32.mrf.mxu0
      %468 = vmatprep.mubr.bf16.mxu0 0
      %469 = vmatmul.mubr.bf16.gmra.mxu0 %v323
      %v470 = vpop.f32.mrf.mxu0
      %v471 = vadd.f32 %v282, %v470
      %v472 = vpop.f32.mrf.mxu0
      %v473 = vpop.f32.mrf.mxu0
      %v474 = vadd.f32 %v282, %v473
      %v475 = vpop.f32.mrf.mxu0
      %476 = vdwg.mxu0
      %vm477 = vcmp.gt.f32.partialorder %v415, 0.0
      %vm478 = vcmp.gt.f32.partialorder %v418, 0.0
      %vm479 = vcmp.gt.f32.partialorder %v423, 0.0
      %vm480 = vcmp.gt.f32.partialorder %v426, 0.0
      %vm481 = vcmp.gt.f32.partialorder %v431, 0.0
      %vm482 = vcmp.gt.f32.partialorder %v434, 0.0
      %vm483 = vcmp.gt.f32.partialorder %v439, 0.0
      %vm484 = vcmp.gt.f32.partialorder %v442, 0.0
      %vm485 = vcmp.gt.f32.partialorder %v447, 0.0
      %vm486 = vcmp.gt.f32.partialorder %v450, 0.0
      %vm487 = vcmp.gt.f32.partialorder %v455, 0.0
      %vm488 = vcmp.gt.f32.partialorder %v458, 0.0
      %vm489 = vcmp.gt.f32.partialorder %v463, 0.0
      %vm490 = vcmp.gt.f32.partialorder %v466, 0.0
      %vm491 = vcmp.gt.f32.partialorder %v471, 0.0
      %vm492 = vcmp.gt.f32.partialorder %v474, 0.0
      %v493 = vmul.f32 %v415, 0.01
      %v494 = vmul.f32 %v418, 0.01
      %v495 = vmul.f32 %v423, 0.01
      %v496 = vmul.f32 %v426, 0.01
      %v497 = vmul.f32 %v431, 0.01
      %v498 = vmul.f32 %v434, 0.01
      %v499 = vmul.f32 %v439, 0.01
      %v500 = vmul.f32 %v442, 0.01
      %v501 = vmul.f32 %v447, 0.01
      %v502 = vmul.f32 %v450, 0.01
      %v503 = vmul.f32 %v455, 0.01
      %v504 = vmul.f32 %v458, 0.01
      %v505 = vmul.f32 %v463, 0.01
      %v506 = vmul.f32 %v466, 0.01
      %v507 = vmul.f32 %v471, 0.01
      %v508 = vmul.f32 %v474, 0.01
      %v509 = vsel %vm477, %v415, %v493
      %v510 = vsel %vm478, %v418, %v494
      %v511 = vsel %vm479, %v423, %v495
      %v512 = vsel %vm480, %v426, %v496
      %v513 = vsel %vm481, %v431, %v497
      %v514 = vsel %vm482, %v434, %v498
      %v515 = vsel %vm483, %v439, %v499
      %v516 = vsel %vm484, %v442, %v500
      %v517 = vsel %vm485, %v447, %v501
      %v518 = vsel %vm486, %v450, %v502
      %v519 = vsel %vm487, %v455, %v503
      %v520 = vsel %vm488, %v458, %v504
      %v521 = vsel %vm489, %v463, %v505
      %v522 = vsel %vm490, %v466, %v506
      %v523 = vsel %vm491, %v471, %v507
      %v524 = vsel %vm492, %v474, %v508
      %v525 = vpack.c.bf16 %v510, %v509
      %v526 = vpack.c.bf16 %v512, %v511
      %v527 = vpack.c.bf16 %v514, %v513
      %v528 = vpack.c.bf16 %v516, %v515
      %v529 = vpack.c.bf16 %v518, %v517
      %v530 = vpack.c.bf16 %v520, %v519
      %v531 = vpack.c.bf16 %v522, %v521
      %v532 = vpack.c.bf16 %v524, %v523
      %v541 = vunpack.c.l.b16 %v525
      %v542 = vunpack.c.h.b16 %v525
      %v543 = vunpack.c.l.b16 %v526
      %v544 = vunpack.c.h.b16 %v526
      %v545 = vunpack.c.l.b16 %v527
      %v546 = vunpack.c.h.b16 %v527
      %v547 = vunpack.c.l.b16 %v528
      %v548 = vunpack.c.h.b16 %v528
      %v549 = vunpack.c.l.b16 %v529
      %v550 = vunpack.c.h.b16 %v529
      %v551 = vunpack.c.l.b16 %v530
      %v552 = vunpack.c.h.b16 %v530
      %v553 = vunpack.c.l.b16 %v531
      %v554 = vunpack.c.h.b16 %v531
      %v555 = vunpack.c.l.b16 %v532
      %v556 = vunpack.c.h.b16 %v532
      %v557 = vpack.c.b16 %v541, %v541
      %v558 = vpack.c.b16 %v542, %v542
      %v559 = vpack.c.b16 %v543, %v543
      %v560 = vpack.c.b16 %v544, %v544
      %v561 = vpack.c.b16 %v545, %v545
      %v562 = vpack.c.b16 %v546, %v546
      %v563 = vpack.c.b16 %v547, %v547
      %v564 = vpack.c.b16 %v548, %v548
      %v565 = vpack.c.b16 %v549, %v549
      %v566 = vpack.c.b16 %v550, %v550
      %v567 = vpack.c.b16 %v551, %v551
      %v568 = vpack.c.b16 %v552, %v552
      %v569 = vpack.c.b16 %v553, %v553
      %v570 = vpack.c.b16 %v554, %v554
      %v571 = vpack.c.b16 %v555, %v555
      %v572 = vpack.c.b16 %v556, %v556
      %589 = vst [vmem:[%s242] sm:$0xf] %v557
      %590 = vst [vmem:[%s242 + $0x4] sm:$0xf] %v558
      %591 = vst [vmem:[%s242 + $0x8] sm:$0xf] %v559
      %592 = vst [vmem:[%s242 + $0xc] sm:$0xf] %v560
      %593 = vst [vmem:[%s242 + $0x10] sm:$0xf] %v561
      %594 = vst [vmem:[%s242 + $0x14] sm:$0xf] %v562
      %595 = vst [vmem:[%s242 + $0x18] sm:$0xf] %v563
      %596 = vst [vmem:[%s242 + $0x1c] sm:$0xf] %v564
      %597 = vst [vmem:[%s242 + $0x20] sm:$0xf] %v565
      %598 = vst [vmem:[%s242 + $0x24] sm:$0xf] %v566
      %599 = vst [vmem:[%s242 + $0x28] sm:$0xf] %v567
      %600 = vst [vmem:[%s242 + $0x2c] sm:$0xf] %v568
      %601 = vst [vmem:[%s242 + $0x30] sm:$0xf] %v569
      %602 = vst [vmem:[%s242 + $0x34] sm:$0xf] %v570
      %603 = vst [vmem:[%s242 + $0x38] sm:$0xf] %v571
      %604 = vst [vmem:[%s242 + $0x3c] sm:$0xf] %v572
      %s605 = smul.u32 16, %s19
      %p606 = scmp.lt.s32.totalorder %s18, 1
      %s607 = scalar_select %p606, %s18, 1
      %p608 = scmp.lt.s32.totalorder %s605, 15
      %s609 = scalar_select %p608, %s605, 15
      %s610 = smul.addr %s607, 16
      %s611 = sadd.s32 %s609, %s610
      %s612 = smul.addr %s611, 4
      %s613 = scalar_lea.vmem %s3, %s612
      // Predicated region
      $region33: #{mutual_info_reg_forward.4} parent=31 // pred_check
        %p614 = pneg %p126
      $region34: #{mutual_info_reg_forward.4} parent=31 // pred_check_branch
        %616 = sbr.rel (%p614) target = $region36
      $region35: #{mutual_info_reg_forward.4} parent=31 // pred_region
        %s617 = smul.u32 16, %s19
      $region36: #{mutual_info_reg_forward.4} parent=31 // pred_fallthru
        _
    $region32: #{mutual_info_reg_forward.4} parent=5 // pred_fallthru
      _
    %p618 = scmp.le.s32.totalorder 2, %s9
    // Predicated region
    $region37: #{mutual_info_reg_forward.4} parent=5 // pred_check
      %p619 = pneg %p618
    $region38: #{mutual_info_reg_forward.4} parent=5 // pred_check_branch
      %621 = sbr.rel (%p619) target = $region40
    $region39: #{mutual_info_reg_forward.4} parent=5 // pred_region
      %s622 = ssub.s32 %s9, 2
      // Predicated region
      $region41: #{mutual_info_reg_forward.4} parent=39 // pred_check
        %p623 = pneg %p132
      $region42: #{mutual_info_reg_forward.4} parent=39 // pred_check_branch
        %625 = sbr.rel (%p623) target = $region44
      $region43: #{mutual_info_reg_forward.4} parent=39 // pred_region
        %s626 = smul.u32 16, %s21
        %p627 = scmp.lt.s32.totalorder %s20, 1
        %s628 = scalar_select %p627, %s20, 1
        %p629 = scmp.lt.s32.totalorder %s626, 15
        %s630 = scalar_select %p629, %s626, 15
        %s631 = smul.addr %s628, 16
        %s632 = sadd.s32 %s630, %s631
        %s633 = smul.addr %s632, 4
        %s634 = scalar_lea.vmem %s3, %s633
      $region44: #{mutual_info_reg_forward.4} parent=39 // pred_fallthru
        _
    $region40: #{mutual_info_reg_forward.4} parent=5 // pred_fallthru
      _
  $region6: #{mutual_info_reg_forward.4} parent=0 // loop_footer
    %s13 = sadd.s32 1, %s9
  $region7: #{mutual_info_reg_forward.4} parent=0 // loop_footer_branch
    %8 = sbr.rel target = $region3
  $region8: #{mutual_info_reg_forward.4} parent=0 // loop_exit
    _

// kernel: mutual_info_reg_forward.5
$region0: #{mutual_info_reg_forward.5}
  #allocation0 [shape = 'u32[]', space=smem, size = 0x4, offset = 0x4, fixed_abs, tag = 'smem constant byte address 0x4 - core index']
  #allocation1 [shape = 'u32[144,128]{1,0:T(1,128)}', space=vmem, size = 0x12000, scoped, tag = 'internal scratch']
  %s0 = inlined_call_operand.vmem [shape: bf16[2,128,128], index: 0, kind: input, shape index: {}]
  %s1 = inlined_call_operand.vmem [shape: bf16[2,128,128], index: 1, kind: input, shape index: {}]
  %s2 = inlined_call_operand.vmem [shape: f32[2,1,128], index: 2, kind: input, shape index: {}]
  %s3 = inlined_call_operand.vmem [shape: bf16[2,128,128], index: 3, kind: output, shape index: {}]
  %s4 = sld [smem:[#allocation0]]
  $region45: #{mutual_info_reg_forward.5} parent=0
    _
  %s6 = ssub.s32 1, %s4
  %s7 = scalar_select 0, %s6, %s4
  loop: start=0, step=1, limit=4
  $region2: #{mutual_info_reg_forward.5} parent=0 // loop_pre_header
    _
  $region3: #{mutual_info_reg_forward.5} parent=0 // loop_header
    %s9 = sphi 0, %s13
    %p10 = scmp.ge.s32.totalorder %s9, 4
    %s16 = sphi 0, %s28
    %s17 = sphi 0, %s24
    %s18 = sphi 0, %s16
    %s19 = sphi 0, %s17
    %s20 = sphi 0, %s18
    %s21 = sphi 0, %s19
    %s33 = sphi 0, %s35
    %s36 = sphi 0, %s33
    %s37 = sphi 0, %s36
    %s53 = sphi 0, %s37
    %s59 = sphi 0, %s61
    %s62 = sphi 0, %s59
    %s63 = sphi 0, %s62
    %s79 = sphi 0, %s63
    %s85 = sphi 0, %s87
    %s88 = sphi 0, %s85
    %s89 = sphi 0, %s88
    %s105 = sphi 0, %s89
    %s113 = sphi 0, %s115
    %s116 = sphi 0, %s113
    %s117 = sphi 0, %s116
    %s133 = sphi 0, %s117
  $region4: #{mutual_info_reg_forward.5} parent=0 // loop_header_branch
    %12 = sbr.rel (%p10) target = $region8
  $region5: #{mutual_info_reg_forward.5} parent=0 // loop_body
    %s14 = ssub.s32 %s9, 1
    %s15 = ssub.s32 %s9, 2
    %s22 = sadd.s32 1, %s17
    %p23 = scmp.ge.s32.totalorder %s22, 1
    %s24 = scalar_select %p23, 0, %s22
    %s25 = sadd.s32 1, %s16
    %s26 = scalar_select %p23, %s25, %s16
    %p27 = scmp.ge.s32.totalorder %s26, 2
    %s28 = scalar_select %p27, 0, %s26
    %s29 = ssub.s32 %s16, %s28
    %s30 = ssub.s32 %s17, %s24
    %s31 = sor.u32 %s29, %s30
    %p32 = scmp.eq.s32.totalorder %s31, 0
    %s34 = sadd.s32 %s33, 1
    %s35 = scalar_select %p32, %s33, %s34
    %p38 = pneg %p32
    %p39 = scmp.eq.s32.totalorder %s9, 1
    %p40 = por %p38, %p39
    %p41 = scmp.ne.s32.totalorder %s33, %s36
    %p42 = scmp.eq.s32.totalorder %s9, 0
    %p43 = por %p41, %p42
    %p44 = scmp.ne.s32.totalorder %s33, %s36
    %p45 = scmp.eq.s32.totalorder %s14, 1
    %p46 = por %p44, %p45
    %p47 = scmp.ne.s32.totalorder %s36, %s37
    %p48 = scmp.eq.s32.totalorder %s14, 0
    %p49 = por %p47, %p48
    %p50 = scmp.ne.s32.totalorder %s36, %s37
    %p51 = scmp.eq.s32.totalorder %s15, 1
    %p52 = por %p50, %p51
    %p54 = scmp.ne.s32.totalorder %s37, %s53
    %p55 = scmp.eq.s32.totalorder %s15, 0
    %p56 = por %p54, %p55
    %s57 = ssub.s32 %s16, %s28
    %p58 = scmp.eq.s32.totalorder %s57, 0
    %s60 = sadd.s32 %s59, 1
    %s61 = scalar_select %p58, %s59, %s60
    %p64 = pneg %p58
    %p65 = scmp.eq.s32.totalorder %s9, 1
    %p66 = por %p64, %p65
    %p67 = scmp.ne.s32.totalorder %s59, %s62
    %p68 = scmp.eq.s32.totalorder %s9, 0
    %p69 = por %p67, %p68
    %p70 = scmp.ne.s32.totalorder %s59, %s62
    %p71 = scmp.eq.s32.totalorder %s14, 1
    %p72 = por %p70, %p71
    %p73 = scmp.ne.s32.totalorder %s62, %s63
    %p74 = scmp.eq.s32.totalorder %s14, 0
    %p75 = por %p73, %p74
    %p76 = scmp.ne.s32.totalorder %s62, %s63
    %p77 = scmp.eq.s32.totalorder %s15, 1
    %p78 = por %p76, %p77
    %p80 = scmp.ne.s32.totalorder %s63, %s79
    %p81 = scmp.eq.s32.totalorder %s15, 0
    %p82 = por %p80, %p81
    %s83 = ssub.s32 %s16, %s28
    %p84 = scmp.eq.s32.totalorder %s83, 0
    %s86 = sadd.s32 %s85, 1
    %s87 = scalar_select %p84, %s85, %s86
    %p90 = pneg %p84
    %p91 = scmp.eq.s32.totalorder %s9, 1
    %p92 = por %p90, %p91
    %p93 = scmp.ne.s32.totalorder %s85, %s88
    %p94 = scmp.eq.s32.totalorder %s9, 0
    %p95 = por %p93, %p94
    %p96 = scmp.ne.s32.totalorder %s85, %s88
    %p97 = scmp.eq.s32.totalorder %s14, 1
    %p98 = por %p96, %p97
    %p99 = scmp.ne.s32.totalorder %s88, %s89
    %p100 = scmp.eq.s32.totalorder %s14, 0
    %p101 = por %p99, %p100
    %p102 = scmp.ne.s32.totalorder %s88, %s89
    %p103 = scmp.eq.s32.totalorder %s15, 1
    %p104 = por %p102, %p103
    %p106 = scmp.ne.s32.totalorder %s89, %s105
    %p107 = scmp.eq.s32.totalorder %s15, 0
    %p108 = por %p106, %p107
    %s109 = ssub.s32 %s16, %s28
    %s110 = ssub.s32 %s17, %s24
    %s111 = sor.u32 %s109, %s110
    %p112 = scmp.eq.s32.totalorder %s111, 0
    %s114 = sadd.s32 %s113, 1
    %s115 = scalar_select %p112, %s113, %s114
    %p118 = pneg %p112
    %p119 = scmp.eq.s32.totalorder %s9, 1
    %p120 = por %p118, %p119
    %p121 = scmp.ne.s32.totalorder %s113, %s116
    %p122 = scmp.eq.s32.totalorder %s9, 0
    %p123 = por %p121, %p122
    %p124 = scmp.ne.s32.totalorder %s113, %s116
    %p125 = scmp.eq.s32.totalorder %s14, 1
    %p126 = por %p124, %p125
    %p127 = scmp.ne.s32.totalorder %s116, %s117
    %p128 = scmp.eq.s32.totalorder %s14, 0
    %p129 = por %p127, %p128
    %p130 = scmp.ne.s32.totalorder %s116, %s117
    %p131 = scmp.eq.s32.totalorder %s15, 1
    %p132 = por %p130, %p131
    %p134 = scmp.ne.s32.totalorder %s117, %s133
    %p135 = scmp.eq.s32.totalorder %s15, 0
    %p136 = por %p134, %p135
    %p137 = scmp.le.s32.totalorder 1, %s9
    %p138 = scmp.lt.s32.totalorder %s9, 3
    %p139 = pnand %p137, %p138
    %p140 = pneg %p139
    // Predicated region
    $region9: #{mutual_info_reg_forward.5} parent=5 // pred_check
      _
    $region10: #{mutual_info_reg_forward.5} parent=5 // pred_check_branch
      %142 = sbr.rel (%p139) target = $region12
    $region11: #{mutual_info_reg_forward.5} parent=5 // pred_region
      %s143 = ssub.s32 %s9, 1
    $region12: #{mutual_info_reg_forward.5} parent=5 // pred_fallthru
      _
    %p144 = scmp.lt.s32.totalorder %s9, 2
    // Predicated region
    $region13: #{mutual_info_reg_forward.5} parent=5 // pred_check
      %p145 = pneg %p144
    $region14: #{mutual_info_reg_forward.5} parent=5 // pred_check_branch
      %147 = sbr.rel (%p145) target = $region16
    $region15: #{mutual_info_reg_forward.5} parent=5 // pred_region
      // Predicated region
      $region17: #{mutual_info_reg_forward.5} parent=15 // pred_check
        %p148 = pneg %p43
      $region18: #{mutual_info_reg_forward.5} parent=15 // pred_check_branch
        %150 = sbr.rel (%p148) target = $region20
      $region19: #{mutual_info_reg_forward.5} parent=15 // pred_region
        %s151 = smul.u32 16, %s17
        %p152 = scmp.lt.s32.totalorder %s16, 1
        %s153 = scalar_select %p152, %s16, 1
        %p154 = scmp.lt.s32.totalorder %s151, 15
        %s155 = scalar_select %p154, %s151, 15
        %s156 = smul.addr %s153, 16
        %s157 = sadd.s32 %s155, %s156
        %s158 = smul.addr %s157, 4
        %s159 = scalar_lea.vmem %s0, %s158
        %s160 = smul.u32 16, %s17
      $region20: #{mutual_info_reg_forward.5} parent=15 // pred_fallthru
        _
      // Predicated region
      $region21: #{mutual_info_reg_forward.5} parent=15 // pred_check
        %p161 = pneg %p69
      $region22: #{mutual_info_reg_forward.5} parent=15 // pred_check_branch
        %163 = sbr.rel (%p161) target = $region24
      $region23: #{mutual_info_reg_forward.5} parent=15 // pred_region
        %p164 = scmp.lt.s32.totalorder %s16, 1
        %s165 = scalar_select %p164, %s16, 1
        %s166 = smul.addr %s165, 16
        %s167 = smul.addr %s166, 4
        %s168 = scalar_lea.vmem %s1, %s167
      $region24: #{mutual_info_reg_forward.5} parent=15 // pred_fallthru
        _
      // Predicated region
      $region25: #{mutual_info_reg_forward.5} parent=15 // pred_check
        %p169 = pneg %p95
      $region26: #{mutual_info_reg_forward.5} parent=15 // pred_check_branch
        %171 = sbr.rel (%p169) target = $region28
      $region27: #{mutual_info_reg_forward.5} parent=15 // pred_region
        %p172 = scmp.lt.s32.totalorder %s16, 1
        %s173 = scalar_select %p172, %s16, 1
        %s174 = scalar_lea.vmem %s2, %s173
      $region28: #{mutual_info_reg_forward.5} parent=15 // pred_fallthru
        _
    $region16: #{mutual_info_reg_forward.5} parent=5 // pred_fallthru
      _
    %p175 = scmp.le.s32.totalorder 1, %s9
    %p176 = scmp.lt.s32.totalorder %s9, 3
    %p177 = pnand %p175, %p176
    %p178 = pneg %p177
    // Predicated region
    $region29: #{mutual_info_reg_forward.5} parent=5 // pred_check
      _
    $region30: #{mutual_info_reg_forward.5} parent=5 // pred_check_branch
      %180 = sbr.rel (%p177) target = $region32
    $region31: #{mutual_info_reg_forward.5} parent=5 // pred_region
      %s181 = ssub.s32 %s9, 1
      %s182 = smul.u32 16, %s19
      %p183 = scmp.lt.s32.totalorder %s18, 1
      %s184 = scalar_select %p183, %s18, 1
      %p185 = scmp.lt.s32.totalorder %s182, 15
      %s186 = scalar_select %p185, %s182, 15
      %s187 = smul.addr %s184, 16
      %s188 = sadd.s32 %s186, %s187
      %s189 = smul.addr %s188, 4
      %s190 = scalar_lea.vmem %s0, %s189
      %p191 = pneg %p49
      %p192 = pneg %p46
      %p193 = scmp.lt.s32.totalorder %s18, 1
      %s194 = scalar_select %p193, %s18, 1
      %s195 = smul.addr %s194, 16
      %s196 = smul.addr %s195, 4
      %s197 = scalar_lea.vmem %s1, %s196
      %p198 = pneg %p75
      %p199 = pneg %p72
      %p200 = scmp.lt.s32.totalorder %s18, 1
      %s201 = scalar_select %p200, %s18, 1
      %s202 = scalar_lea.vmem %s2, %s201
      %p203 = pneg %p101
      %p204 = pneg %p98
      %p205 = pneg %p129
      %p206 = pneg %p126
      %s207 = smul.u32 16, %s19
      %p208 = scmp.lt.s32.totalorder %s18, 1
      %s209 = scalar_select %p208, %s18, 1
      %p210 = scmp.lt.s32.totalorder %s207, 15
      %s211 = scalar_select %p210, %s207, 15
      %s212 = smul.addr %s209, 16
      %s213 = sadd.s32 %s211, %s212
      %s214 = smul.addr %s213, 4
      %s215 = scalar_lea.vmem %s3, %s214
      %s216 = smul.u32 16, %s19
      %p217 = scmp.lt.s32.totalorder %s18, 1
      %s218 = scalar_select %p217, %s18, 1
      %p219 = scmp.lt.s32.totalorder %s216, 15
      %s220 = scalar_select %p219, %s216, 15
      %s221 = smul.addr %s218, 16
      %s222 = sadd.s32 %s220, %s221
      %s223 = smul.addr %s222, 4
      %s224 = scalar_lea.vmem %s0, %s223
      %s225 = smul.u32 16, %s19
      %p226 = scmp.lt.s32.totalorder %s18, 1
      %s227 = scalar_select %p226, %s18, 1
      %s228 = smul.addr %s227, 16
      %s229 = smul.addr %s228, 4
      %s230 = scalar_lea.vmem %s1, %s229
      %p231 = scmp.lt.s32.totalorder %s18, 1
      %s232 = scalar_select %p231, %s18, 1
      %s233 = scalar_lea.vmem %s2, %s232
      %s234 = smul.u32 16, %s19
      %p235 = scmp.lt.s32.totalorder %s18, 1
      %s236 = scalar_select %p235, %s18, 1
      %p237 = scmp.lt.s32.totalorder %s234, 15
      %s238 = scalar_select %p237, %s234, 15
      %s239 = smul.addr %s236, 16
      %s240 = sadd.s32 %s238, %s239
      %s241 = smul.addr %s240, 4
      %s242 = scalar_lea.vmem %s3, %s241
      %s243 = smul.u32 16, %s19
      %v245 = vld [vmem:[%s224] sm:$0xf]
      %v246 = vld [vmem:[%s224 + $0x4] sm:$0xf]
      %v247 = vld [vmem:[%s224 + $0x8] sm:$0xf]
      %v248 = vld [vmem:[%s224 + $0xc] sm:$0xf]
      %v249 = vld [vmem:[%s224 + $0x10] sm:$0xf]
      %v250 = vld [vmem:[%s224 + $0x14] sm:$0xf]
      %v251 = vld [vmem:[%s224 + $0x18] sm:$0xf]
      %v252 = vld [vmem:[%s224 + $0x1c] sm:$0xf]
      %v253 = vld [vmem:[%s224 + $0x20] sm:$0xf]
      %v254 = vld [vmem:[%s224 + $0x24] sm:$0xf]
      %v255 = vld [vmem:[%s224 + $0x28] sm:$0xf]
      %v256 = vld [vmem:[%s224 + $0x2c] sm:$0xf]
      %v257 = vld [vmem:[%s224 + $0x30] sm:$0xf]
      %v258 = vld [vmem:[%s224 + $0x34] sm:$0xf]
      %v259 = vld [vmem:[%s224 + $0x38] sm:$0xf]
      %v260 = vld [vmem:[%s224 + $0x3c] sm:$0xf]
      %v261 = vld [vmem:[%s230] sm:$0xf]
      %v262 = vld [vmem:[%s230 + $0x4] sm:$0xf]
      %v263 = vld [vmem:[%s230 + $0x8] sm:$0xf]
      %v264 = vld [vmem:[%s230 + $0xc] sm:$0xf]
      %v265 = vld [vmem:[%s230 + $0x10] sm:$0xf]
      %v266 = vld [vmem:[%s230 + $0x14] sm:$0xf]
      %v267 = vld [vmem:[%s230 + $0x18] sm:$0xf]
      %v268 = vld [vmem:[%s230 + $0x1c] sm:$0xf]
      %v269 = vld [vmem:[%s230 + $0x20] sm:$0xf]
      %v270 = vld [vmem:[%s230 + $0x24] sm:$0xf]
      %v271 = vld [vmem:[%s230 + $0x28] sm:$0xf]
      %v272 = vld [vmem:[%s230 + $0x2c] sm:$0xf]
      %v273 = vld [vmem:[%s230 + $0x30] sm:$0xf]
      %v274 = vld [vmem:[%s230 + $0x34] sm:$0xf]
      %v275 = vld [vmem:[%s230 + $0x38] sm:$0xf]
      %v276 = vld [vmem:[%s230 + $0x3c] sm:$0xf]
      %v277 = vld [vmem:[%s233] sm:$0x1]
      %v279 = vlaneseq
      %v280 = vshrl.u32 %v279, 7
      %v281 = vsub.s32 0, %v280
      %v282 = vrot.slane %v277, %v281
      %v300 = vunpack.c.l.b16 %v245
      %v301 = vunpack.c.l.b16 %v246
      %v302 = vunpack.c.l.b16 %v247
      %v303 = vunpack.c.l.b16 %v248
      %v304 = vunpack.c.l.b16 %v249
      %v305 = vunpack.c.l.b16 %v250
      %v306 = vunpack.c.l.b16 %v251
      %v307 = vunpack.c.l.b16 %v252
      %v308 = vunpack.c.l.b16 %v253
      %v309 = vunpack.c.l.b16 %v254
      %v310 = vunpack.c.l.b16 %v255
      %v311 = vunpack.c.l.b16 %v256
      %v312 = vunpack.c.l.b16 %v257
      %v313 = vunpack.c.l.b16 %v258
      %v314 = vunpack.c.l.b16 %v259
      %v315 = vunpack.c.l.b16 %v260
      %v316 = vpack.c.b16 %v301, %v300
      %v317 = vpack.c.b16 %v303, %v302
      %v318 = vpack.c.b16 %v305, %v304
      %v319 = vpack.c.b16 %v307, %v306
      %v320 = vpack.c.b16 %v309, %v308
      %v321 = vpack.c.b16 %v311, %v310
      %v322 = vpack.c.b16 %v313, %v312
      %v323 = vpack.c.b16 %v315, %v314
      %v348 = vunpack.c.l.b16 %v261
      %v349 = vunpack.c.l.b16 %v262
      %v350 = vunpack.c.l.b16 %v263
      %v351 = vunpack.c.l.b16 %v264
      %v352 = vunpack.c.l.b16 %v265
      %v353 = vunpack.c.l.b16 %v266
      %v354 = vunpack.c.l.b16 %v267
      %v355 = vunpack.c.l.b16 %v268
      %v356 = vunpack.c.l.b16 %v269
      %v357 = vunpack.c.l.b16 %v270
      %v358 = vunpack.c.l.b16 %v271
      %v359 = vunpack.c.l.b16 %v272
      %v360 = vunpack.c.l.b16 %v273
      %v361 = vunpack.c.l.b16 %v274
      %v362 = vunpack.c.l.b16 %v275
      %v363 = vunpack.c.l.b16 %v276
      %v364 = vpack.c.b16 %v349, %v348
      %v365 = vpack.c.b16 %v351, %v350
      %v366 = vpack.c.b16 %v353, %v352
      %v367 = vpack.c.b16 %v355, %v354
      %v368 = vpack.c.b16 %v357, %v356
      %v369 = vpack.c.b16 %v359, %v358
      %v370 = vpack.c.b16 %v361, %v360
      %v371 = vpack.c.b16 %v363, %v362
      %380 = vmatprep.subr.bf16.mxu0 0
      %381 = vmatpush1.bf16.msra.mxu0 %v371
      %382 = vmatprep.subr.bf16.mxu0 0
      %383 = vmatpush1.bf16.msra.mxu0 %v370
      %384 = vmatprep.subr.bf16.mxu0 0
      %385 = vmatpush1.bf16.msra.mxu0 %v369
      %386 = vmatprep.subr.bf16.mxu0 0
      %387 = vmatpush1.bf16.msra.mxu0 %v368
      %388 = vmatprep.subr.bf16.mxu0 0
      %389 = vmatpush1.bf16.msra.mxu0 %v367
      %390 = vmatprep.subr.bf16.mxu0 0
      %391 = vmatpush1.bf16.msra.mxu0 %v366
      %392 = vmatprep.subr.bf16.mxu0 0
      %393 = vmatpush1.bf16.msra.mxu0 %v365
      %394 = vmatprep.subr.bf16.mxu0 0
      %395 = vmatpush1.bf16.msra.mxu0 %v364
      %396 = vmatprep.subr.bf16.mxu0 0
      %397 = vmatpush2.bf16.msra.mxu0 0
      %398 = vmatprep.subr.bf16.mxu0 0
      %399 = vmatpush2.bf16.msra.mxu0 0
      %400 = vmatprep.subr.bf16.mxu0 0
      %401 = vmatpush2.bf16.msra.mxu0 0
      %402 = vmatprep.subr.bf16.mxu0 0
      %403 = vmatpush2.bf16.msra.mxu0 0
      %404 = vmatprep.subr.bf16.mxu0 0
      %405 = vmatpush2.bf16.msra.mxu0 0
      %406 = vmatprep.subr.bf16.mxu0 0
      %407 = vmatpush2.bf16.msra.mxu0 0
      %408 = vmatprep.subr.bf16.mxu0 0
      %409 = vmatpush2.bf16.msra.mxu0 0
      %410 = vmatprep.subr.bf16.mxu0 0
      %411 = vmatpush2.bf16.msra.mxu0 0
      %412 = vmatprep.mubr.bf16.mxu0 0
      %413 = vmatmul.mubr.bf16.gmra.mxu0 %v316
      %v414 = vpop.f32.mrf.mxu0
      %v415 = vadd.f32 %v282, %v414
      %v416 = vpop.f32.mrf.mxu0
      %v417 = vpop.f32.mrf.mxu0
      %v418 = vadd.f32 %v282, %v417
      %v419 = vpop.f32.mrf.mxu0
      %420 = vmatprep.mubr.bf16.mxu0 0
      %421 = vmatmul.mubr.bf16.gmra.mxu0 %v317
      %v422 = vpop.f32.mrf.mxu0
      %v423 = vadd.f32 %v282, %v422
      %v424 = vpop.f32.mrf.mxu0
      %v425 = vpop.f32.mrf.mxu0
      %v426 = vadd.f32 %v282, %v425
      %v427 = vpop.f32.mrf.mxu0
      %428 = vmatprep.mubr.bf16.mxu0 0
      %429 = vmatmul.mubr.bf16.gmra.mxu0 %v318
      %v430 = vpop.f32.mrf.mxu0
      %v431 = vadd.f32 %v282, %v430
      %v432 = vpop.f32.mrf.mxu0
      %v433 = vpop.f32.mrf.mxu0
      %v434 = vadd.f32 %v282, %v433
      %v435 = vpop.f32.mrf.mxu0
      %436 = vmatprep.mubr.bf16.mxu0 0
      %437 = vmatmul.mubr.bf16.gmra.mxu0 %v319
      %v438 = vpop.f32.mrf.mxu0
      %v439 = vadd.f32 %v282, %v438
      %v440 = vpop.f32.mrf.mxu0
      %v441 = vpop.f32.mrf.mxu0
      %v442 = vadd.f32 %v282, %v441
      %v443 = vpop.f32.mrf.mxu0
      %444 = vmatprep.mubr.bf16.mxu0 0
      %445 = vmatmul.mubr.bf16.gmra.mxu0 %v320
      %v446 = vpop.f32.mrf.mxu0
      %v447 = vadd.f32 %v282, %v446
      %v448 = vpop.f32.mrf.mxu0
      %v449 = vpop.f32.mrf.mxu0
      %v450 = vadd.f32 %v282, %v449
      %v451 = vpop.f32.mrf.mxu0
      %452 = vmatprep.mubr.bf16.mxu0 0
      %453 = vmatmul.mubr.bf16.gmra.mxu0 %v321
      %v454 = vpop.f32.mrf.mxu0
      %v455 = vadd.f32 %v282, %v454
      %v456 = vpop.f32.mrf.mxu0
      %v457 = vpop.f32.mrf.mxu0
      %v458 = vadd.f32 %v282, %v457
      %v459 = vpop.f32.mrf.mxu0
      %460 = vmatprep.mubr.bf16.mxu0 0
      %461 = vmatmul.mubr.bf16.gmra.mxu0 %v322
      %v462 = vpop.f32.mrf.mxu0
      %v463 = vadd.f32 %v282, %v462
      %v464 = vpop.f32.mrf.mxu0
      %v465 = vpop.f32.mrf.mxu0
      %v466 = vadd.f32 %v282, %v465
      %v467 = vpop.f32.mrf.mxu0
      %468 = vmatprep.mubr.bf16.mxu0 0
      %469 = vmatmul.mubr.bf16.gmra.mxu0 %v323
      %v470 = vpop.f32.mrf.mxu0
      %v471 = vadd.f32 %v282, %v470
      %v472 = vpop.f32.mrf.mxu0
      %v473 = vpop.f32.mrf.mxu0
      %v474 = vadd.f32 %v282, %v473
      %v475 = vpop.f32.mrf.mxu0
      %476 = vdwg.mxu0
      %v477 = vpack.c.bf16 %v418, %v415
      %v478 = vpack.c.bf16 %v426, %v423
      %v479 = vpack.c.bf16 %v434, %v431
      %v480 = vpack.c.bf16 %v442, %v439
      %v481 = vpack.c.bf16 %v450, %v447
      %v482 = vpack.c.bf16 %v458, %v455
      %v483 = vpack.c.bf16 %v466, %v463
      %v484 = vpack.c.bf16 %v474, %v471
      %v493 = vunpack.c.l.b16 %v477
      %v494 = vunpack.c.h.b16 %v477
      %v495 = vunpack.c.l.b16 %v478
      %v496 = vunpack.c.h.b16 %v478
      %v497 = vunpack.c.l.b16 %v479
      %v498 = vunpack.c.h.b16 %v479
      %v499 = vunpack.c.l.b16 %v480
      %v500 = vunpack.c.h.b16 %v480
      %v501 = vunpack.c.l.b16 %v481
      %v502 = vunpack.c.h.b16 %v481
      %v503 = vunpack.c.l.b16 %v482
      %v504 = vunpack.c.h.b16 %v482
      %v505 = vunpack.c.l.b16 %v483
      %v506 = vunpack.c.h.b16 %v483
      %v507 = vunpack.c.l.b16 %v484
      %v508 = vunpack.c.h.b16 %v484
      %v509 = vpack.c.b16 %v493, %v493
      %v510 = vpack.c.b16 %v494, %v494
      %v511 = vpack.c.b16 %v495, %v495
      %v512 = vpack.c.b16 %v496, %v496
      %v513 = vpack.c.b16 %v497, %v497
      %v514 = vpack.c.b16 %v498, %v498
      %v515 = vpack.c.b16 %v499, %v499
      %v516 = vpack.c.b16 %v500, %v500
      %v517 = vpack.c.b16 %v501, %v501
      %v518 = vpack.c.b16 %v502, %v502
      %v519 = vpack.c.b16 %v503, %v503
      %v520 = vpack.c.b16 %v504, %v504
      %v521 = vpack.c.b16 %v505, %v505
      %v522 = vpack.c.b16 %v506, %v506
      %v523 = vpack.c.b16 %v507, %v507
      %v524 = vpack.c.b16 %v508, %v508
      %541 = vst [vmem:[%s242] sm:$0xf] %v509
      %542 = vst [vmem:[%s242 + $0x4] sm:$0xf] %v510
      %543 = vst [vmem:[%s242 + $0x8] sm:$0xf] %v511
      %544 = vst [vmem:[%s242 + $0xc] sm:$0xf] %v512
      %545 = vst [vmem:[%s242 + $0x10] sm:$0xf] %v513
      %546 = vst [vmem:[%s242 + $0x14] sm:$0xf] %v514
      %547 = vst [vmem:[%s242 + $0x18] sm:$0xf] %v515
      %548 = vst [vmem:[%s242 + $0x1c] sm:$0xf] %v516
      %549 = vst [vmem:[%s242 + $0x20] sm:$0xf] %v517
      %550 = vst [vmem:[%s242 + $0x24] sm:$0xf] %v518
      %551 = vst [vmem:[%s242 + $0x28] sm:$0xf] %v519
      %552 = vst [vmem:[%s242 + $0x2c] sm:$0xf] %v520
      %553 = vst [vmem:[%s242 + $0x30] sm:$0xf] %v521
      %554 = vst [vmem:[%s242 + $0x34] sm:$0xf] %v522
      %555 = vst [vmem:[%s242 + $0x38] sm:$0xf] %v523
      %556 = vst [vmem:[%s242 + $0x3c] sm:$0xf] %v524
      %s557 = smul.u32 16, %s19
      %p558 = scmp.lt.s32.totalorder %s18, 1
      %s559 = scalar_select %p558, %s18, 1
      %p560 = scmp.lt.s32.totalorder %s557, 15
      %s561 = scalar_select %p560, %s557, 15
      %s562 = smul.addr %s559, 16
      %s563 = sadd.s32 %s561, %s562
      %s564 = smul.addr %s563, 4
      %s565 = scalar_lea.vmem %s3, %s564
      // Predicated region
      $region33: #{mutual_info_reg_forward.5} parent=31 // pred_check
        %p566 = pneg %p126
      $region34: #{mutual_info_reg_forward.5} parent=31 // pred_check_branch
        %568 = sbr.rel (%p566) target = $region36
      $region35: #{mutual_info_reg_forward.5} parent=31 // pred_region
        %s569 = smul.u32 16, %s19
      $region36: #{mutual_info_reg_forward.5} parent=31 // pred_fallthru
        _
    $region32: #{mutual_info_reg_forward.5} parent=5 // pred_fallthru
      _
    %p570 = scmp.le.s32.totalorder 2, %s9
    // Predicated region
    $region37: #{mutual_info_reg_forward.5} parent=5 // pred_check
      %p571 = pneg %p570
    $region38: #{mutual_info_reg_forward.5} parent=5 // pred_check_branch
      %573 = sbr.rel (%p571) target = $region40
    $region39: #{mutual_info_reg_forward.5} parent=5 // pred_region
      %s574 = ssub.s32 %s9, 2
      // Predicated region
      $region41: #{mutual_info_reg_forward.5} parent=39 // pred_check
        %p575 = pneg %p132
      $region42: #{mutual_info_reg_forward.5} parent=39 // pred_check_branch
        %577 = sbr.rel (%p575) target = $region44
      $region43: #{mutual_info_reg_forward.5} parent=39 // pred_region
        %s578 = smul.u32 16, %s21
        %p579 = scmp.lt.s32.totalorder %s20, 1
        %s580 = scalar_select %p579, %s20, 1
        %p581 = scmp.lt.s32.totalorder %s578, 15
        %s582 = scalar_select %p581, %s578, 15
        %s583 = smul.addr %s580, 16
        %s584 = sadd.s32 %s582, %s583
        %s585 = smul.addr %s584, 4
        %s586 = scalar_lea.vmem %s3, %s585
      $region44: #{mutual_info_reg_forward.5} parent=39 // pred_fallthru
        _
    $region40: #{mutual_info_reg_forward.5} parent=5 // pred_fallthru
      _
  $region6: #{mutual_info_reg_forward.5} parent=0 // loop_footer
    %s13 = sadd.s32 1, %s9
  $region7: #{mutual_info_reg_forward.5} parent=0 // loop_footer_branch
    %8 = sbr.rel target = $region3
  $region8: #{mutual_info_reg_forward.5} parent=0 // loop_exit
    _

// kernel: mutual_info_reg_forward.6
$region0: #{mutual_info_reg_forward.6}
  #allocation0 [shape = 'u32[]', space=smem, size = 0x4, offset = 0x4, fixed_abs, tag = 'smem constant byte address 0x4 - core index']
  #allocation1 [shape = 'u32[144,128]{1,0:T(1,128)}', space=vmem, size = 0x12000, scoped, tag = 'internal scratch']
  #allocation2 [shape = 'f32[2,256]{1,0:T(2,128)}', space=vmem, size = 0x800, scoped, tag = 'scratch operand']
  %s0 = inlined_call_operand.vmem [shape: bf16[2,2,4096], index: 0, kind: input, shape index: {}]
  %s1 = inlined_call_operand.vmem [shape: bf16[2,4096,256], index: 1, kind: input, shape index: {}]
  %s2 = inlined_call_operand.vmem [shape: f32[2,1,256], index: 2, kind: input, shape index: {}]
  %s3 = inlined_call_operand.vmem [shape: f32[2,2,256], index: 3, kind: output, shape index: {}]
  %s4 = sld [smem:[#allocation0]]
  $region53: #{mutual_info_reg_forward.6} parent=0
    _
  %s6 = ssub.s32 1, %s4
  %s7 = scalar_select 0, %s6, %s4
  loop: start=0, step=1, limit=6
  $region2: #{mutual_info_reg_forward.6} parent=0 // loop_pre_header
    _
  $region3: #{mutual_info_reg_forward.6} parent=0 // loop_header
    %s9 = sphi 0, %s13
    %p10 = scmp.ge.s32.totalorder %s9, 6
    %s16 = sphi 0, %s28
    %s17 = sphi 0, %s24
    %s18 = sphi 0, %s16
    %s19 = sphi 0, %s17
    %s20 = sphi 0, %s18
    %s21 = sphi 0, %s19
    %s33 = sphi 0, %s35
    %s36 = sphi 0, %s33
    %s37 = sphi 0, %s36
    %s53 = sphi 0, %s37
    %s61 = sphi 0, %s63
    %s64 = sphi 0, %s61
    %s65 = sphi 0, %s64
    %s81 = sphi 0, %s65
    %s87 = sphi 0, %s89
    %s90 = sphi 0, %s87
    %s91 = sphi 0, %s90
    %s107 = sphi 0, %s91
    %s113 = sphi 0, %s115
    %s116 = sphi 0, %s113
    %s117 = sphi 0, %s116
    %s133 = sphi 0, %s117
  $region4: #{mutual_info_reg_forward.6} parent=0 // loop_header_branch
    %12 = sbr.rel (%p10) target = $region8
  $region5: #{mutual_info_reg_forward.6} parent=0 // loop_body
    %s14 = ssub.s32 %s9, 1
    %s15 = ssub.s32 %s9, 2
    %s22 = sadd.s32 1, %s17
    %p23 = scmp.ge.s32.totalorder %s22, 2
    %s24 = scalar_select %p23, 0, %s22
    %s25 = sadd.s32 1, %s16
    %s26 = scalar_select %p23, %s25, %s16
    %p27 = scmp.ge.s32.totalorder %s26, 2
    %s28 = scalar_select %p27, 0, %s26
    %s29 = ssub.s32 %s16, %s28
    %s30 = ssub.s32 %s17, %s24
    %s31 = sor.u32 %s29, %s30
    %p32 = scmp.eq.s32.totalorder %s31, 0
    %s34 = sadd.s32 %s33, 1
    %s35 = scalar_select %p32, %s33, %s34
    %p38 = pneg %p32
    %p39 = scmp.eq.s32.totalorder %s9, 3
    %p40 = por %p38, %p39
    %p41 = scmp.ne.s32.totalorder %s33, %s36
    %p42 = scmp.eq.s32.totalorder %s9, 0
    %p43 = por %p41, %p42
    %p44 = scmp.ne.s32.totalorder %s33, %s36
    %p45 = scmp.eq.s32.totalorder %s14, 3
    %p46 = por %p44, %p45
    %p47 = scmp.ne.s32.totalorder %s36, %s37
    %p48 = scmp.eq.s32.totalorder %s14, 0
    %p49 = por %p47, %p48
    %p50 = scmp.ne.s32.totalorder %s36, %s37
    %p51 = scmp.eq.s32.totalorder %s15, 3
    %p52 = por %p50, %p51
    %p54 = scmp.ne.s32.totalorder %s37, %s53
    %p55 = scmp.eq.s32.totalorder %s15, 0
    %p56 = por %p54, %p55
    %s57 = ssub.s32 %s16, %s28
    %s58 = ssub.s32 %s17, %s24
    %s59 = sor.u32 %s57, %s58
    %p60 = scmp.eq.s32.totalorder %s59, 0
    %s62 = sadd.s32 %s61, 1
    %s63 = scalar_select %p60, %s61, %s62
    %p66 = pneg %p60
    %p67 = scmp.eq.s32.totalorder %s9, 3
    %p68 = por %p66, %p67
    %p69 = scmp.ne.s32.totalorder %s61, %s64
    %p70 = scmp.eq.s32.totalorder %s9, 0
    %p71 = por %p69, %p70
    %p72 = scmp.ne.s32.totalorder %s61, %s64
    %p73 = scmp.eq.s32.totalorder %s14, 3
    %p74 = por %p72, %p73
    %p75 = scmp.ne.s32.totalorder %s64, %s65
    %p76 = scmp.eq.s32.totalorder %s14, 0
    %p77 = por %p75, %p76
    %p78 = scmp.ne.s32.totalorder %s64, %s65
    %p79 = scmp.eq.s32.totalorder %s15, 3
    %p80 = por %p78, %p79
    %p82 = scmp.ne.s32.totalorder %s65, %s81
    %p83 = scmp.eq.s32.totalorder %s15, 0
    %p84 = por %p82, %p83
    %s85 = ssub.s32 %s16, %s28
    %p86 = scmp.eq.s32.totalorder %s85, 0
    %s88 = sadd.s32 %s87, 1
    %s89 = scalar_select %p86, %s87, %s88
    %p92 = pneg %p86
    %p93 = scmp.eq.s32.totalorder %s9, 3
    %p94 = por %p92, %p93
    %p95 = scmp.ne.s32.totalorder %s87, %s90
    %p96 = scmp.eq.s32.totalorder %s9, 0
    %p97 = por %p95, %p96
    %p98 = scmp.ne.s32.totalorder %s87, %s90
    %p99 = scmp.eq.s32.totalorder %s14, 3
    %p100 = por %p98, %p99
    %p101 = scmp.ne.s32.totalorder %s90, %s91
    %p102 = scmp.eq.s32.totalorder %s14, 0
    %p103 = por %p101, %p102
    %p104 = scmp.ne.s32.totalorder %s90, %s91
    %p105 = scmp.eq.s32.totalorder %s15, 3
    %p106 = por %p104, %p105
    %p108 = scmp.ne.s32.totalorder %s91, %s107
    %p109 = scmp.eq.s32.totalorder %s15, 0
    %p110 = por %p108, %p109
    %s111 = ssub.s32 %s16, %s28
    %p112 = scmp.eq.s32.totalorder %s111, 0
    %s114 = sadd.s32 %s113, 1
    %s115 = scalar_select %p112, %s113, %s114
    %p118 = pneg %p112
    %p119 = scmp.eq.s32.totalorder %s9, 3
    %p120 = por %p118, %p119
    %p121 = scmp.ne.s32.totalorder %s113, %s116
    %p122 = scmp.eq.s32.totalorder %s9, 0
    %p123 = por %p121, %p122
    %p124 = scmp.ne.s32.totalorder %s113, %s116
    %p125 = scmp.eq.s32.totalorder %s14, 3
    %p126 = por %p124, %p125
    %p127 = scmp.ne.s32.totalorder %s116, %s117
    %p128 = scmp.eq.s32.totalorder %s14, 0
    %p129 = por %p127, %p128
    %p130 = scmp.ne.s32.totalorder %s116, %s117
    %p131 = scmp.eq.s32.totalorder %s15, 3
    %p132 = por %p130, %p131
    %p134 = scmp.ne.s32.totalorder %s117, %s133
    %p135 = scmp.eq.s32.totalorder %s15, 0
    %p136 = por %p134, %p135
    %p137 = scmp.le.s32.totalorder 1, %s9
    %p138 = scmp.lt.s32.totalorder %s9, 5
    %p139 = pnand %p137, %p138
    %p140 = pneg %p139
    // Predicated region
    $region9: #{mutual_info_reg_forward.6} parent=5 // pred_check
      _
    $region10: #{mutual_info_reg_forward.6} parent=5 // pred_check_branch
      %142 = sbr.rel (%p139) target = $region12
    $region11: #{mutual_info_reg_forward.6} parent=5 // pred_region
      %s143 = ssub.s32 %s9, 1
    $region12: #{mutual_info_reg_forward.6} parent=5 // pred_fallthru
      _
    %p144 = scmp.lt.s32.totalorder %s9, 4
    // Predicated region
    $region13: #{mutual_info_reg_forward.6} parent=5 // pred_check
      %p145 = pneg %p144
    $region14: #{mutual_info_reg_forward.6} parent=5 // pred_check_branch
      %147 = sbr.rel (%p145) target = $region16
    $region15: #{mutual_info_reg_forward.6} parent=5 // pred_region
      // Predicated region
      $region17: #{mutual_info_reg_forward.6} parent=15 // pred_check
        %p148 = pneg %p43
      $region18: #{mutual_info_reg_forward.6} parent=15 // pred_check_branch
        %150 = sbr.rel (%p148) target = $region20
      $region19: #{mutual_info_reg_forward.6} parent=15 // pred_region
        %s151 = smul.u32 16, %s17
        %p152 = scmp.lt.s32.totalorder %s16, 1
        %s153 = scalar_select %p152, %s16, 1
        %p154 = scmp.lt.s32.totalorder %s151, 31
        %s155 = scalar_select %p154, %s151, 31
        %s156 = smul.addr %s153, 32
        %s157 = sadd.s32 %s155, %s156
        %s158 = scalar_lea.vmem %s0, %s157
        %s159 = smul.u32 16, %s17
      $region20: #{mutual_info_reg_forward.6} parent=15 // pred_fallthru
        _
      // Predicated region
      $region21: #{mutual_info_reg_forward.6} parent=15 // pred_check
        %p160 = pneg %p71
      $region22: #{mutual_info_reg_forward.6} parent=15 // pred_check_branch
        %162 = sbr.rel (%p160) target = $region24
      $region23: #{mutual_info_reg_forward.6} parent=15 // pred_region
        %s163 = smul.u32 256, %s17
        %p164 = scmp.lt.s32.totalorder %s16, 1
        %s165 = scalar_select %p164, %s16, 1
        %p166 = scmp.lt.s32.totalorder %s163, 511
        %s167 = scalar_select %p166, %s163, 511
        %s168 = smul.addr %s167, 2
        %s169 = smul.addr %s165, 1024
        %s170 = sadd.s32 %s168, %s169
        %s171 = smul.addr %s170, 4
        %s172 = scalar_lea.vmem %s1, %s171
        %s173 = smul.u32 256, %s17
      $region24: #{mutual_info_reg_forward.6} parent=15 // pred_fallthru
        _
      // Predicated region
      $region25: #{mutual_info_reg_forward.6} parent=15 // pred_check
        %p174 = pneg %p97
      $region26: #{mutual_info_reg_forward.6} parent=15 // pred_check_branch
        %176 = sbr.rel (%p174) target = $region28
      $region27: #{mutual_info_reg_forward.6} parent=15 // pred_region
        %p177 = scmp.lt.s32.totalorder %s16, 1
        %s178 = scalar_select %p177, %s16, 1
        %s179 = smul.addr %s178, 2
        %s180 = scalar_lea.vmem %s2, %s179
      $region28: #{mutual_info_reg_forward.6} parent=15 // pred_fallthru
        _
    $region16: #{mutual_info_reg_forward.6} parent=5 // pred_fallthru
      _
    %p181 = scmp.le.s32.totalorder 1, %s9
    %p182 = scmp.lt.s32.totalorder %s9, 5
    %p183 = pnand %p181, %p182
    %p184 = pneg %p183
    // Predicated region
    $region29: #{mutual_info_reg_forward.6} parent=5 // pred_check
      _
    $region30: #{mutual_info_reg_forward.6} parent=5 // pred_check_branch
      %186 = sbr.rel (%p183) target = $region32
    $region31: #{mutual_info_reg_forward.6} parent=5 // pred_region
      %s187 = ssub.s32 %s9, 1
      %s188 = smul.u32 16, %s19
      %p189 = scmp.lt.s32.totalorder %s18, 1
      %s190 = scalar_select %p189, %s18, 1
      %p191 = scmp.lt.s32.totalorder %s188, 31
      %s192 = scalar_select %p191, %s188, 31
      %s193 = smul.addr %s190, 32
      %s194 = sadd.s32 %s192, %s193
      %s195 = scalar_lea.vmem %s0, %s194
      %p196 = pneg %p49
      %p197 = pneg %p46
      %s198 = smul.u32 256, %s19
      %p199 = scmp.lt.s32.totalorder %s18, 1
      %s200 = scalar_select %p199, %s18, 1
      %p201 = scmp.lt.s32.totalorder %s198, 511
      %s202 = scalar_select %p201, %s198, 511
      %s203 = smul.addr %s202, 2
      %s204 = smul.addr %s200, 1024
      %s205 = sadd.s32 %s203, %s204
      %s206 = smul.addr %s205, 4
      %s207 = scalar_lea.vmem %s1, %s206
      %p208 = pneg %p77
      %p209 = pneg %p74
      %p210 = scmp.lt.s32.totalorder %s18, 1
      %s211 = scalar_select %p210, %s18, 1
      %s212 = smul.addr %s211, 2
      %s213 = scalar_lea.vmem %s2, %s212
      %p214 = pneg %p103
      %p215 = pneg %p100
      %p216 = pneg %p129
      %p217 = pneg %p126
      %p218 = scmp.lt.s32.totalorder %s18, 1
      %s219 = scalar_select %p218, %s18, 1
      %s220 = smul.addr %s219, 2
      %s221 = smul.addr %s220, 2
      %s222 = scalar_lea.vmem %s3, %s221
      %s223 = smul.u32 16, %s19
      %p224 = scmp.lt.s32.totalorder %s18, 1
      %s225 = scalar_select %p224, %s18, 1
      %p226 = scmp.lt.s32.totalorder %s223, 31
      %s227 = scalar_select %p226, %s223, 31
      %s228 = smul.addr %s225, 32
      %s229 = sadd.s32 %s227, %s228
      %s230 = scalar_lea.vmem %s0, %s229
      %s231 = smul.u32 16, %s19
      %s232 = smul.u32 256, %s19
      %p233 = scmp.lt.s32.totalorder %s18, 1
      %s234 = scalar_select %p233, %s18, 1
      %p235 = scmp.lt.s32.totalorder %s232, 511
      %s236 = scalar_select %p235, %s232, 511
      %s237 = smul.addr %s236, 2
      %s238 = smul.addr %s234, 1024
      %s239 = sadd.s32 %s237, %s238
      %s240 = smul.addr %s239, 4
      %s241 = scalar_lea.vmem %s1, %s240
      %s242 = smul.u32 256, %s19
      %p243 = scmp.lt.s32.totalorder %s18, 1
      %s244 = scalar_select %p243, %s18, 1
      %s245 = smul.addr %s244, 2
      %s246 = scalar_lea.vmem %s2, %s245
      %p247 = scmp.lt.s32.totalorder %s18, 1
      %s248 = scalar_select %p247, %s18, 1
      %s249 = smul.addr %s248, 2
      %s250 = smul.addr %s249, 2
      %s251 = scalar_lea.vmem %s3, %s250
      %p252 = scmp.eq.s32.totalorder %s19, 0
      // Predicated region
      $region33: #{mutual_info_reg_forward.6} parent=31 // pred_check
        %p253 = pneg %p252
      $region34: #{mutual_info_reg_forward.6} parent=31 // pred_check_branch
        %255 = sbr.rel (%p253) target = $region36
      $region35: #{mutual_info_reg_forward.6} parent=31 // pred_region
        %256 = vst [vmem:[#allocation2] sm:$0xf] 0.0
      $region36: #{mutual_info_reg_forward.6} parent=31 // pred_fallthru
        _
      %v257 = vld [vmem:[#allocation2] sm:$0xf]
      %v258 = vld [vmem:[%s230] sm:$0xff]
      %v259 = vld [vmem:[%s230 + $0x8] sm:$0xff]
      %v260 = vld [vmem:[%s241] sm:$0xff]
      %v261 = vld [vmem:[%s241 + $0x8] sm:$0xff]
      %v262 = vld [vmem:[%s241 + $0x10] sm:$0xff]
      %v263 = vld [vmem:[%s241 + $0x18] sm:$0xff]
      %v264 = vld [vmem:[%s241 + $0x20] sm:$0xff]
      %v265 = vld [vmem:[%s241 + $0x28] sm:$0xff]
      %v266 = vld [vmem:[%s241 + $0x30] sm:$0xff]
      %v267 = vld [vmem:[%s241 + $0x38] sm:$0xff]
      %v268 = vld [vmem:[%s241 + $0x40] sm:$0xff]
      %v269 = vld [vmem:[%s241 + $0x48] sm:$0xff]
      %v270 = vld [vmem:[%s241 + $0x50] sm:$0xff]
      %v271 = vld [vmem:[%s241 + $0x58] sm:$0xff]
      %v272 = vld [vmem:[%s241 + $0x60] sm:$0xff]
      %v273 = vld [vmem:[%s241 + $0x68] sm:$0xff]
      %v274 = vld [vmem:[%s241 + $0x70] sm:$0xff]
      %v275 = vld [vmem:[%s241 + $0x78] sm:$0xff]
      %v276 = vld [vmem:[%s241 + $0x80] sm:$0xff]
      %v277 = vld [vmem:[%s241 + $0x88] sm:$0xff]
      %v278 = vld [vmem:[%s241 + $0x90] sm:$0xff]
      %v279 = vld [vmem:[%s241 + $0x98] sm:$0xff]
      %v280 = vld [vmem:[%s241 + $0xa0] sm:$0xff]
      %v281 = vld [vmem:[%s241 + $0xa8] sm:$0xff]
      %v282 = vld [vmem:[%s241 + $0xb0] sm:$0xff]
      %v283 = vld [vmem:[%s241 + $0xb8] sm:$0xff]
      %v284 = vld [vmem:[%s241 + $0xc0] sm:$0xff]
      %v285 = vld [vmem:[%s241 + $0xc8] sm:$0xff]
      %v286 = vld [vmem:[%s241 + $0xd0] sm:$0xff]
      %v287 = vld [vmem:[%s241 + $0xd8] sm:$0xff]
      %v288 = vld [vmem:[%s241 + $0xe0] sm:$0xff]
      %v289 = vld [vmem:[%s241 + $0xe8] sm:$0xff]
      %v290 = vld [vmem:[%s241 + $0xf0] sm:$0xff]
      %v291 = vld [vmem:[%s241 + $0xf8] sm:$0xff]
      %v292 = vld [vmem:[%s241 + $0x100] sm:$0xff]
      %v293 = vld [vmem:[%s241 + $0x108] sm:$0xff]
      %v294 = vld [vmem:[%s241 + $0x110] sm:$0xff]
      %v295 = vld [vmem:[%s241 + $0x118] sm:$0xff]
      %v296 = vld [vmem:[%s241 + $0x120] sm:$0xff]
      %v297 = vld [vmem:[%s241 + $0x128] sm:$0xff]
      %v298 = vld [vmem:[%s241 + $0x130] sm:$0xff]
      %v299 = vld [vmem:[%s241 + $0x138] sm:$0xff]
      %v300 = vld [vmem:[%s241 + $0x140] sm:$0xff]
      %v301 = vld [vmem:[%s241 + $0x148] sm:$0xff]
      %v302 = vld [vmem:[%s241 + $0x150] sm:$0xff]
      %v303 = vld [vmem:[%s241 + $0x158] sm:$0xff]
      %v304 = vld [vmem:[%s241 + $0x160] sm:$0xff]
      %v305 = vld [vmem:[%s241 + $0x168] sm:$0xff]
      %v306 = vld [vmem:[%s241 + $0x170] sm:$0xff]
      %v307 = vld [vmem:[%s241 + $0x178] sm:$0xff]
      %v308 = vld [vmem:[%s241 + $0x180] sm:$0xff]
      %v309 = vld [vmem:[%s241 + $0x188] sm:$0xff]
      %v310 = vld [vmem:[%s241 + $0x190] sm:$0xff]
      %v311 = vld [vmem:[%s241 + $0x198] sm:$0xff]
      %v312 = vld [vmem:[%s241 + $0x1a0] sm:$0xff]
      %v313 = vld [vmem:[%s241 + $0x1a8] sm:$0xff]
      %v314 = vld [vmem:[%s241 + $0x1b0] sm:$0xff]
      %v315 = vld [vmem:[%s241 + $0x1b8] sm:$0xff]
      %v316 = vld [vmem:[%s241 + $0x1c0] sm:$0xff]
      %v317 = vld [vmem:[%s241 + $0x1c8] sm:$0xff]
      %v318 = vld [vmem:[%s241 + $0x1d0] sm:$0xff]
      %v319 = vld [vmem:[%s241 + $0x1d8] sm:$0xff]
      %v320 = vld [vmem:[%s241 + $0x1e0] sm:$0xff]
      %v321 = vld [vmem:[%s241 + $0x1e8] sm:$0xff]
      %v322 = vld [vmem:[%s241 + $0x1f0] sm:$0xff]
      %v323 = vld [vmem:[%s241 + $0x1f8] sm:$0xff]
      %v324 = vld [vmem:[%s241 + $0x200] sm:$0xff]
      %v325 = vld [vmem:[%s241 + $0x208] sm:$0xff]
      %v326 = vld [vmem:[%s241 + $0x210] sm:$0xff]
      %v327 = vld [vmem:[%s241 + $0x218] sm:$0xff]
      %v328 = vld [vmem:[%s241 + $0x220] sm:$0xff]
      %v329 = vld [vmem:[%s241 + $0x228] sm:$0xff]
      %v330 = vld [vmem:[%s241 + $0x230] sm:$0xff]
      %v331 = vld [vmem:[%s241 + $0x238] sm:$0xff]
      %v332 = vld [vmem:[%s241 + $0x240] sm:$0xff]
      %v333 = vld [vmem:[%s241 + $0x248] sm:$0xff]
      %v334 = vld [vmem:[%s241 + $0x250] sm:$0xff]
      %v335 = vld [vmem:[%s241 + $0x258] sm:$0xff]
      %v336 = vld [vmem:[%s241 + $0x260] sm:$0xff]
      %v337 = vld [vmem:[%s241 + $0x268] sm:$0xff]
      %v338 = vld [vmem:[%s241 + $0x270] sm:$0xff]
      %v339 = vld [vmem:[%s241 + $0x278] sm:$0xff]
      %v340 = vld [vmem:[%s241 + $0x280] sm:$0xff]
      %v341 = vld [vmem:[%s241 + $0x288] sm:$0xff]
      %v342 = vld [vmem:[%s241 + $0x290] sm:$0xff]
      %v343 = vld [vmem:[%s241 + $0x298] sm:$0xff]
      %v344 = vld [vmem:[%s241 + $0x2a0] sm:$0xff]
      %v345 = vld [vmem:[%s241 + $0x2a8] sm:$0xff]
      %v346 = vld [vmem:[%s241 + $0x2b0] sm:$0xff]
      %v347 = vld [vmem:[%s241 + $0x2b8] sm:$0xff]
      %v348 = vld [vmem:[%s241 + $0x2c0] sm:$0xff]
      %v349 = vld [vmem:[%s241 + $0x2c8] sm:$0xff]
      %v350 = vld [vmem:[%s241 + $0x2d0] sm:$0xff]
      %v351 = vld [vmem:[%s241 + $0x2d8] sm:$0xff]
      %v352 = vld [vmem:[%s241 + $0x2e0] sm:$0xff]
      %v353 = vld [vmem:[%s241 + $0x2e8] sm:$0xff]
      %v354 = vld [vmem:[%s241 + $0x2f0] sm:$0xff]
      %v355 = vld [vmem:[%s241 + $0x2f8] sm:$0xff]
      %v356 = vld [vmem:[%s241 + $0x300] sm:$0xff]
      %v357 = vld [vmem:[%s241 + $0x308] sm:$0xff]
      %v358 = vld [vmem:[%s241 + $0x310] sm:$0xff]
      %v359 = vld [vmem:[%s241 + $0x318] sm:$0xff]
      %v360 = vld [vmem:[%s241 + $0x320] sm:$0xff]
      %v361 = vld [vmem:[%s241 + $0x328] sm:$0xff]
      %v362 = vld [vmem:[%s241 + $0x330] sm:$0xff]
      %v363 = vld [vmem:[%s241 + $0x338] sm:$0xff]
      %v364 = vld [vmem:[%s241 + $0x340] sm:$0xff]
      %v365 = vld [vmem:[%s241 + $0x348] sm:$0xff]
      %v366 = vld [vmem:[%s241 + $0x350] sm:$0xff]
      %v367 = vld [vmem:[%s241 + $0x358] sm:$0xff]
      %v368 = vld [vmem:[%s241 + $0x360] sm:$0xff]
      %v369 = vld [vmem:[%s241 + $0x368] sm:$0xff]
      %v370 = vld [vmem:[%s241 + $0x370] sm:$0xff]
      %v371 = vld [vmem:[%s241 + $0x378] sm:$0xff]
      %v372 = vld [vmem:[%s241 + $0x380] sm:$0xff]
      %v373 = vld [vmem:[%s241 + $0x388] sm:$0xff]
      %v374 = vld [vmem:[%s241 + $0x390] sm:$0xff]
      %v375 = vld [vmem:[%s241 + $0x398] sm:$0xff]
      %v376 = vld [vmem:[%s241 + $0x3a0] sm:$0xff]
      %v377 = vld [vmem:[%s241 + $0x3a8] sm:$0xff]
      %v378 = vld [vmem:[%s241 + $0x3b0] sm:$0xff]
      %v379 = vld [vmem:[%s241 + $0x3b8] sm:$0xff]
      %v380 = vld [vmem:[%s241 + $0x3c0] sm:$0xff]
      %v381 = vld [vmem:[%s241 + $0x3c8] sm:$0xff]
      %v382 = vld [vmem:[%s241 + $0x3d0] sm:$0xff]
      %v383 = vld [vmem:[%s241 + $0x3d8] sm:$0xff]
      %v384 = vld [vmem:[%s241 + $0x3e0] sm:$0xff]
      %v385 = vld [vmem:[%s241 + $0x3e8] sm:$0xff]
      %v386 = vld [vmem:[%s241 + $0x3f0] sm:$0xff]
      %v387 = vld [vmem:[%s241 + $0x3f8] sm:$0xff]
      %v388 = vld [vmem:[%s241 + $0x400] sm:$0xff]
      %v389 = vld [vmem:[%s241 + $0x408] sm:$0xff]
      %v390 = vld [vmem:[%s241 + $0x410] sm:$0xff]
      %v391 = vld [vmem:[%s241 + $0x418] sm:$0xff]
      %v392 = vld [vmem:[%s241 + $0x420] sm:$0xff]
      %v393 = vld [vmem:[%s241 + $0x428] sm:$0xff]
      %v394 = vld [vmem:[%s241 + $0x430] sm:$0xff]
      %v395 = vld [vmem:[%s241 + $0x438] sm:$0xff]
      %v396 = vld [vmem:[%s241 + $0x440] sm:$0xff]
      %v397 = vld [vmem:[%s241 + $0x448] sm:$0xff]
      %v398 = vld [vmem:[%s241 + $0x450] sm:$0xff]
      %v399 = vld [vmem:[%s241 + $0x458] sm:$0xff]
      %v400 = vld [vmem:[%s241 + $0x460] sm:$0xff]
      %v401 = vld [vmem:[%s241 + $0x468] sm:$0xff]
      %v402 = vld [vmem:[%s241 + $0x470] sm:$0xff]
      %v403 = vld [vmem:[%s241 + $0x478] sm:$0xff]
      %v404 = vld [vmem:[%s241 + $0x480] sm:$0xff]
      %v405 = vld [vmem:[%s241 + $0x488] sm:$0xff]
      %v406 = vld [vmem:[%s241 + $0x490] sm:$0xff]
      %v407 = vld [vmem:[%s241 + $0x498] sm:$0xff]
      %v408 = vld [vmem:[%s241 + $0x4a0] sm:$0xff]
      %v409 = vld [vmem:[%s241 + $0x4a8] sm:$0xff]
      %v410 = vld [vmem:[%s241 + $0x4b0] sm:$0xff]
      %v411 = vld [vmem:[%s241 + $0x4b8] sm:$0xff]
      %v412 = vld [vmem:[%s241 + $0x4c0] sm:$0xff]
      %v413 = vld [vmem:[%s241 + $0x4c8] sm:$0xff]
      %v414 = vld [vmem:[%s241 + $0x4d0] sm:$0xff]
      %v415 = vld [vmem:[%s241 + $0x4d8] sm:$0xff]
      %v416 = vld [vmem:[%s241 + $0x4e0] sm:$0xff]
      %v417 = vld [vmem:[%s241 + $0x4e8] sm:$0xff]
      %v418 = vld [vmem:[%s241 + $0x4f0] sm:$0xff]
      %v419 = vld [vmem:[%s241 + $0x4f8] sm:$0xff]
      %v420 = vld [vmem:[%s241 + $0x500] sm:$0xff]
      %v421 = vld [vmem:[%s241 + $0x508] sm:$0xff]
      %v422 = vld [vmem:[%s241 + $0x510] sm:$0xff]
      %v423 = vld [vmem:[%s241 + $0x518] sm:$0xff]
      %v424 = vld [vmem:[%s241 + $0x520] sm:$0xff]
      %v425 = vld [vmem:[%s241 + $0x528] sm:$0xff]
      %v426 = vld [vmem:[%s241 + $0x530] sm:$0xff]
      %v427 = vld [vmem:[%s241 + $0x538] sm:$0xff]
      %v428 = vld [vmem:[%s241 + $0x540] sm:$0xff]
      %v429 = vld [vmem:[%s241 + $0x548] sm:$0xff]
      %v430 = vld [vmem:[%s241 + $0x550] sm:$0xff]
      %v431 = vld [vmem:[%s241 + $0x558] sm:$0xff]
      %v432 = vld [vmem:[%s241 + $0x560] sm:$0xff]
      %v433 = vld [vmem:[%s241 + $0x568] sm:$0xff]
      %v434 = vld [vmem:[%s241 + $0x570] sm:$0xff]
      %v435 = vld [vmem:[%s241 + $0x578] sm:$0xff]
      %v436 = vld [vmem:[%s241 + $0x580] sm:$0xff]
      %v437 = vld [vmem:[%s241 + $0x588] sm:$0xff]
      %v438 = vld [vmem:[%s241 + $0x590] sm:$0xff]
      %v439 = vld [vmem:[%s241 + $0x598] sm:$0xff]
      %v440 = vld [vmem:[%s241 + $0x5a0] sm:$0xff]
      %v441 = vld [vmem:[%s241 + $0x5a8] sm:$0xff]
      %v442 = vld [vmem:[%s241 + $0x5b0] sm:$0xff]
      %v443 = vld [vmem:[%s241 + $0x5b8] sm:$0xff]
      %v444 = vld [vmem:[%s241 + $0x5c0] sm:$0xff]
      %v445 = vld [vmem:[%s241 + $0x5c8] sm:$0xff]
      %v446 = vld [vmem:[%s241 + $0x5d0] sm:$0xff]
      %v447 = vld [vmem:[%s241 + $0x5d8] sm:$0xff]
      %v448 = vld [vmem:[%s241 + $0x5e0] sm:$0xff]
      %v449 = vld [vmem:[%s241 + $0x5e8] sm:$0xff]
      %v450 = vld [vmem:[%s241 + $0x5f0] sm:$0xff]
      %v451 = vld [vmem:[%s241 + $0x5f8] sm:$0xff]
      %v452 = vld [vmem:[%s241 + $0x600] sm:$0xff]
      %v453 = vld [vmem:[%s241 + $0x608] sm:$0xff]
      %v454 = vld [vmem:[%s241 + $0x610] sm:$0xff]
      %v455 = vld [vmem:[%s241 + $0x618] sm:$0xff]
      %v456 = vld [vmem:[%s241 + $0x620] sm:$0xff]
      %v457 = vld [vmem:[%s241 + $0x628] sm:$0xff]
      %v458 = vld [vmem:[%s241 + $0x630] sm:$0xff]
      %v459 = vld [vmem:[%s241 + $0x638] sm:$0xff]
      %v460 = vld [vmem:[%s241 + $0x640] sm:$0xff]
      %v461 = vld [vmem:[%s241 + $0x648] sm:$0xff]
      %v462 = vld [vmem:[%s241 + $0x650] sm:$0xff]
      %v463 = vld [vmem:[%s241 + $0x658] sm:$0xff]
      %v464 = vld [vmem:[%s241 + $0x660] sm:$0xff]
      %v465 = vld [vmem:[%s241 + $0x668] sm:$0xff]
      %v466 = vld [vmem:[%s241 + $0x670] sm:$0xff]
      %v467 = vld [vmem:[%s241 + $0x678] sm:$0xff]
      %v468 = vld [vmem:[%s241 + $0x680] sm:$0xff]
      %v469 = vld [vmem:[%s241 + $0x688] sm:$0xff]
      %v470 = vld [vmem:[%s241 + $0x690] sm:$0xff]
      %v471 = vld [vmem:[%s241 + $0x698] sm:$0xff]
      %v472 = vld [vmem:[%s241 + $0x6a0] sm:$0xff]
      %v473 = vld [vmem:[%s241 + $0x6a8] sm:$0xff]
      %v474 = vld [vmem:[%s241 + $0x6b0] sm:$0xff]
      %v475 = vld [vmem:[%s241 + $0x6b8] sm:$0xff]
      %v476 = vld [vmem:[%s241 + $0x6c0] sm:$0xff]
      %v477 = vld [vmem:[%s241 + $0x6c8] sm:$0xff]
      %v478 = vld [vmem:[%s241 + $0x6d0] sm:$0xff]
      %v479 = vld [vmem:[%s241 + $0x6d8] sm:$0xff]
      %v480 = vld [vmem:[%s241 + $0x6e0] sm:$0xff]
      %v481 = vld [vmem:[%s241 + $0x6e8] sm:$0xff]
      %v482 = vld [vmem:[%s241 + $0x6f0] sm:$0xff]
      %v483 = vld [vmem:[%s241 + $0x6f8] sm:$0xff]
      %v484 = vld [vmem:[%s241 + $0x700] sm:$0xff]
      %v485 = vld [vmem:[%s241 + $0x708] sm:$0xff]
      %v486 = vld [vmem:[%s241 + $0x710] sm:$0xff]
      %v487 = vld [vmem:[%s241 + $0x718] sm:$0xff]
      %v488 = vld [vmem:[%s241 + $0x720] sm:$0xff]
      %v489 = vld [vmem:[%s241 + $0x728] sm:$0xff]
      %v490 = vld [vmem:[%s241 + $0x730] sm:$0xff]
      %v491 = vld [vmem:[%s241 + $0x738] sm:$0xff]
      %v492 = vld [vmem:[%s241 + $0x740] sm:$0xff]
      %v493 = vld [vmem:[%s241 + $0x748] sm:$0xff]
      %v494 = vld [vmem:[%s241 + $0x750] sm:$0xff]
      %v495 = vld [vmem:[%s241 + $0x758] sm:$0xff]
      %v496 = vld [vmem:[%s241 + $0x760] sm:$0xff]
      %v497 = vld [vmem:[%s241 + $0x768] sm:$0xff]
      %v498 = vld [vmem:[%s241 + $0x770] sm:$0xff]
      %v499 = vld [vmem:[%s241 + $0x778] sm:$0xff]
      %v500 = vld [vmem:[%s241 + $0x780] sm:$0xff]
      %v501 = vld [vmem:[%s241 + $0x788] sm:$0xff]
      %v502 = vld [vmem:[%s241 + $0x790] sm:$0xff]
      %v503 = vld [vmem:[%s241 + $0x798] sm:$0xff]
      %v504 = vld [vmem:[%s241 + $0x7a0] sm:$0xff]
      %v505 = vld [vmem:[%s241 + $0x7a8] sm:$0xff]
      %v506 = vld [vmem:[%s241 + $0x7b0] sm:$0xff]
      %v507 = vld [vmem:[%s241 + $0x7b8] sm:$0xff]
      %v508 = vld [vmem:[%s241 + $0x7c0] sm:$0xff]
      %v509 = vld [vmem:[%s241 + $0x7c8] sm:$0xff]
      %v510 = vld [vmem:[%s241 + $0x7d0] sm:$0xff]
      %v511 = vld [vmem:[%s241 + $0x7d8] sm:$0xff]
      %v512 = vld [vmem:[%s241 + $0x7e0] sm:$0xff]
      %v513 = vld [vmem:[%s241 + $0x7e8] sm:$0xff]
      %v514 = vld [vmem:[%s241 + $0x7f0] sm:$0xff]
      %v515 = vld [vmem:[%s241 + $0x7f8] sm:$0xff]
      %v518 = vcombine.high %v258, %v258
      %v520 = vunpack.c.l.s4 1966171168
      %v521 = vunpack.c.0.s8 %v520
      %v522 = vlaneseq
      %v523 = vshrl.u32 %v522, 7
      %v524 = vsub.s32 %v521, %v523
      %v525 = vrot.slane %v258, %v524
      %v527 = vunpack.c.l.s4 1966171168
      %v528 = vunpack.c.0.s8 %v527
      %v529 = vlaneseq
      %v530 = vshrl.u32 %v529, 7
      %v531 = vsub.s32 %v528, %v530
      %v532 = vrot.slane %v518, %v531
      %v533 = vcombine.high %v525, %v525
      %v534 = vcombine.high %v532, %v532
      %v536 = vunpack.c.l.s4 1966171168
      %v537 = vunpack.c.0.s8 %v536
      %v538 = vlaneseq
      %v539 = vshrl.u32 %v538, 7
      %v540 = vsub.s32 %v537, %v539
      %v541 = vrot.slane %v525, %v540
      %v543 = vunpack.c.l.s4 1966171168
      %v544 = vunpack.c.0.s8 %v543
      %v545 = vlaneseq
      %v546 = vshrl.u32 %v545, 7
      %v547 = vsub.s32 %v544, %v546
      %v548 = vrot.slane %v532, %v547
      %v550 = vunpack.c.l.s4 1966171168
      %v551 = vunpack.c.0.s8 %v550
      %v552 = vlaneseq
      %v553 = vshrl.u32 %v552, 7
      %v554 = vsub.s32 %v551, %v553
      %v555 = vrot.slane %v533, %v554
      %v557 = vunpack.c.l.s4 1966171168
      %v558 = vunpack.c.0.s8 %v557
      %v559 = vlaneseq
      %v560 = vshrl.u32 %v559, 7
      %v561 = vsub.s32 %v558, %v560
      %v562 = vrot.slane %v534, %v561
      %v563 = vcombine.high %v541, %v541
      %v564 = vcombine.high %v548, %v548
      %v565 = vcombine.high %v555, %v555
      %v566 = vcombine.high %v562, %v562
      %v567 = vcombine.high %v259, %v259
      %v569 = vunpack.c.l.s4 1966171168
      %v570 = vunpack.c.0.s8 %v569
      %v571 = vlaneseq
      %v572 = vshrl.u32 %v571, 7
      %v573 = vsub.s32 %v570, %v572
      %v574 = vrot.slane %v259, %v573
      %v576 = vunpack.c.l.s4 1966171168
      %v577 = vunpack.c.0.s8 %v576
      %v578 = vlaneseq
      %v579 = vshrl.u32 %v578, 7
      %v580 = vsub.s32 %v577, %v579
      %v581 = vrot.slane %v567, %v580
      %v582 = vcombine.high %v574, %v574
      %v583 = vcombine.high %v581, %v581
      %v585 = vunpack.c.l.s4 1966171168
      %v586 = vunpack.c.0.s8 %v585
      %v587 = vlaneseq
      %v588 = vshrl.u32 %v587, 7
      %v589 = vsub.s32 %v586, %v588
      %v590 = vrot.slane %v574, %v589
      %v592 = vunpack.c.l.s4 1966171168
      %v593 = vunpack.c.0.s8 %v592
      %v594 = vlaneseq
      %v595 = vshrl.u32 %v594, 7
      %v596 = vsub.s32 %v593, %v595
      %v597 = vrot.slane %v581, %v596
      %v599 = vunpack.c.l.s4 1966171168
      %v600 = vunpack.c.0.s8 %v599
      %v601 = vlaneseq
      %v602 = vshrl.u32 %v601, 7
      %v603 = vsub.s32 %v600, %v602
      %v604 = vrot.slane %v582, %v603
      %v606 = vunpack.c.l.s4 1966171168
      %v607 = vunpack.c.0.s8 %v606
      %v608 = vlaneseq
      %v609 = vshrl.u32 %v608, 7
      %v610 = vsub.s32 %v607, %v609
      %v611 = vrot.slane %v583, %v610
      %v612 = vcombine.high %v590, %v590
      %v613 = vcombine.high %v597, %v597
      %v614 = vcombine.high %v604, %v604
      %v615 = vcombine.high %v611, %v611
      %v888 = vunpack.c.l.b16 %v260
      %v889 = vunpack.c.h.b16 %v260
      %v890 = vunpack.c.l.b16 %v261
      %v891 = vunpack.c.h.b16 %v261
      %v892 = vunpack.c.l.b16 %v262
      %v893 = vunpack.c.h.b16 %v262
      %v894 = vunpack.c.l.b16 %v263
      %v895 = vunpack.c.h.b16 %v263
      %v896 = vunpack.c.l.b16 %v264
      %v897 = vunpack.c.h.b16 %v264
      %v898 = vunpack.c.l.b16 %v265
      %v899 = vunpack.c.h.b16 %v265
      %v900 = vunpack.c.l.b16 %v266
      %v901 = vunpack.c.h.b16 %v266
      %v902 = vunpack.c.l.b16 %v267
      %v903 = vunpack.c.h.b16 %v267
      %v904 = vunpack.c.l.b16 %v268
      %v905 = vunpack.c.h.b16 %v268
      %v906 = vunpack.c.l.b16 %v269
      %v907 = vunpack.c.h.b16 %v269
      %v908 = vunpack.c.l.b16 %v270
      %v909 = vunpack.c.h.b16 %v270
      %v910 = vunpack.c.l.b16 %v271
      %v911 = vunpack.c.h.b16 %v271
      %v912 = vunpack.c.l.b16 %v272
      %v913 = vunpack.c.h.b16 %v272
      %v914 = vunpack.c.l.b16 %v273
      %v915 = vunpack.c.h.b16 %v273
      %v916 = vunpack.c.l.b16 %v274
      %v917 = vunpack.c.h.b16 %v274
      %v918 = vunpack.c.l.b16 %v275
      %v919 = vunpack.c.h.b16 %v275
      %v920 = vunpack.c.l.b16 %v276
      %v921 = vunpack.c.h.b16 %v276
      %v922 = vunpack.c.l.b16 %v277
      %v923 = vunpack.c.h.b16 %v277
      %v924 = vunpack.c.l.b16 %v278
      %v925 = vunpack.c.h.b16 %v278
      %v926 = vunpack.c.l.b16 %v279
      %v927 = vunpack.c.h.b16 %v279
      %v928 = vunpack.c.l.b16 %v280
      %v929 = vunpack.c.h.b16 %v280
      %v930 = vunpack.c.l.b16 %v281
      %v931 = vunpack.c.h.b16 %v281
      %v932 = vunpack.c.l.b16 %v282
      %v933 = vunpack.c.h.b16 %v282
      %v934 = vunpack.c.l.b16 %v283
      %v935 = vunpack.c.h.b16 %v283
      %v936 = vunpack.c.l.b16 %v284
      %v937 = vunpack.c.h.b16 %v284
      %v938 = vunpack.c.l.b16 %v285
      %v939 = vunpack.c.h.b16 %v285
      %v940 = vunpack.c.l.b16 %v286
      %v941 = vunpack.c.h.b16 %v286
      %v942 = vunpack.c.l.b16 %v287
      %v943 = vunpack.c.h.b16 %v287
      %v944 = vunpack.c.l.b16 %v288
      %v945 = vunpack.c.h.b16 %v288
      %v946 = vunpack.c.l.b16 %v289
      %v947 = vunpack.c.h.b16 %v289
      %v948 = vunpack.c.l.b16 %v290
      %v949 = vunpack.c.h.b16 %v290
      %v950 = vunpack.c.l.b16 %v291
      %v951 = vunpack.c.h.b16 %v291
      %v952 = vunpack.c.l.b16 %v292
      %v953 = vunpack.c.h.b16 %v292
      %v954 = vunpack.c.l.b16 %v293
      %v955 = vunpack.c.h.b16 %v293
      %v956 = vunpack.c.l.b16 %v294
      %v957 = vunpack.c.h.b16 %v294
      %v958 = vunpack.c.l.b16 %v295
      %v959 = vunpack.c.h.b16 %v295
      %v960 = vunpack.c.l.b16 %v296
      %v961 = vunpack.c.h.b16 %v296
      %v962 = vunpack.c.l.b16 %v297
      %v963 = vunpack.c.h.b16 %v297
      %v964 = vunpack.c.l.b16 %v298
      %v965 = vunpack.c.h.b16 %v298
      %v966 = vunpack.c.l.b16 %v299
      %v967 = vunpack.c.h.b16 %v299
      %v968 = vunpack.c.l.b16 %v300
      %v969 = vunpack.c.h.b16 %v300
      %v970 = vunpack.c.l.b16 %v301
      %v971 = vunpack.c.h.b16 %v301
      %v972 = vunpack.c.l.b16 %v302
      %v973 = vunpack.c.h.b16 %v302
      %v974 = vunpack.c.l.b16 %v303
      %v975 = vunpack.c.h.b16 %v303
      %v976 = vunpack.c.l.b16 %v304
      %v977 = vunpack.c.h.b16 %v304
      %v978 = vunpack.c.l.b16 %v305
      %v979 = vunpack.c.h.b16 %v305
      %v980 = vunpack.c.l.b16 %v306
      %v981 = vunpack.c.h.b16 %v306
      %v982 = vunpack.c.l.b16 %v307
      %v983 = vunpack.c.h.b16 %v307
      %v984 = vunpack.c.l.b16 %v308
      %v985 = vunpack.c.h.b16 %v308
      %v986 = vunpack.c.l.b16 %v309
      %v987 = vunpack.c.h.b16 %v309
      %v988 = vunpack.c.l.b16 %v310
      %v989 = vunpack.c.h.b16 %v310
      %v990 = vunpack.c.l.b16 %v311
      %v991 = vunpack.c.h.b16 %v311
      %v992 = vunpack.c.l.b16 %v312
      %v993 = vunpack.c.h.b16 %v312
      %v994 = vunpack.c.l.b16 %v313
      %v995 = vunpack.c.h.b16 %v313
      %v996 = vunpack.c.l.b16 %v314
      %v997 = vunpack.c.h.b16 %v314
      %v998 = vunpack.c.l.b16 %v315
      %v999 = vunpack.c.h.b16 %v315
      %v1000 = vunpack.c.l.b16 %v316
      %v1001 = vunpack.c.h.b16 %v316
      %v1002 = vunpack.c.l.b16 %v317
      %v1003 = vunpack.c.h.b16 %v317
      %v1004 = vunpack.c.l.b16 %v318
      %v1005 = vunpack.c.h.b16 %v318
      %v1006 = vunpack.c.l.b16 %v319
      %v1007 = vunpack.c.h.b16 %v319
      %v1008 = vunpack.c.l.b16 %v320
      %v1009 = vunpack.c.h.b16 %v320
      %v1010 = vunpack.c.l.b16 %v321
      %v1011 = vunpack.c.h.b16 %v321
      %v1012 = vunpack.c.l.b16 %v322
      %v1013 = vunpack.c.h.b16 %v322
      %v1014 = vunpack.c.l.b16 %v323
      %v1015 = vunpack.c.h.b16 %v323
      %v1016 = vunpack.c.l.b16 %v324
      %v1017 = vunpack.c.h.b16 %v324
      %v1018 = vunpack.c.l.b16 %v325
      %v1019 = vunpack.c.h.b16 %v325
      %v1020 = vunpack.c.l.b16 %v326
      %v1021 = vunpack.c.h.b16 %v326
      %v1022 = vunpack.c.l.b16 %v327
      %v1023 = vunpack.c.h.b16 %v327
      %v1024 = vunpack.c.l.b16 %v328
      %v1025 = vunpack.c.h.b16 %v328
      %v1026 = vunpack.c.l.b16 %v329
      %v1027 = vunpack.c.h.b16 %v329
      %v1028 = vunpack.c.l.b16 %v330
      %v1029 = vunpack.c.h.b16 %v330
      %v1030 = vunpack.c.l.b16 %v331
      %v1031 = vunpack.c.h.b16 %v331
      %v1032 = vunpack.c.l.b16 %v332
      %v1033 = vunpack.c.h.b16 %v332
      %v1034 = vunpack.c.l.b16 %v333
      %v1035 = vunpack.c.h.b16 %v333
      %v1036 = vunpack.c.l.b16 %v334
      %v1037 = vunpack.c.h.b16 %v334
      %v1038 = vunpack.c.l.b16 %v335
      %v1039 = vunpack.c.h.b16 %v335
      %v1040 = vunpack.c.l.b16 %v336
      %v1041 = vunpack.c.h.b16 %v336
      %v1042 = vunpack.c.l.b16 %v337
      %v1043 = vunpack.c.h.b16 %v337
      %v1044 = vunpack.c.l.b16 %v338
      %v1045 = vunpack.c.h.b16 %v338
      %v1046 = vunpack.c.l.b16 %v339
      %v1047 = vunpack.c.h.b16 %v339
      %v1048 = vunpack.c.l.b16 %v340
      %v1049 = vunpack.c.h.b16 %v340
      %v1050 = vunpack.c.l.b16 %v341
      %v1051 = vunpack.c.h.b16 %v341
      %v1052 = vunpack.c.l.b16 %v342
      %v1053 = vunpack.c.h.b16 %v342
      %v1054 = vunpack.c.l.b16 %v343
      %v1055 = vunpack.c.h.b16 %v343
      %v1056 = vunpack.c.l.b16 %v344
      %v1057 = vunpack.c.h.b16 %v344
      %v1058 = vunpack.c.l.b16 %v345
      %v1059 = vunpack.c.h.b16 %v345
      %v1060 = vunpack.c.l.b16 %v346
      %v1061 = vunpack.c.h.b16 %v346
      %v1062 = vunpack.c.l.b16 %v347
      %v1063 = vunpack.c.h.b16 %v347
      %v1064 = vunpack.c.l.b16 %v348
      %v1065 = vunpack.c.h.b16 %v348
      %v1066 = vunpack.c.l.b16 %v349
      %v1067 = vunpack.c.h.b16 %v349
      %v1068 = vunpack.c.l.b16 %v350
      %v1069 = vunpack.c.h.b16 %v350
      %v1070 = vunpack.c.l.b16 %v351
      %v1071 = vunpack.c.h.b16 %v351
      %v1072 = vunpack.c.l.b16 %v352
      %v1073 = vunpack.c.h.b16 %v352
      %v1074 = vunpack.c.l.b16 %v353
      %v1075 = vunpack.c.h.b16 %v353
      %v1076 = vunpack.c.l.b16 %v354
      %v1077 = vunpack.c.h.b16 %v354
      %v1078 = vunpack.c.l.b16 %v355
      %v1079 = vunpack.c.h.b16 %v355
      %v1080 = vunpack.c.l.b16 %v356
      %v1081 = vunpack.c.h.b16 %v356
      %v1082 = vunpack.c.l.b16 %v357
      %v1083 = vunpack.c.h.b16 %v357
      %v1084 = vunpack.c.l.b16 %v358
      %v1085 = vunpack.c.h.b16 %v358
      %v1086 = vunpack.c.l.b16 %v359
      %v1087 = vunpack.c.h.b16 %v359
      %v1088 = vunpack.c.l.b16 %v360
      %v1089 = vunpack.c.h.b16 %v360
      %v1090 = vunpack.c.l.b16 %v361
      %v1091 = vunpack.c.h.b16 %v361
      %v1092 = vunpack.c.l.b16 %v362
      %v1093 = vunpack.c.h.b16 %v362
      %v1094 = vunpack.c.l.b16 %v363
      %v1095 = vunpack.c.h.b16 %v363
      %v1096 = vunpack.c.l.b16 %v364
      %v1097 = vunpack.c.h.b16 %v364
      %v1098 = vunpack.c.l.b16 %v365
      %v1099 = vunpack.c.h.b16 %v365
      %v1100 = vunpack.c.l.b16 %v366
      %v1101 = vunpack.c.h.b16 %v366
      %v1102 = vunpack.c.l.b16 %v367
      %v1103 = vunpack.c.h.b16 %v367
      %v1104 = vunpack.c.l.b16 %v368
      %v1105 = vunpack.c.h.b16 %v368
      %v1106 = vunpack.c.l.b16 %v369
      %v1107 = vunpack.c.h.b16 %v369
      %v1108 = vunpack.c.l.b16 %v370
      %v1109 = vunpack.c.h.b16 %v370
      %v1110 = vunpack.c.l.b16 %v371
      %v1111 = vunpack.c.h.b16 %v371
      %v1112 = vunpack.c.l.b16 %v372
      %v1113 = vunpack.c.h.b16 %v372
      %v1114 = vunpack.c.l.b16 %v373
      %v1115 = vunpack.c.h.b16 %v373
      %v1116 = vunpack.c.l.b16 %v374
      %v1117 = vunpack.c.h.b16 %v374
      %v1118 = vunpack.c.l.b16 %v375
      %v1119 = vunpack.c.h.b16 %v375
      %v1120 = vunpack.c.l.b16 %v376
      %v1121 = vunpack.c.h.b16 %v376
      %v1122 = vunpack.c.l.b16 %v377
      %v1123 = vunpack.c.h.b16 %v377
      %v1124 = vunpack.c.l.b16 %v378
      %v1125 = vunpack.c.h.b16 %v378
      %v1126 = vunpack.c.l.b16 %v379
      %v1127 = vunpack.c.h.b16 %v379
      %v1128 = vunpack.c.l.b16 %v380
      %v1129 = vunpack.c.h.b16 %v380
      %v1130 = vunpack.c.l.b16 %v381
      %v1131 = vunpack.c.h.b16 %v381
      %v1132 = vunpack.c.l.b16 %v382
      %v1133 = vunpack.c.h.b16 %v382
      %v1134 = vunpack.c.l.b16 %v383
      %v1135 = vunpack.c.h.b16 %v383
      %v1136 = vunpack.c.l.b16 %v384
      %v1137 = vunpack.c.h.b16 %v384
      %v1138 = vunpack.c.l.b16 %v385
      %v1139 = vunpack.c.h.b16 %v385
      %v1140 = vunpack.c.l.b16 %v386
      %v1141 = vunpack.c.h.b16 %v386
      %v1142 = vunpack.c.l.b16 %v387
      %v1143 = vunpack.c.h.b16 %v387
      %v1144 = vunpack.c.l.b16 %v388
      %v1145 = vunpack.c.h.b16 %v388
      %v1146 = vunpack.c.l.b16 %v389
      %v1147 = vunpack.c.h.b16 %v389
      %v1148 = vunpack.c.l.b16 %v390
      %v1149 = vunpack.c.h.b16 %v390
      %v1150 = vunpack.c.l.b16 %v391
      %v1151 = vunpack.c.h.b16 %v391
      %v1152 = vunpack.c.l.b16 %v392
      %v1153 = vunpack.c.h.b16 %v392
      %v1154 = vunpack.c.l.b16 %v393
      %v1155 = vunpack.c.h.b16 %v393
      %v1156 = vunpack.c.l.b16 %v394
      %v1157 = vunpack.c.h.b16 %v394
      %v1158 = vunpack.c.l.b16 %v395
      %v1159 = vunpack.c.h.b16 %v395
      %v1160 = vunpack.c.l.b16 %v396
      %v1161 = vunpack.c.h.b16 %v396
      %v1162 = vunpack.c.l.b16 %v397
      %v1163 = vunpack.c.h.b16 %v397
      %v1164 = vunpack.c.l.b16 %v398
      %v1165 = vunpack.c.h.b16 %v398
      %v1166 = vunpack.c.l.b16 %v399
      %v1167 = vunpack.c.h.b16 %v399
      %v1168 = vunpack.c.l.b16 %v400
      %v1169 = vunpack.c.h.b16 %v400
      %v1170 = vunpack.c.l.b16 %v401
      %v1171 = vunpack.c.h.b16 %v401
      %v1172 = vunpack.c.l.b16 %v402
      %v1173 = vunpack.c.h.b16 %v402
      %v1174 = vunpack.c.l.b16 %v403
      %v1175 = vunpack.c.h.b16 %v403
      %v1176 = vunpack.c.l.b16 %v404
      %v1177 = vunpack.c.h.b16 %v404
      %v1178 = vunpack.c.l.b16 %v405
      %v1179 = vunpack.c.h.b16 %v405
      %v1180 = vunpack.c.l.b16 %v406
      %v1181 = vunpack.c.h.b16 %v406
      %v1182 = vunpack.c.l.b16 %v407
      %v1183 = vunpack.c.h.b16 %v407
      %v1184 = vunpack.c.l.b16 %v408
      %v1185 = vunpack.c.h.b16 %v408
      %v1186 = vunpack.c.l.b16 %v409
      %v1187 = vunpack.c.h.b16 %v409
      %v1188 = vunpack.c.l.b16 %v410
      %v1189 = vunpack.c.h.b16 %v410
      %v1190 = vunpack.c.l.b16 %v411
      %v1191 = vunpack.c.h.b16 %v411
      %v1192 = vunpack.c.l.b16 %v412
      %v1193 = vunpack.c.h.b16 %v412
      %v1194 = vunpack.c.l.b16 %v413
      %v1195 = vunpack.c.h.b16 %v413
      %v1196 = vunpack.c.l.b16 %v414
      %v1197 = vunpack.c.h.b16 %v414
      %v1198 = vunpack.c.l.b16 %v415
      %v1199 = vunpack.c.h.b16 %v415
      %v1200 = vunpack.c.l.b16 %v416
      %v1201 = vunpack.c.h.b16 %v416
      %v1202 = vunpack.c.l.b16 %v417
      %v1203 = vunpack.c.h.b16 %v417
      %v1204 = vunpack.c.l.b16 %v418
      %v1205 = vunpack.c.h.b16 %v418
      %v1206 = vunpack.c.l.b16 %v419
      %v1207 = vunpack.c.h.b16 %v419
      %v1208 = vunpack.c.l.b16 %v420
      %v1209 = vunpack.c.h.b16 %v420
      %v1210 = vunpack.c.l.b16 %v421
      %v1211 = vunpack.c.h.b16 %v421
      %v1212 = vunpack.c.l.b16 %v422
      %v1213 = vunpack.c.h.b16 %v422
      %v1214 = vunpack.c.l.b16 %v423
      %v1215 = vunpack.c.h.b16 %v423
      %v1216 = vunpack.c.l.b16 %v424
      %v1217 = vunpack.c.h.b16 %v424
      %v1218 = vunpack.c.l.b16 %v425
      %v1219 = vunpack.c.h.b16 %v425
      %v1220 = vunpack.c.l.b16 %v426
      %v1221 = vunpack.c.h.b16 %v426
      %v1222 = vunpack.c.l.b16 %v427
      %v1223 = vunpack.c.h.b16 %v427
      %v1224 = vunpack.c.l.b16 %v428
      %v1225 = vunpack.c.h.b16 %v428
      %v1226 = vunpack.c.l.b16 %v429
      %v1227 = vunpack.c.h.b16 %v429
      %v1228 = vunpack.c.l.b16 %v430
      %v1229 = vunpack.c.h.b16 %v430
      %v1230 = vunpack.c.l.b16 %v431
      %v1231 = vunpack.c.h.b16 %v431
      %v1232 = vunpack.c.l.b16 %v432
      %v1233 = vunpack.c.h.b16 %v432
      %v1234 = vunpack.c.l.b16 %v433
      %v1235 = vunpack.c.h.b16 %v433
      %v1236 = vunpack.c.l.b16 %v434
      %v1237 = vunpack.c.h.b16 %v434
      %v1238 = vunpack.c.l.b16 %v435
      %v1239 = vunpack.c.h.b16 %v435
      %v1240 = vunpack.c.l.b16 %v436
      %v1241 = vunpack.c.h.b16 %v436
      %v1242 = vunpack.c.l.b16 %v437
      %v1243 = vunpack.c.h.b16 %v437
      %v1244 = vunpack.c.l.b16 %v438
      %v1245 = vunpack.c.h.b16 %v438
      %v1246 = vunpack.c.l.b16 %v439
      %v1247 = vunpack.c.h.b16 %v439
      %v1248 = vunpack.c.l.b16 %v440
      %v1249 = vunpack.c.h.b16 %v440
      %v1250 = vunpack.c.l.b16 %v441
      %v1251 = vunpack.c.h.b16 %v441
      %v1252 = vunpack.c.l.b16 %v442
      %v1253 = vunpack.c.h.b16 %v442
      %v1254 = vunpack.c.l.b16 %v443
      %v1255 = vunpack.c.h.b16 %v443
      %v1256 = vunpack.c.l.b16 %v444
      %v1257 = vunpack.c.h.b16 %v444
      %v1258 = vunpack.c.l.b16 %v445
      %v1259 = vunpack.c.h.b16 %v445
      %v1260 = vunpack.c.l.b16 %v446
      %v1261 = vunpack.c.h.b16 %v446
      %v1262 = vunpack.c.l.b16 %v447
      %v1263 = vunpack.c.h.b16 %v447
      %v1264 = vunpack.c.l.b16 %v448
      %v1265 = vunpack.c.h.b16 %v448
      %v1266 = vunpack.c.l.b16 %v449
      %v1267 = vunpack.c.h.b16 %v449
      %v1268 = vunpack.c.l.b16 %v450
      %v1269 = vunpack.c.h.b16 %v450
      %v1270 = vunpack.c.l.b16 %v451
      %v1271 = vunpack.c.h.b16 %v451
      %v1272 = vunpack.c.l.b16 %v452
      %v1273 = vunpack.c.h.b16 %v452
      %v1274 = vunpack.c.l.b16 %v453
      %v1275 = vunpack.c.h.b16 %v453
      %v1276 = vunpack.c.l.b16 %v454
      %v1277 = vunpack.c.h.b16 %v454
      %v1278 = vunpack.c.l.b16 %v455
      %v1279 = vunpack.c.h.b16 %v455
      %v1280 = vunpack.c.l.b16 %v456
      %v1281 = vunpack.c.h.b16 %v456
      %v1282 = vunpack.c.l.b16 %v457
      %v1283 = vunpack.c.h.b16 %v457
      %v1284 = vunpack.c.l.b16 %v458
      %v1285 = vunpack.c.h.b16 %v458
      %v1286 = vunpack.c.l.b16 %v459
      %v1287 = vunpack.c.h.b16 %v459
      %v1288 = vunpack.c.l.b16 %v460
      %v1289 = vunpack.c.h.b16 %v460
      %v1290 = vunpack.c.l.b16 %v461
      %v1291 = vunpack.c.h.b16 %v461
      %v1292 = vunpack.c.l.b16 %v462
      %v1293 = vunpack.c.h.b16 %v462
      %v1294 = vunpack.c.l.b16 %v463
      %v1295 = vunpack.c.h.b16 %v463
      %v1296 = vunpack.c.l.b16 %v464
      %v1297 = vunpack.c.h.b16 %v464
      %v1298 = vunpack.c.l.b16 %v465
      %v1299 = vunpack.c.h.b16 %v465
      %v1300 = vunpack.c.l.b16 %v466
      %v1301 = vunpack.c.h.b16 %v466
      %v1302 = vunpack.c.l.b16 %v467
      %v1303 = vunpack.c.h.b16 %v467
      %v1304 = vunpack.c.l.b16 %v468
      %v1305 = vunpack.c.h.b16 %v468
      %v1306 = vunpack.c.l.b16 %v469
      %v1307 = vunpack.c.h.b16 %v469
      %v1308 = vunpack.c.l.b16 %v470
      %v1309 = vunpack.c.h.b16 %v470
      %v1310 = vunpack.c.l.b16 %v471
      %v1311 = vunpack.c.h.b16 %v471
      %v1312 = vunpack.c.l.b16 %v472
      %v1313 = vunpack.c.h.b16 %v472
      %v1314 = vunpack.c.l.b16 %v473
      %v1315 = vunpack.c.h.b16 %v473
      %v1316 = vunpack.c.l.b16 %v474
      %v1317 = vunpack.c.h.b16 %v474
      %v1318 = vunpack.c.l.b16 %v475
      %v1319 = vunpack.c.h.b16 %v475
      %v1320 = vunpack.c.l.b16 %v476
      %v1321 = vunpack.c.h.b16 %v476
      %v1322 = vunpack.c.l.b16 %v477
      %v1323 = vunpack.c.h.b16 %v477
      %v1324 = vunpack.c.l.b16 %v478
      %v1325 = vunpack.c.h.b16 %v478
      %v1326 = vunpack.c.l.b16 %v479
      %v1327 = vunpack.c.h.b16 %v479
      %v1328 = vunpack.c.l.b16 %v480
      %v1329 = vunpack.c.h.b16 %v480
      %v1330 = vunpack.c.l.b16 %v481
      %v1331 = vunpack.c.h.b16 %v481
      %v1332 = vunpack.c.l.b16 %v482
      %v1333 = vunpack.c.h.b16 %v482
      %v1334 = vunpack.c.l.b16 %v483
      %v1335 = vunpack.c.h.b16 %v483
      %v1336 = vunpack.c.l.b16 %v484
      %v1337 = vunpack.c.h.b16 %v484
      %v1338 = vunpack.c.l.b16 %v485
      %v1339 = vunpack.c.h.b16 %v485
      %v1340 = vunpack.c.l.b16 %v486
      %v1341 = vunpack.c.h.b16 %v486
      %v1342 = vunpack.c.l.b16 %v487
      %v1343 = vunpack.c.h.b16 %v487
      %v1344 = vunpack.c.l.b16 %v488
      %v1345 = vunpack.c.h.b16 %v488
      %v1346 = vunpack.c.l.b16 %v489
      %v1347 = vunpack.c.h.b16 %v489
      %v1348 = vunpack.c.l.b16 %v490
      %v1349 = vunpack.c.h.b16 %v490
      %v1350 = vunpack.c.l.b16 %v491
      %v1351 = vunpack.c.h.b16 %v491
      %v1352 = vunpack.c.l.b16 %v492
      %v1353 = vunpack.c.h.b16 %v492
      %v1354 = vunpack.c.l.b16 %v493
      %v1355 = vunpack.c.h.b16 %v493
      %v1356 = vunpack.c.l.b16 %v494
      %v1357 = vunpack.c.h.b16 %v494
      %v1358 = vunpack.c.l.b16 %v495
      %v1359 = vunpack.c.h.b16 %v495
      %v1360 = vunpack.c.l.b16 %v496
      %v1361 = vunpack.c.h.b16 %v496
      %v1362 = vunpack.c.l.b16 %v497
      %v1363 = vunpack.c.h.b16 %v497
      %v1364 = vunpack.c.l.b16 %v498
      %v1365 = vunpack.c.h.b16 %v498
      %v1366 = vunpack.c.l.b16 %v499
      %v1367 = vunpack.c.h.b16 %v499
      %v1368 = vunpack.c.l.b16 %v500
      %v1369 = vunpack.c.h.b16 %v500
      %v1370 = vunpack.c.l.b16 %v501
      %v1371 = vunpack.c.h.b16 %v501
      %v1372 = vunpack.c.l.b16 %v502
      %v1373 = vunpack.c.h.b16 %v502
      %v1374 = vunpack.c.l.b16 %v503
      %v1375 = vunpack.c.h.b16 %v503
      %v1376 = vunpack.c.l.b16 %v504
      %v1377 = vunpack.c.h.b16 %v504
      %v1378 = vunpack.c.l.b16 %v505
      %v1379 = vunpack.c.h.b16 %v505
      %v1380 = vunpack.c.l.b16 %v506
      %v1381 = vunpack.c.h.b16 %v506
      %v1382 = vunpack.c.l.b16 %v507
      %v1383 = vunpack.c.h.b16 %v507
      %v1384 = vunpack.c.l.b16 %v508
      %v1385 = vunpack.c.h.b16 %v508
      %v1386 = vunpack.c.l.b16 %v509
      %v1387 = vunpack.c.h.b16 %v509
      %v1388 = vunpack.c.l.b16 %v510
      %v1389 = vunpack.c.h.b16 %v510
      %v1390 = vunpack.c.l.b16 %v511
      %v1391 = vunpack.c.h.b16 %v511
      %v1392 = vunpack.c.l.b16 %v512
      %v1393 = vunpack.c.h.b16 %v512
      %v1394 = vunpack.c.l.b16 %v513
      %v1395 = vunpack.c.h.b16 %v513
      %v1396 = vunpack.c.l.b16 %v514
      %v1397 = vunpack.c.h.b16 %v514
      %v1398 = vunpack.c.l.b16 %v515
      %v1399 = vunpack.c.h.b16 %v515
      %v1400 = vpack.c.b16 %v890, %v888
      %v1401 = vpack.c.b16 %v891, %v889
      %v1402 = vpack.c.b16 %v894, %v892
      %v1403 = vpack.c.b16 %v895, %v893
      %v1404 = vpack.c.b16 %v898, %v896
      %v1405 = vpack.c.b16 %v899, %v897
      %v1406 = vpack.c.b16 %v902, %v900
      %v1407 = vpack.c.b16 %v903, %v901
      %v1408 = vpack.c.b16 %v906, %v904
      %v1409 = vpack.c.b16 %v907, %v905
      %v1410 = vpack.c.b16 %v910, %v908
      %v1411 = vpack.c.b16 %v911, %v909
      %v1412 = vpack.c.b16 %v914, %v912
      %v1413 = vpack.c.b16 %v915, %v913
      %v1414 = vpack.c.b16 %v918, %v916
      %v1415 = vpack.c.b16 %v919, %v917
      %v1416 = vpack.c.b16 %v922, %v920
      %v1417 = vpack.c.b16 %v923, %v921
      %v1418 = vpack.c.b16 %v926, %v924
      %v1419 = vpack.c.b16 %v927, %v925
      %v1420 = vpack.c.b16 %v930, %v928
      %v1421 = vpack.c.b16 %v931, %v929
      %v1422 = vpack.c.b16 %v934, %v932
      %v1423 = vpack.c.b16 %v935, %v933
      %v1424 = vpack.c.b16 %v938, %v936
      %v1425 = vpack.c.b16 %v939, %v937
      %v1426 = vpack.c.b16 %v942, %v940
      %v1427 = vpack.c.b16 %v943, %v941
      %v1428 = vpack.c.b16 %v946, %v944
      %v1429 = vpack.c.b16 %v947, %v945
      %v1430 = vpack.c.b16 %v950, %v948
      %v1431 = vpack.c.b16 %v951, %v949
      %v1432 = vpack.c.b16 %v954, %v952
      %v1433 = vpack.c.b16 %v955, %v953
      %v1434 = vpack.c.b16 %v958, %v956
      %v1435 = vpack.c.b16 %v959, %v957
      %v1436 = vpack.c.b16 %v962, %v960
      %v1437 = vpack.c.b16 %v963, %v961
      %v1438 = vpack.c.b16 %v966, %v964
      %v1439 = vpack.c.b16 %v967, %v965
      %v1440 = vpack.c.b16 %v970, %v968
      %v1441 = vpack.c.b16 %v971, %v969
      %v1442 = vpack.c.b16 %v974, %v972
      %v1443 = vpack.c.b16 %v975, %v973
      %v1444 = vpack.c.b16 %v978, %v976
      %v1445 = vpack.c.b16 %v979, %v977
      %v1446 = vpack.c.b16 %v982, %v980
      %v1447 = vpack.c.b16 %v983, %v981
      %v1448 = vpack.c.b16 %v986, %v984
      %v1449 = vpack.c.b16 %v987, %v985
      %v1450 = vpack.c.b16 %v990, %v988
      %v1451 = vpack.c.b16 %v991, %v989
      %v1452 = vpack.c.b16 %v994, %v992
      %v1453 = vpack.c.b16 %v995, %v993
      %v1454 = vpack.c.b16 %v998, %v996
      %v1455 = vpack.c.b16 %v999, %v997
      %v1456 = vpack.c.b16 %v1002, %v1000
      %v1457 = vpack.c.b16 %v1003, %v1001
      %v1458 = vpack.c.b16 %v1006, %v1004
      %v1459 = vpack.c.b16 %v1007, %v1005
      %v1460 = vpack.c.b16 %v1010, %v1008
      %v1461 = vpack.c.b16 %v1011, %v1009
      %v1462 = vpack.c.b16 %v1014, %v1012
      %v1463 = vpack.c.b16 %v1015, %v1013
      %v1464 = vpack.c.b16 %v1018, %v1016
      %v1465 = vpack.c.b16 %v1019, %v1017
      %v1466 = vpack.c.b16 %v1022, %v1020
      %v1467 = vpack.c.b16 %v1023, %v1021
      %v1468 = vpack.c.b16 %v1026, %v1024
      %v1469 = vpack.c.b16 %v1027, %v1025
      %v1470 = vpack.c.b16 %v1030, %v1028
      %v1471 = vpack.c.b16 %v1031, %v1029
      %v1472 = vpack.c.b16 %v1034, %v1032
      %v1473 = vpack.c.b16 %v1035, %v1033
      %v1474 = vpack.c.b16 %v1038, %v1036
      %v1475 = vpack.c.b16 %v1039, %v1037
      %v1476 = vpack.c.b16 %v1042, %v1040
      %v1477 = vpack.c.b16 %v1043, %v1041
      %v1478 = vpack.c.b16 %v1046, %v1044
      %v1479 = vpack.c.b16 %v1047, %v1045
      %v1480 = vpack.c.b16 %v1050, %v1048
      %v1481 = vpack.c.b16 %v1051, %v1049
      %v1482 = vpack.c.b16 %v1054, %v1052
      %v1483 = vpack.c.b16 %v1055, %v1053
      %v1484 = vpack.c.b16 %v1058, %v1056
      %v1485 = vpack.c.b16 %v1059, %v1057
      %v1486 = vpack.c.b16 %v1062, %v1060
      %v1487 = vpack.c.b16 %v1063, %v1061
      %v1488 = vpack.c.b16 %v1066, %v1064
      %v1489 = vpack.c.b16 %v1067, %v1065
      %v1490 = vpack.c.b16 %v1070, %v1068
      %v1491 = vpack.c.b16 %v1071, %v1069
      %v1492 = vpack.c.b16 %v1074, %v1072
      %v1493 = vpack.c.b16 %v1075, %v1073
      %v1494 = vpack.c.b16 %v1078, %v1076
      %v1495 = vpack.c.b16 %v1079, %v1077
      %v1496 = vpack.c.b16 %v1082, %v1080
      %v1497 = vpack.c.b16 %v1083, %v1081
      %v1498 = vpack.c.b16 %v1086, %v1084
      %v1499 = vpack.c.b16 %v1087, %v1085
      %v1500 = vpack.c.b16 %v1090, %v1088
      %v1501 = vpack.c.b16 %v1091, %v1089
      %v1502 = vpack.c.b16 %v1094, %v1092
      %v1503 = vpack.c.b16 %v1095, %v1093
      %v1504 = vpack.c.b16 %v1098, %v1096
      %v1505 = vpack.c.b16 %v1099, %v1097
      %v1506 = vpack.c.b16 %v1102, %v1100
      %v1507 = vpack.c.b16 %v1103, %v1101
      %v1508 = vpack.c.b16 %v1106, %v1104
      %v1509 = vpack.c.b16 %v1107, %v1105
      %v1510 = vpack.c.b16 %v1110, %v1108
      %v1511 = vpack.c.b16 %v1111, %v1109
      %v1512 = vpack.c.b16 %v1114, %v1112
      %v1513 = vpack.c.b16 %v1115, %v1113
      %v1514 = vpack.c.b16 %v1118, %v1116
      %v1515 = vpack.c.b16 %v1119, %v1117
      %v1516 = vpack.c.b16 %v1122, %v1120
      %v1517 = vpack.c.b16 %v1123, %v1121
      %v1518 = vpack.c.b16 %v1126, %v1124
      %v1519 = vpack.c.b16 %v1127, %v1125
      %v1520 = vpack.c.b16 %v1130, %v1128
      %v1521 = vpack.c.b16 %v1131, %v1129
      %v1522 = vpack.c.b16 %v1134, %v1132
      %v1523 = vpack.c.b16 %v1135, %v1133
      %v1524 = vpack.c.b16 %v1138, %v1136
      %v1525 = vpack.c.b16 %v1139, %v1137
      %v1526 = vpack.c.b16 %v1142, %v1140
      %v1527 = vpack.c.b16 %v1143, %v1141
      %v1528 = vpack.c.b16 %v1146, %v1144
      %v1529 = vpack.c.b16 %v1147, %v1145
      %v1530 = vpack.c.b16 %v1150, %v1148
      %v1531 = vpack.c.b16 %v1151, %v1149
      %v1532 = vpack.c.b16 %v1154, %v1152
      %v1533 = vpack.c.b16 %v1155, %v1153
      %v1534 = vpack.c.b16 %v1158, %v1156
      %v1535 = vpack.c.b16 %v1159, %v1157
      %v1536 = vpack.c.b16 %v1162, %v1160
      %v1537 = vpack.c.b16 %v1163, %v1161
      %v1538 = vpack.c.b16 %v1166, %v1164
      %v1539 = vpack.c.b16 %v1167, %v1165
      %v1540 = vpack.c.b16 %v1170, %v1168
      %v1541 = vpack.c.b16 %v1171, %v1169
      %v1542 = vpack.c.b16 %v1174, %v1172
      %v1543 = vpack.c.b16 %v1175, %v1173
      %v1544 = vpack.c.b16 %v1178, %v1176
      %v1545 = vpack.c.b16 %v1179, %v1177
      %v1546 = vpack.c.b16 %v1182, %v1180
      %v1547 = vpack.c.b16 %v1183, %v1181
      %v1548 = vpack.c.b16 %v1186, %v1184
      %v1549 = vpack.c.b16 %v1187, %v1185
      %v1550 = vpack.c.b16 %v1190, %v1188
      %v1551 = vpack.c.b16 %v1191, %v1189
      %v1552 = vpack.c.b16 %v1194, %v1192
      %v1553 = vpack.c.b16 %v1195, %v1193
      %v1554 = vpack.c.b16 %v1198, %v1196
      %v1555 = vpack.c.b16 %v1199, %v1197
      %v1556 = vpack.c.b16 %v1202, %v1200
      %v1557 = vpack.c.b16 %v1203, %v1201
      %v1558 = vpack.c.b16 %v1206, %v1204
      %v1559 = vpack.c.b16 %v1207, %v1205
      %v1560 = vpack.c.b16 %v1210, %v1208
      %v1561 = vpack.c.b16 %v1211, %v1209
      %v1562 = vpack.c.b16 %v1214, %v1212
      %v1563 = vpack.c.b16 %v1215, %v1213
      %v1564 = vpack.c.b16 %v1218, %v1216
      %v1565 = vpack.c.b16 %v1219, %v1217
      %v1566 = vpack.c.b16 %v1222, %v1220
      %v1567 = vpack.c.b16 %v1223, %v1221
      %v1568 = vpack.c.b16 %v1226, %v1224
      %v1569 = vpack.c.b16 %v1227, %v1225
      %v1570 = vpack.c.b16 %v1230, %v1228
      %v1571 = vpack.c.b16 %v1231, %v1229
      %v1572 = vpack.c.b16 %v1234, %v1232
      %v1573 = vpack.c.b16 %v1235, %v1233
      %v1574 = vpack.c.b16 %v1238, %v1236
      %v1575 = vpack.c.b16 %v1239, %v1237
      %v1576 = vpack.c.b16 %v1242, %v1240
      %v1577 = vpack.c.b16 %v1243, %v1241
      %v1578 = vpack.c.b16 %v1246, %v1244
      %v1579 = vpack.c.b16 %v1247, %v1245
      %v1580 = vpack.c.b16 %v1250, %v1248
      %v1581 = vpack.c.b16 %v1251, %v1249
      %v1582 = vpack.c.b16 %v1254, %v1252
      %v1583 = vpack.c.b16 %v1255, %v1253
      %v1584 = vpack.c.b16 %v1258, %v1256
      %v1585 = vpack.c.b16 %v1259, %v1257
      %v1586 = vpack.c.b16 %v1262, %v1260
      %v1587 = vpack.c.b16 %v1263, %v1261
      %v1588 = vpack.c.b16 %v1266, %v1264
      %v1589 = vpack.c.b16 %v1267, %v1265
      %v1590 = vpack.c.b16 %v1270, %v1268
      %v1591 = vpack.c.b16 %v1271, %v1269
      %v1592 = vpack.c.b16 %v1274, %v1272
      %v1593 = vpack.c.b16 %v1275, %v1273
      %v1594 = vpack.c.b16 %v1278, %v1276
      %v1595 = vpack.c.b16 %v1279, %v1277
      %v1596 = vpack.c.b16 %v1282, %v1280
      %v1597 = vpack.c.b16 %v1283, %v1281
      %v1598 = vpack.c.b16 %v1286, %v1284
      %v1599 = vpack.c.b16 %v1287, %v1285
      %v1600 = vpack.c.b16 %v1290, %v1288
      %v1601 = vpack.c.b16 %v1291, %v1289
      %v1602 = vpack.c.b16 %v1294, %v1292
      %v1603 = vpack.c.b16 %v1295, %v1293
      %v1604 = vpack.c.b16 %v1298, %v1296
      %v1605 = vpack.c.b16 %v1299, %v1297
      %v1606 = vpack.c.b16 %v1302, %v1300
      %v1607 = vpack.c.b16 %v1303, %v1301
      %v1608 = vpack.c.b16 %v1306, %v1304
      %v1609 = vpack.c.b16 %v1307, %v1305
      %v1610 = vpack.c.b16 %v1310, %v1308
      %v1611 = vpack.c.b16 %v1311, %v1309
      %v1612 = vpack.c.b16 %v1314, %v1312
      %v1613 = vpack.c.b16 %v1315, %v1313
      %v1614 = vpack.c.b16 %v1318, %v1316
      %v1615 = vpack.c.b16 %v1319, %v1317
      %v1616 = vpack.c.b16 %v1322, %v1320
      %v1617 = vpack.c.b16 %v1323, %v1321
      %v1618 = vpack.c.b16 %v1326, %v1324
      %v1619 = vpack.c.b16 %v1327, %v1325
      %v1620 = vpack.c.b16 %v1330, %v1328
      %v1621 = vpack.c.b16 %v1331, %v1329
      %v1622 = vpack.c.b16 %v1334, %v1332
      %v1623 = vpack.c.b16 %v1335, %v1333
      %v1624 = vpack.c.b16 %v1338, %v1336
      %v1625 = vpack.c.b16 %v1339, %v1337
      %v1626 = vpack.c.b16 %v1342, %v1340
      %v1627 = vpack.c.b16 %v1343, %v1341
      %v1628 = vpack.c.b16 %v1346, %v1344
      %v1629 = vpack.c.b16 %v1347, %v1345
      %v1630 = vpack.c.b16 %v1350, %v1348
      %v1631 = vpack.c.b16 %v1351, %v1349
      %v1632 = vpack.c.b16 %v1354, %v1352
      %v1633 = vpack.c.b16 %v1355, %v1353
      %v1634 = vpack.c.b16 %v1358, %v1356
      %v1635 = vpack.c.b16 %v1359, %v1357
      %v1636 = vpack.c.b16 %v1362, %v1360
      %v1637 = vpack.c.b16 %v1363, %v1361
      %v1638 = vpack.c.b16 %v1366, %v1364
      %v1639 = vpack.c.b16 %v1367, %v1365
      %v1640 = vpack.c.b16 %v1370, %v1368
      %v1641 = vpack.c.b16 %v1371, %v1369
      %v1642 = vpack.c.b16 %v1374, %v1372
      %v1643 = vpack.c.b16 %v1375, %v1373
      %v1644 = vpack.c.b16 %v1378, %v1376
      %v1645 = vpack.c.b16 %v1379, %v1377
      %v1646 = vpack.c.b16 %v1382, %v1380
      %v1647 = vpack.c.b16 %v1383, %v1381
      %v1648 = vpack.c.b16 %v1386, %v1384
      %v1649 = vpack.c.b16 %v1387, %v1385
      %v1650 = vpack.c.b16 %v1390, %v1388
      %v1651 = vpack.c.b16 %v1391, %v1389
      %v1652 = vpack.c.b16 %v1394, %v1392
      %v1653 = vpack.c.b16 %v1395, %v1393
      %v1654 = vpack.c.b16 %v1398, %v1396
      %v1655 = vpack.c.b16 %v1399, %v1397
      %1912 = vmatprep.subr.bf16.mxu0 %v1415
      %1913 = vmatpush1.bf16.msra.mxu0 %v1414
      %1914 = vmatprep.subr.bf16.mxu0 %v1413
      %1915 = vmatpush1.bf16.msra.mxu0 %v1412
      %1916 = vmatprep.subr.bf16.mxu0 %v1411
      %1917 = vmatpush1.bf16.msra.mxu0 %v1410
      %1918 = vmatprep.subr.bf16.mxu0 %v1409
      %1919 = vmatpush1.bf16.msra.mxu0 %v1408
      %1920 = vmatprep.subr.bf16.mxu0 %v1407
      %1921 = vmatpush1.bf16.msra.mxu0 %v1406
      %1922 = vmatprep.subr.bf16.mxu0 %v1405
      %1923 = vmatpush1.bf16.msra.mxu0 %v1404
      %1924 = vmatprep.subr.bf16.mxu0 %v1403
      %1925 = vmatpush1.bf16.msra.mxu0 %v1402
      %1926 = vmatprep.subr.bf16.mxu0 %v1401
      %1927 = vmatpush1.bf16.msra.mxu0 %v1400
      %1928 = vmatprep.subr.bf16.mxu0 %v1431
      %1929 = vmatpush2.bf16.msra.mxu0 %v1430
      %1930 = vmatprep.subr.bf16.mxu0 %v1429
      %1931 = vmatpush2.bf16.msra.mxu0 %v1428
      %1932 = vmatprep.subr.bf16.mxu0 %v1427
      %1933 = vmatpush2.bf16.msra.mxu0 %v1426
      %1934 = vmatprep.subr.bf16.mxu0 %v1425
      %1935 = vmatpush2.bf16.msra.mxu0 %v1424
      %1936 = vmatprep.subr.bf16.mxu0 %v1423
      %1937 = vmatpush2.bf16.msra.mxu0 %v1422
      %1938 = vmatprep.subr.bf16.mxu0 %v1421
      %1939 = vmatpush2.bf16.msra.mxu0 %v1420
      %1940 = vmatprep.subr.bf16.mxu0 %v1419
      %1941 = vmatpush2.bf16.msra.mxu0 %v1418
      %1942 = vmatprep.subr.bf16.mxu0 %v1417
      %1943 = vmatpush2.bf16.msra.mxu0 %v1416
      %1944 = vmatprep.mubr.bf16.mxu0 %v555
      %1945 = vmatmul.mubr.bf16.gmra.mxu0 %v541
      %v1946 = vpop.f32.mrf.mxu0
      %v1947 = vadd.f32 0.0, %v1946
      %v1948 = vpop.f32.mrf.mxu0
      %v1949 = vadd.f32 0.0, %v1948
      %v1950 = vpop.f32.mrf.mxu0
      %v1951 = vpop.f32.mrf.mxu0
      %1952 = vdwg.mxu0
      %1953 = vmatprep.subr.bf16.mxu0 %v1447
      %1954 = vmatpush1.bf16.msra.mxu0 %v1446
      %1955 = vmatprep.subr.bf16.mxu0 %v1445
      %1956 = vmatpush1.bf16.msra.mxu0 %v1444
      %1957 = vmatprep.subr.bf16.mxu0 %v1443
      %1958 = vmatpush1.bf16.msra.mxu0 %v1442
      %1959 = vmatprep.subr.bf16.mxu0 %v1441
      %1960 = vmatpush1.bf16.msra.mxu0 %v1440
      %1961 = vmatprep.subr.bf16.mxu0 %v1439
      %1962 = vmatpush1.bf16.msra.mxu0 %v1438
      %1963 = vmatprep.subr.bf16.mxu0 %v1437
      %1964 = vmatpush1.bf16.msra.mxu0 %v1436
      %1965 = vmatprep.subr.bf16.mxu0 %v1435
      %1966 = vmatpush1.bf16.msra.mxu0 %v1434
      %1967 = vmatprep.subr.bf16.mxu0 %v1433
      %1968 = vmatpush1.bf16.msra.mxu0 %v1432
      %1969 = vmatprep.subr.bf16.mxu0 %v1463
      %1970 = vmatpush2.bf16.msra.mxu0 %v1462
      %1971 = vmatprep.subr.bf16.mxu0 %v1461
      %1972 = vmatpush2.bf16.msra.mxu0 %v1460
      %1973 = vmatprep.subr.bf16.mxu0 %v1459
      %1974 = vmatpush2.bf16.msra.mxu0 %v1458
      %1975 = vmatprep.subr.bf16.mxu0 %v1457
      %1976 = vmatpush2.bf16.msra.mxu0 %v1456
      %1977 = vmatprep.subr.bf16.mxu0 %v1455
      %1978 = vmatpush2.bf16.msra.mxu0 %v1454
      %1979 = vmatprep.subr.bf16.mxu0 %v1453
      %1980 = vmatpush2.bf16.msra.mxu0 %v1452
      %1981 = vmatprep.subr.bf16.mxu0 %v1451
      %1982 = vmatpush2.bf16.msra.mxu0 %v1450
      %1983 = vmatprep.subr.bf16.mxu0 %v1449
      %1984 = vmatpush2.bf16.msra.mxu0 %v1448
      %1985 = vmatprep.mubr.bf16.mxu0 %v565
      %1986 = vmatmul.mubr.bf16.gmra.mxu0 %v563
      %v1987 = vpop.f32.mrf.mxu0
      %v1988 = vadd.f32 %v1947, %v1987
      %v1989 = vpop.f32.mrf.mxu0
      %v1990 = vadd.f32 %v1949, %v1989
      %v1991 = vpop.f32.mrf.mxu0
      %v1992 = vpop.f32.mrf.mxu0
      %1993 = vdwg.mxu0
      %1994 = vmatprep.subr.bf16.mxu0 %v1479
      %1995 = vmatpush1.bf16.msra.mxu0 %v1478
      %1996 = vmatprep.subr.bf16.mxu0 %v1477
      %1997 = vmatpush1.bf16.msra.mxu0 %v1476
      %1998 = vmatprep.subr.bf16.mxu0 %v1475
      %1999 = vmatpush1.bf16.msra.mxu0 %v1474
      %2000 = vmatprep.subr.bf16.mxu0 %v1473
      %2001 = vmatpush1.bf16.msra.mxu0 %v1472
      %2002 = vmatprep.subr.bf16.mxu0 %v1471
      %2003 = vmatpush1.bf16.msra.mxu0 %v1470
      %2004 = vmatprep.subr.bf16.mxu0 %v1469
      %2005 = vmatpush1.bf16.msra.mxu0 %v1468
      %2006 = vmatprep.subr.bf16.mxu0 %v1467
      %2007 = vmatpush1.bf16.msra.mxu0 %v1466
      %2008 = vmatprep.subr.bf16.mxu0 %v1465
      %2009 = vmatpush1.bf16.msra.mxu0 %v1464
      %2010 = vmatprep.subr.bf16.mxu0 %v1495
      %2011 = vmatpush2.bf16.msra.mxu0 %v1494
      %2012 = vmatprep.subr.bf16.mxu0 %v1493
      %2013 = vmatpush2.bf16.msra.mxu0 %v1492
      %2014 = vmatprep.subr.bf16.mxu0 %v1491
      %2015 = vmatpush2.bf16.msra.mxu0 %v1490
      %2016 = vmatprep.subr.bf16.mxu0 %v1489
      %2017 = vmatpush2.bf16.msra.mxu0 %v1488
      %2018 = vmatprep.subr.bf16.mxu0 %v1487
      %2019 = vmatpush2.bf16.msra.mxu0 %v1486
      %2020 = vmatprep.subr.bf16.mxu0 %v1485
      %2021 = vmatpush2.bf16.msra.mxu0 %v1484
      %2022 = vmatprep.subr.bf16.mxu0 %v1483
      %2023 = vmatpush2.bf16.msra.mxu0 %v1482
      %2024 = vmatprep.subr.bf16.mxu0 %v1481
      %2025 = vmatpush2.bf16.msra.mxu0 %v1480
      %2026 = vmatprep.mubr.bf16.mxu0 %v562
      %2027 = vmatmul.mubr.bf16.gmra.mxu0 %v548
      %v2028 = vpop.f32.mrf.mxu0
      %v2029 = vadd.f32 %v1988, %v2028
      %v2030 = vpop.f32.mrf.mxu0
      %v2031 = vadd.f32 %v1990, %v2030
      %v2032 = vpop.f32.mrf.mxu0
      %v2033 = vpop.f32.mrf.mxu0
      %2034 = vdwg.mxu0
      %2035 = vmatprep.subr.bf16.mxu0 %v1511
      %2036 = vmatpush1.bf16.msra.mxu0 %v1510
      %2037 = vmatprep.subr.bf16.mxu0 %v1509
      %2038 = vmatpush1.bf16.msra.mxu0 %v1508
      %2039 = vmatprep.subr.bf16.mxu0 %v1507
      %2040 = vmatpush1.bf16.msra.mxu0 %v1506
      %2041 = vmatprep.subr.bf16.mxu0 %v1505
      %2042 = vmatpush1.bf16.msra.mxu0 %v1504
      %2043 = vmatprep.subr.bf16.mxu0 %v1503
      %2044 = vmatpush1.bf16.msra.mxu0 %v1502
      %2045 = vmatprep.subr.bf16.mxu0 %v1501
      %2046 = vmatpush1.bf16.msra.mxu0 %v1500
      %2047 = vmatprep.subr.bf16.mxu0 %v1499
      %2048 = vmatpush1.bf16.msra.mxu0 %v1498
      %2049 = vmatprep.subr.bf16.mxu0 %v1497
      %2050 = vmatpush1.bf16.msra.mxu0 %v1496
      %2051 = vmatprep.subr.bf16.mxu0 %v1527
      %2052 = vmatpush2.bf16.msra.mxu0 %v1526
      %2053 = vmatprep.subr.bf16.mxu0 %v1525
      %2054 = vmatpush2.bf16.msra.mxu0 %v1524
      %2055 = vmatprep.subr.bf16.mxu0 %v1523
      %2056 = vmatpush2.bf16.msra.mxu0 %v1522
      %2057 = vmatprep.subr.bf16.mxu0 %v1521
      %2058 = vmatpush2.bf16.msra.mxu0 %v1520
      %2059 = vmatprep.subr.bf16.mxu0 %v1519
      %2060 = vmatpush2.bf16.msra.mxu0 %v1518
      %2061 = vmatprep.subr.bf16.mxu0 %v1517
      %2062 = vmatpush2.bf16.msra.mxu0 %v1516
      %2063 = vmatprep.subr.bf16.mxu0 %v1515
      %2064 = vmatpush2.bf16.msra.mxu0 %v1514
      %2065 = vmatprep.subr.bf16.mxu0 %v1513
      %2066 = vmatpush2.bf16.msra.mxu0 %v1512
      %2067 = vmatprep.mubr.bf16.mxu0 %v566
      %2068 = vmatmul.mubr.bf16.gmra.mxu0 %v564
      %v2069 = vpop.f32.mrf.mxu0
      %v2070 = vadd.f32 %v2029, %v2069
      %v2071 = vpop.f32.mrf.mxu0
      %v2072 = vadd.f32 %v2031, %v2071
      %v2073 = vpop.f32.mrf.mxu0
      %v2074 = vpop.f32.mrf.mxu0
      %2075 = vdwg.mxu0
      %2076 = vmatprep.subr.bf16.mxu0 %v1543
      %2077 = vmatpush1.bf16.msra.mxu0 %v1542
      %2078 = vmatprep.subr.bf16.mxu0 %v1541
      %2079 = vmatpush1.bf16.msra.mxu0 %v1540
      %2080 = vmatprep.subr.bf16.mxu0 %v1539
      %2081 = vmatpush1.bf16.msra.mxu0 %v1538
      %2082 = vmatprep.subr.bf16.mxu0 %v1537
      %2083 = vmatpush1.bf16.msra.mxu0 %v1536
      %2084 = vmatprep.subr.bf16.mxu0 %v1535
      %2085 = vmatpush1.bf16.msra.mxu0 %v1534
      %2086 = vmatprep.subr.bf16.mxu0 %v1533
      %2087 = vmatpush1.bf16.msra.mxu0 %v1532
      %2088 = vmatprep.subr.bf16.mxu0 %v1531
      %2089 = vmatpush1.bf16.msra.mxu0 %v1530
      %2090 = vmatprep.subr.bf16.mxu0 %v1529
      %2091 = vmatpush1.bf16.msra.mxu0 %v1528
      %2092 = vmatprep.subr.bf16.mxu0 %v1559
      %2093 = vmatpush2.bf16.msra.mxu0 %v1558
      %2094 = vmatprep.subr.bf16.mxu0 %v1557
      %2095 = vmatpush2.bf16.msra.mxu0 %v1556
      %2096 = vmatprep.subr.bf16.mxu0 %v1555
      %2097 = vmatpush2.bf16.msra.mxu0 %v1554
      %2098 = vmatprep.subr.bf16.mxu0 %v1553
      %2099 = vmatpush2.bf16.msra.mxu0 %v1552
      %2100 = vmatprep.subr.bf16.mxu0 %v1551
      %2101 = vmatpush2.bf16.msra.mxu0 %v1550
      %2102 = vmatprep.subr.bf16.mxu0 %v1549
      %2103 = vmatpush2.bf16.msra.mxu0 %v1548
      %2104 = vmatprep.subr.bf16.mxu0 %v1547
      %2105 = vmatpush2.bf16.msra.mxu0 %v1546
      %2106 = vmatprep.subr.bf16.mxu0 %v1545
      %2107 = vmatpush2.bf16.msra.mxu0 %v1544
      %2108 = vmatprep.mubr.bf16.mxu0 %v604
      %2109 = vmatmul.mubr.bf16.gmra.mxu0 %v590
      %v2110 = vpop.f32.mrf.mxu0
      %v2111 = vadd.f32 %v2070, %v2110
      %v2112 = vpop.f32.mrf.mxu0
      %v2113 = vadd.f32 %v2072, %v2112
      %v2114 = vpop.f32.mrf.mxu0
      %v2115 = vpop.f32.mrf.mxu0
      %2116 = vdwg.mxu0
      %2117 = vmatprep.subr.bf16.mxu0 %v1575
      %2118 = vmatpush1.bf16.msra.mxu0 %v1574
      %2119 = vmatprep.subr.bf16.mxu0 %v1573
      %2120 = vmatpush1.bf16.msra.mxu0 %v1572
      %2121 = vmatprep.subr.bf16.mxu0 %v1571
      %2122 = vmatpush1.bf16.msra.mxu0 %v1570
      %2123 = vmatprep.subr.bf16.mxu0 %v1569
      %2124 = vmatpush1.bf16.msra.mxu0 %v1568
      %2125 = vmatprep.subr.bf16.mxu0 %v1567
      %2126 = vmatpush1.bf16.msra.mxu0 %v1566
      %2127 = vmatprep.subr.bf16.mxu0 %v1565
      %2128 = vmatpush1.bf16.msra.mxu0 %v1564
      %2129 = vmatprep.subr.bf16.mxu0 %v1563
      %2130 = vmatpush1.bf16.msra.mxu0 %v1562
      %2131 = vmatprep.subr.bf16.mxu0 %v1561
      %2132 = vmatpush1.bf16.msra.mxu0 %v1560
      %2133 = vmatprep.subr.bf16.mxu0 %v1591
      %2134 = vmatpush2.bf16.msra.mxu0 %v1590
      %2135 = vmatprep.subr.bf16.mxu0 %v1589
      %2136 = vmatpush2.bf16.msra.mxu0 %v1588
      %2137 = vmatprep.subr.bf16.mxu0 %v1587
      %2138 = vmatpush2.bf16.msra.mxu0 %v1586
      %2139 = vmatprep.subr.bf16.mxu0 %v1585
      %2140 = vmatpush2.bf16.msra.mxu0 %v1584
      %2141 = vmatprep.subr.bf16.mxu0 %v1583
      %2142 = vmatpush2.bf16.msra.mxu0 %v1582
      %2143 = vmatprep.subr.bf16.mxu0 %v1581
      %2144 = vmatpush2.bf16.msra.mxu0 %v1580
      %2145 = vmatprep.subr.bf16.mxu0 %v1579
      %2146 = vmatpush2.bf16.msra.mxu0 %v1578
      %2147 = vmatprep.subr.bf16.mxu0 %v1577
      %2148 = vmatpush2.bf16.msra.mxu0 %v1576
      %2149 = vmatprep.mubr.bf16.mxu0 %v614
      %2150 = vmatmul.mubr.bf16.gmra.mxu0 %v612
      %v2151 = vpop.f32.mrf.mxu0
      %v2152 = vadd.f32 %v2111, %v2151
      %v2153 = vpop.f32.mrf.mxu0
      %v2154 = vadd.f32 %v2113, %v2153
      %v2155 = vpop.f32.mrf.mxu0
      %v2156 = vpop.f32.mrf.mxu0
      %2157 = vdwg.mxu0
      %2158 = vmatprep.subr.bf16.mxu0 %v1607
      %2159 = vmatpush1.bf16.msra.mxu0 %v1606
      %2160 = vmatprep.subr.bf16.mxu0 %v1605
      %2161 = vmatpush1.bf16.msra.mxu0 %v1604
      %2162 = vmatprep.subr.bf16.mxu0 %v1603
      %2163 = vmatpush1.bf16.msra.mxu0 %v1602
      %2164 = vmatprep.subr.bf16.mxu0 %v1601
      %2165 = vmatpush1.bf16.msra.mxu0 %v1600
      %2166 = vmatprep.subr.bf16.mxu0 %v1599
      %2167 = vmatpush1.bf16.msra.mxu0 %v1598
      %2168 = vmatprep.subr.bf16.mxu0 %v1597
      %2169 = vmatpush1.bf16.msra.mxu0 %v1596
      %2170 = vmatprep.subr.bf16.mxu0 %v1595
      %2171 = vmatpush1.bf16.msra.mxu0 %v1594
      %2172 = vmatprep.subr.bf16.mxu0 %v1593
      %2173 = vmatpush1.bf16.msra.mxu0 %v1592
      %2174 = vmatprep.subr.bf16.mxu0 %v1623
      %2175 = vmatpush2.bf16.msra.mxu0 %v1622
      %2176 = vmatprep.subr.bf16.mxu0 %v1621
      %2177 = vmatpush2.bf16.msra.mxu0 %v1620
      %2178 = vmatprep.subr.bf16.mxu0 %v1619
      %2179 = vmatpush2.bf16.msra.mxu0 %v1618
      %2180 = vmatprep.subr.bf16.mxu0 %v1617
      %2181 = vmatpush2.bf16.msra.mxu0 %v1616
      %2182 = vmatprep.subr.bf16.mxu0 %v1615
      %2183 = vmatpush2.bf16.msra.mxu0 %v1614
      %2184 = vmatprep.subr.bf16.mxu0 %v1613
      %2185 = vmatpush2.bf16.msra.mxu0 %v1612
      %2186 = vmatprep.subr.bf16.mxu0 %v1611
      %2187 = vmatpush2.bf16.msra.mxu0 %v1610
      %2188 = vmatprep.subr.bf16.mxu0 %v1609
      %2189 = vmatpush2.bf16.msra.mxu0 %v1608
      %2190 = vmatprep.mubr.bf16.mxu0 %v611
      %2191 = vmatmul.mubr.bf16.gmra.mxu0 %v597
      %v2192 = vpop.f32.mrf.mxu0
      %v2193 = vadd.f32 %v2152, %v2192
      %v2194 = vpop.f32.mrf.mxu0
      %v2195 = vadd.f32 %v2154, %v2194
      %v2196 = vpop.f32.mrf.mxu0
      %v2197 = vpop.f32.mrf.mxu0
      %2198 = vdwg.mxu0
      %2199 = vmatprep.subr.bf16.mxu0 %v1639
      %2200 = vmatpush1.bf16.msra.mxu0 %v1638
      %2201 = vmatprep.subr.bf16.mxu0 %v1637
      %2202 = vmatpush1.bf16.msra.mxu0 %v1636
      %2203 = vmatprep.subr.bf16.mxu0 %v1635
      %2204 = vmatpush1.bf16.msra.mxu0 %v1634
      %2205 = vmatprep.subr.bf16.mxu0 %v1633
      %2206 = vmatpush1.bf16.msra.mxu0 %v1632
      %2207 = vmatprep.subr.bf16.mxu0 %v1631
      %2208 = vmatpush1.bf16.msra.mxu0 %v1630
      %2209 = vmatprep.subr.bf16.mxu0 %v1629
      %2210 = vmatpush1.bf16.msra.mxu0 %v1628
      %2211 = vmatprep.subr.bf16.mxu0 %v1627
      %2212 = vmatpush1.bf16.msra.mxu0 %v1626
      %2213 = vmatprep.subr.bf16.mxu0 %v1625
      %2214 = vmatpush1.bf16.msra.mxu0 %v1624
      %2215 = vmatprep.subr.bf16.mxu0 %v1655
      %2216 = vmatpush2.bf16.msra.mxu0 %v1654
      %2217 = vmatprep.subr.bf16.mxu0 %v1653
      %2218 = vmatpush2.bf16.msra.mxu0 %v1652
      %2219 = vmatprep.subr.bf16.mxu0 %v1651
      %2220 = vmatpush2.bf16.msra.mxu0 %v1650
      %2221 = vmatprep.subr.bf16.mxu0 %v1649
      %2222 = vmatpush2.bf16.msra.mxu0 %v1648
      %2223 = vmatprep.subr.bf16.mxu0 %v1647
      %2224 = vmatpush2.bf16.msra.mxu0 %v1646
      %2225 = vmatprep.subr.bf16.mxu0 %v1645
      %2226 = vmatpush2.bf16.msra.mxu0 %v1644
      %2227 = vmatprep.subr.bf16.mxu0 %v1643
      %2228 = vmatpush2.bf16.msra.mxu0 %v1642
      %2229 = vmatprep.subr.bf16.mxu0 %v1641
      %2230 = vmatpush2.bf16.msra.mxu0 %v1640
      %2231 = vmatprep.mubr.bf16.mxu0 %v615
      %2232 = vmatmul.mubr.bf16.gmra.mxu0 %v613
      %v2233 = vpop.f32.mrf.mxu0
      %v2234 = vadd.f32 %v2193, %v2233
      %v2235 = vpop.f32.mrf.mxu0
      %v2236 = vadd.f32 %v2195, %v2235
      %v2237 = vpop.f32.mrf.mxu0
      %v2238 = vpop.f32.mrf.mxu0
      %2239 = vdwg.mxu0
      %v2242 = vcombine.low %v2234, %v2236
      %v2244 = vunpack.c.l.s4 1983009808
      %v2245 = vunpack.c.0.s8 %v2244
      %v2246 = vlaneseq
      %v2247 = vshrl.u32 %v2246, 7
      %v2248 = vsub.s32 %v2245, %v2247
      %v2249 = vrot.slane %v2242, %v2248
      %v2251 = vadd.f32 %v257, %v2249
      %2252 = vst [vmem:[#allocation2] sm:$0xf] %v2251
      %p2253 = scmp.eq.s32.totalorder %s19, 1
      // Predicated region
      $region37: #{mutual_info_reg_forward.6} parent=31 // pred_check
        %p2254 = pneg %p2253
      $region38: #{mutual_info_reg_forward.6} parent=31 // pred_check_branch
        %2256 = sbr.rel (%p2254) target = $region40
      $region39: #{mutual_info_reg_forward.6} parent=31 // pred_region
        %v2257 = vld [vmem:[#allocation2] sm:$0xf]
        %v2258 = vld [vmem:[%s246] sm:$0x3]
        %v2260 = vlaneseq
        %v2261 = vshrl.u32 %v2260, 7
        %v2262 = vsub.s32 0, %v2261
        %v2263 = vrot.slane %v2258, %v2262
        %v2264 = vlaneseq
        %v2265 = vshrl.u32 %v2264, 7
        %v2266 = vsub.s32 1, %v2265
        %v2267 = vrot.slane %v2258, %v2266
        %v2268 = vcombine.low %v2263, %v2267
        %v2270 = vunpack.c.l.s4 1983009808
        %v2271 = vunpack.c.0.s8 %v2270
        %v2272 = vlaneseq
        %v2273 = vshrl.u32 %v2272, 7
        %v2274 = vsub.s32 %v2271, %v2273
        %v2275 = vrot.slane %v2268, %v2274
        %v2277 = vadd.f32 %v2257, %v2275
        %2278 = vst [vmem:[%s251] sm:$0xf] %v2277
      $region40: #{mutual_info_reg_forward.6} parent=31 // pred_fallthru
        _
      %p2279 = scmp.lt.s32.totalorder %s18, 1
      %s2280 = scalar_select %p2279, %s18, 1
      %s2281 = smul.addr %s2280, 2
      %s2282 = smul.addr %s2281, 2
      %s2283 = scalar_lea.vmem %s3, %s2282
      // Predicated region
      $region41: #{mutual_info_reg_forward.6} parent=31 // pred_check
        %p2284 = pneg %p126
      $region42: #{mutual_info_reg_forward.6} parent=31 // pred_check_branch
        %2286 = sbr.rel (%p2284) target = $region44
      $region43: #{mutual_info_reg_forward.6} parent=31 // pred_region
        _
      $region44: #{mutual_info_reg_forward.6} parent=31 // pred_fallthru
        _
    $region32: #{mutual_info_reg_forward.6} parent=5 // pred_fallthru
      _
    %p2287 = scmp.le.s32.totalorder 2, %s9
    // Predicated region
    $region45: #{mutual_info_reg_forward.6} parent=5 // pred_check
      %p2288 = pneg %p2287
    $region46: #{mutual_info_reg_forward.6} parent=5 // pred_check_branch
      %2290 = sbr.rel (%p2288) target = $region48
    $region47: #{mutual_info_reg_forward.6} parent=5 // pred_region
      %s2291 = ssub.s32 %s9, 2
      // Predicated region
      $region49: #{mutual_info_reg_forward.6} parent=47 // pred_check
        %p2292 = pneg %p132
      $region50: #{mutual_info_reg_forward.6} parent=47 // pred_check_branch
        %2294 = sbr.rel (%p2292) target = $region52
      $region51: #{mutual_info_reg_forward.6} parent=47 // pred_region
        %p2295 = scmp.lt.s32.totalorder %s20, 1
        %s2296 = scalar_select %p2295, %s20, 1
        %s2297 = smul.addr %s2296, 2
        %s2298 = smul.addr %s2297, 2
        %s2299 = scalar_lea.vmem %s3, %s2298
      $region52: #{mutual_info_reg_forward.6} parent=47 // pred_fallthru
        _
    $region48: #{mutual_info_reg_forward.6} parent=5 // pred_fallthru
      _
  $region6: #{mutual_info_reg_forward.6} parent=0 // loop_footer
    %s13 = sadd.s32 1, %s9
  $region7: #{mutual_info_reg_forward.6} parent=0 // loop_footer_branch
    %8 = sbr.rel target = $region3
  $region8: #{mutual_info_reg_forward.6} parent=0 // loop_exit
    _

// kernel: mutual_info_reg_forward.7
$region0: #{mutual_info_reg_forward.7}
  #allocation0 [shape = 'u32[]', space=smem, size = 0x4, offset = 0x4, fixed_abs, tag = 'smem constant byte address 0x4 - core index']
  #allocation1 [shape = 'u32[144,128]{1,0:T(1,128)}', space=vmem, size = 0x12000, scoped, tag = 'internal scratch']
  %s0 = inlined_call_operand.vmem [shape: f32[2,2,256], index: 0, kind: input, shape index: {}]
  %s1 = inlined_call_operand.vmem [shape: f32[2,2,128], index: 1, kind: input, shape index: {}]
  %s2 = inlined_call_operand.hbm [shape: f32[1,1], index: 2, kind: output, shape index: {}]
  %s3 = sld [smem:[#allocation0]]
  $region18: #{mutual_info_reg_forward.7} parent=0
    _
  %s5 = ssub.s32 1, %s3
  %s6 = scalar_select 0, %s5, %s3
  $region1: #{mutual_info_reg_forward.7} parent=0
    #allocation2 [shape = 'u8[512]{0}', space=smem, size = 0x200, scoped, tag = 'output window, operand 0, single buffered']
    #allocation3 [shape = 's32[1]{0}', space=sflag, size = 0x4, scoped, tag = 'scoped memory for mutual_info_reg_forward.7']
    %7 = vsyncpa [#allocation3], 0
    // Predicated region
    $region2: #{mutual_info_reg_forward.7} parent=1 // pred_check
      _
    $region3: #{mutual_info_reg_forward.7} parent=1 // pred_check_branch
      %9 = sbr.rel (0) target = $region5
    $region4: #{mutual_info_reg_forward.7} parent=1 // pred_region
      _
    $region5: #{mutual_info_reg_forward.7} parent=1 // pred_fallthru
      _
    // Predicated region
    $region6: #{mutual_info_reg_forward.7} parent=1 // pred_check
      _
    $region7: #{mutual_info_reg_forward.7} parent=1 // pred_check_branch
      %11 = sbr.rel (0) target = $region9
    $region8: #{mutual_info_reg_forward.7} parent=1 // pred_region
      _
    $region9: #{mutual_info_reg_forward.7} parent=1 // pred_fallthru
      _
    %v12 = vld [vmem:[%s0] sm:$0xf]
    %s13 = scalar_lea.vmem %s0, 4
    %v14 = vld [vmem:[%s13] sm:$0xf]
    %v15 = vtanh.pop %v12
    %v17 = vrot.slane %v12, 2
    %v19 = vtanh.pop %v17
    %v20 = vtanh.pop %v14
    %v22 = vrot.slane %v14, 2
    %v24 = vtanh.pop %v22
    %v25 = vld [vmem:[%s1] sm:$0x3]
    %v26 = vmul.f32 %v19, 0.5
    %v27 = vmul.f32 %v26, 1.442695
    %v28 = vpow.pop %v27
    %v29 = vmul.f32 %v25, %v28
    %v30 = vadd.f32 %v29, %v15
    %s31 = scalar_lea.vmem %s1, 2
    %v32 = vld [vmem:[%s31] sm:$0x3]
    %v33 = vmul.f32 %v24, 0.5
    %v34 = vmul.f32 %v33, 1.442695
    %v35 = vpow.pop %v34
    %v36 = vmul.f32 %v32, %v35
    %v37 = vadd.f32 %v36, %v20
    %v38 = vsub.f32 %v24, %v19
    %v39 = vmul.f32 %v19, 2.0
    %v40 = vmul.f32 %v39, 1.442695
    %v41 = vpow.pop %v40
    %v42 = vsub.f32 %v15, %v20
    %v43 = vmul.f32 %v42, %v42
    %v44 = vadd.f32 %v41, %v43
    %v45 = vmul.f32 %v24, -2.0
    %v46 = vmul.f32 %v45, 1.442695
    %v47 = vpow.pop %v46
    %v48 = vmul.f32 %v47, 0.5
    %v49 = vmul.f32 %v44, %v48
    %v50 = vadd.f32 %v38, %v49
    %v51 = vsub.f32 %v50, 0.5
    %vm52 = vcmask 1041408
    %v53 = vsel %vm52, %v51, 0.0
    %54 = vadd.xlane.f32.xlu0 %v53
    %v55 = vpop.xlane.xlu0 %54
    %v56 = vrot.slane %v55, 4
    %v57 = vadd.f32 %v55, %v56
    %v58 = vrot.slane %v57, 2
    %v59 = vadd.f32 %v57, %v58
    %v60 = vrot.slane %v59, 1
    %v61 = vadd.f32 %v59, %v60
    %s62 = vtos %v61
    %v63 = vsub.f32 %v19, %v24
    %v64 = vmul.f32 %v24, 2.0
    %v65 = vmul.f32 %v64, 1.442695
    %v66 = vpow.pop %v65
    %v67 = vsub.f32 %v20, %v15
    %v68 = vmul.f32 %v67, %v67
    %v69 = vadd.f32 %v66, %v68
    %v70 = vmul.f32 %v19, -2.0
    %v71 = vmul.f32 %v70, 1.442695
    %v72 = vpow.pop %v71
    %v73 = vmul.f32 %v72, 0.5
    %v74 = vmul.f32 %v69, %v73
    %v75 = vadd.f32 %v63, %v74
    %v76 = vsub.f32 %v75, 0.5
    %v77 = vsel %vm52, %v76, 0.0
    %78 = vadd.xlane.f32.xlu0 %v77
    %v79 = vpop.xlane.xlu0 %78
    %v80 = vrot.slane %v79, 4
    %v81 = vadd.f32 %v79, %v80
    %v82 = vrot.slane %v81, 2
    %v83 = vadd.f32 %v81, %v82
    %v84 = vrot.slane %v83, 1
    %v85 = vadd.f32 %v83, %v84
    %s86 = vtos %v85
    %s87 = sadd.f32 %s62, %s86
    %v88 = vrcp.pop 2.0
    %s89 = vtos %v88
    %s90 = smul.f32 %s87, %s89
    %v91 = vlaneseq
    %v92 = vand.u32 %v91, 127
    %vm93 = vcmp.lt.s32.totalorder %v92, 4
    %v94 = vsel %vm93, 1, 0
    %v95 = vcvt.s32.f32 %v94
    %v96 = vxor.u32 %v30, 2147483648
    %v97 = vmul.f32 %v96, 1.442695
    %v98 = vpow.pop %v97
    %v99 = vadd.f32 %v98, 1.0
    %v100 = vrcp.pop %v99
    %v101 = vmul.f32 1.0, %v100
    %v102 = vxor.u32 %v37, 2147483648
    %v103 = vmul.f32 %v102, 1.442695
    %v104 = vpow.pop %v103
    %v105 = vadd.f32 %v104, 1.0
    %v106 = vrcp.pop %v105
    %v107 = vmul.f32 1.0, %v106
    %v108 = vlog2.pop %v101
    %v109 = vmul.f32 %v108, 0.6931472
    %v110 = vmax.f32 %v109, -100.0
    %v111 = vsub.f32 0.0, %v101
    %v112 = vadd.f32 %v111, 1.0
    %v113 = vlog2.pop %v112
    %v114 = vmul.f32 %v113, 0.6931472
    %v115 = vmul.f32 -0.5, %v111
    %v116 = vadd.f32 %v115, 1.0
    %v117 = vmul.f32 %v116, %v111
    %v118 = vand.u32 2147483647, %v111
    %vm119 = vcmp.lt.f32.partialorder %v118, 0.0004427343
    %v120 = vsel %vm119, %v117, %v114
    %v121 = vmax.f32 %v120, -100.0
    %v122 = vmul.f32 %v107, %v110
    %v123 = vsub.f32 1.0, %v107
    %v124 = vmul.f32 %v123, %v121
    %v125 = vadd.f32 %v122, %v124
    %v126 = vmul.f32 %v95, %v125
    %v127 = vsel %vm52, %v126, 0.0
    %128 = vadd.xlane.f32.xlu0 %v127
    %v129 = vpop.xlane.xlu0 %128
    %v130 = vrot.slane %v129, 4
    %v131 = vadd.f32 %v129, %v130
    %v132 = vrot.slane %v131, 2
    %v133 = vadd.f32 %v131, %v132
    %v134 = vrot.slane %v133, 1
    %v135 = vadd.f32 %v133, %v134
    %s136 = vtos %v135
    %s137 = ssub.f32 0.0, %s136
    %v138 = vlog2.pop %v107
    %v139 = vmul.f32 %v138, 0.6931472
    %v140 = vmax.f32 %v139, -100.0
    %v141 = vsub.f32 0.0, %v107
    %v142 = vadd.f32 %v141, 1.0
    %v143 = vlog2.pop %v142
    %v144 = vmul.f32 %v143, 0.6931472
    %v145 = vmul.f32 -0.5, %v141
    %v146 = vadd.f32 %v145, 1.0
    %v147 = vmul.f32 %v146, %v141
    %v148 = vand.u32 2147483647, %v141
    %vm149 = vcmp.lt.f32.partialorder %v148, 0.0004427343
    %v150 = vsel %vm149, %v147, %v144
    %v151 = vmax.f32 %v150, -100.0
    %v152 = vmul.f32 %v101, %v140
    %v153 = vsub.f32 1.0, %v101
    %v154 = vmul.f32 %v153, %v151
    %v155 = vadd.f32 %v152, %v154
    %v156 = vmul.f32 %v95, %v155
    %v157 = vsel %vm52, %v156, 0.0
    %158 = vadd.xlane.f32.xlu0 %v157
    %v159 = vpop.xlane.xlu0 %158
    %v160 = vrot.slane %v159, 4
    %v161 = vadd.f32 %v159, %v160
    %v162 = vrot.slane %v161, 2
    %v163 = vadd.f32 %v161, %v162
    %v164 = vrot.slane %v163, 1
    %v165 = vadd.f32 %v163, %v164
    %s166 = vtos %v165
    %s167 = ssub.f32 0.0, %s166
    %s168 = sadd.f32 %s137, %s167
    %s169 = ssub.f32 %s168, %s90
    %s170 = scalar_lea.smem [#allocation2], 0
    %171 = sst [smem:[%s170]] %s169
    // Predicated region
    $region10: #{mutual_info_reg_forward.7} parent=1 // pred_check
      _
    $region11: #{mutual_info_reg_forward.7} parent=1 // pred_check_branch
      %173 = sbr.rel (0) target = $region13
    $region12: #{mutual_info_reg_forward.7} parent=1 // pred_region
      %s175 = ssub.s32 16, 16
      %176 = vsyncadd [#allocation3], %s175
      %179 = dma.smem_to_hbm [#allocation2], 16, %s2, [#allocation3]
    $region13: #{mutual_info_reg_forward.7} parent=1 // pred_fallthru
      _
    // Predicated region
    $region14: #{mutual_info_reg_forward.7} parent=1 // pred_check
      _
    $region15: #{mutual_info_reg_forward.7} parent=1 // pred_check_branch
      %181 = sbr.rel (0) target = $region17
    $region16: #{mutual_info_reg_forward.7} parent=1 // pred_region
      %182 = dma.done [#allocation3], 16
    $region17: #{mutual_info_reg_forward.7} parent=1 // pred_fallthru
      _
    %183 = sfence
    %184 = vsyncpa [#allocation3], 1

</llo_original>
